<compile_context>
chip_gen: v6e
topology: v6e:2x2x1
jax: 0.10.0
libtpu: 0.0.40
codegen_flags: <defaults>
</compile_context>

<pallas_src>
import jax
import jax.numpy as jnp
from jax import lax
from jax.experimental import pallas as pl
from jax.experimental.pallas import tpu as pltpu
import numpy as np

# ----------------------------- model dims (small) -----------------------------
SRC_LEN = 8
TRG_LEN = 8
BATCH = 2
IN_VOCAB = 16
OUT_VOCAB = 16
EMB = 32
HID = 32
# NOTE: the (2,128) output-accumulator trick requires TRG_LEN*OUT_VOCAB to stay
# a small multiple of 128 (here exactly 128).
# TODO(synk): encoder/decoder classes are not shown in the source file; this
# uses the canonical single-layer LSTM seq2seq (dropout omitted).

# Weight-slab row layout (columns are always 4*HID = 128).
R_ENC_WH = 0                       # encoder W_hh            (HID, 128)
R_DEC_WH = R_ENC_WH + HID          # decoder W_hh            (HID, 128)
R_DEC_WXB = R_DEC_WH + HID         # decoder emb@W_ih + b    (OUT_VOCAB, 128)
R_WOUT = R_DEC_WXB + OUT_VOCAB     # W_out tiled 8x          (HID, 128)
R_BOUT = R_WOUT + HID              # b_out tiled 8x          (1, 128)
SLAB_ROWS = ((R_BOUT + 1 + 7) // 8) * 8     # pad to sublane multiple -> 120


# ------------------------------- fused kernel ---------------------------------
def seq2seq_kernel(tf_ref, xp_ref, slab_ref, out_ref):
    # Hoisted weight views (static, tile-aligned slices of the single slab).
    enc_wh = slab_ref[R_ENC_WH:R_ENC_WH + HID, :]              # (32, 128)
    dec_wh = slab_ref[R_DEC_WH:R_DEC_WH + HID, :]              # (32, 128)
    dec_wxb = slab_ref[R_DEC_WXB:R_DEC_WXB + OUT_VOCAB, :]     # (16, 128)
    wout_t = slab_ref[R_WOUT:R_WOUT + HID, :]                  # (32, 128)
    bout_t = slab_ref[R_BOUT:R_BOUT + 1, :]                    # (1, 128)

    # Hoisted iotas (built once; reused by every unrolled step).
    col_o = lax.broadcasted_iota(jnp.int32, (BATCH, OUT_VOCAB), 1)
    col_all = lax.broadcasted_iota(jnp.int32, (BATCH, TRG_LEN * OUT_VOCAB), 1)

    def lstm_step(xp, h, c, wh):
        # xp already holds embedding@W_ih + (b_ih + b_hh)  -> one MXU push/step
        gates = xp + jnp.dot(h, wh, preferred_element_type=jnp.float32)
        sg = jax.nn.sigmoid(gates)                 # whole-(2,128) EUP pass
        tg = jnp.tanh(gates)                       # whole-(2,128) EUP pass
        i_g = sg[:, 0 * HID:1 * HID]
        f_g = sg[:, 1 * HID:2 * HID]
        g_g = tg[:, 2 * HID:3 * HID]
        o_g = sg[:, 3 * HID:4 * HID]
        c_new = f_g * c + i_g * g_g
        h_new = o_g * jnp.tanh(c_new)
        return h_new, c_new

    # --------------------------------- encoder --------------------------------
    def enc_body(s, carry):
        h, c = carry
        return lstm_step(xp_ref[s], h, c, enc_wh)

    h0 = jnp.zeros((BATCH, HID), jnp.float32)
    c0 = jnp.zeros((BATCH, HID), jnp.float32)
    h, c = lax.fori_loop(0, SRC_LEN, enc_body, (h0, c0), unroll=True)

    # --------------------------------- decoder --------------------------------
    def dec_body(t, carry):
        h, c, xp, acc = carry
        h, c = lstm_step(xp, h, c, dec_wh)

        # One full-width push: logits (+bias) replicated in every 16-lane window.
        logits_t = (jnp.dot(h, wout_t, preferred_element_type=jnp.float32)
                    + bout_t)                                  # (2, 128)

        # Merge this step's window [16t, 16t+16) into the lane-dense accumulator.
        win = (col_all >= t * OUT_VOCAB) & (col_all < (t + 1) * OUT_VOCAB)
        acc = jnp.where(win, logits_t, acc)

        # first-max-wins argmax as a one-hot (matches torch.argmax semantics)
        logits = logits_t[:, 0:OUT_VOCAB]                      # (2, 16)
        m = jnp.max(logits, axis=1, keepdims=True)
        idx = jnp.min(jnp.where(logits == m, col_o, OUT_VOCAB),
                      axis=1, keepdims=True)
        top1_oh = (col_o == idx).astype(jnp.float32)
        xp_top1 = jnp.dot(top1_oh, dec_wxb,
                          preferred_element_type=jnp.float32)  # (2, 128)

        # teacher forcing: next x-projection = precomputed dec_wxb[trg[t]] or top1's row
        xp_next = jnp.where(tf_ref[t] > 0, xp_ref[SRC_LEN + t], xp_top1)
        return h, c, xp_next, acc

    acc0 = jnp.zeros((BATCH, TRG_LEN * OUT_VOCAB), jnp.float32)  # outputs[0] = 0
    _, _, _, acc = lax.fori_loop(1, TRG_LEN, dec_body,
                                 (h, c, xp_ref[SRC_LEN + 0], acc0), unroll=True)

    out_ref[...] = acc                                           # single lane-dense store


# ------------------------------ host-side wrapper ------------------------------
def seq2seq_forward(src, trg, tf_flags, fused):
    # Per-call gather of input-gate projections (embedding + W_ih + bias folded);
    # (SRC_LEN + TRG_LEN, BATCH, 4*HID) = (16, 2, 128) ~ 16 KiB VMEM input.
    xp = jnp.concatenate([fused["enc_wxb"][src], fused["dec_wxb"][trg]], axis=0)

    smem = pl.BlockSpec(memory_space=pltpu.MemorySpace.SMEM)
    vmem = pl.BlockSpec(memory_space=pltpu.MemorySpace.VMEM)
    flat = pl.pallas_call(
        seq2seq_kernel,
        out_shape=jax.ShapeDtypeStruct((BATCH, TRG_LEN * OUT_VOCAB), jnp.float32),
        in_specs=[smem, vmem, vmem],
        out_specs=vmem,
    )(tf_flags, xp, fused["slab"])

    # layout plumbing only: (2, 128) -> (TRG_LEN, BATCH, OUT_VOCAB)
    return jnp.transpose(flat.reshape(BATCH, TRG_LEN, OUT_VOCAB), (1, 0, 2))


def prepare_params(params):
    """One-time prep: fold embeddings into W_ih, pre-sum biases, pack slab."""
    b_enc = params["enc_bih"] + params["enc_bhh"]                       # (1, 128)
    b_dec = params["dec_bih"] + params["dec_bhh"]                       # (1, 128)
    enc_wxb = (params["enc_emb"] @ params["enc_wih"] + b_enc).astype(jnp.float32)
    dec_wxb = (params["dec_emb"] @ params["dec_wih"] + b_dec).astype(jnp.float32)
    wout_t = jnp.tile(params["dec_wout"], (1, TRG_LEN)).astype(jnp.float32)   # (32,128)
    bout_t = jnp.tile(params["dec_bout"], (1, TRG_LEN)).astype(jnp.float32)   # (1,128)
    pad = SLAB_ROWS - (R_BOUT + 1)
    slab = jnp.concatenate([
        params["enc_whh"].astype(jnp.float32),
        params["dec_whh"].astype(jnp.float32),
        dec_wxb,
        wout_t,
        bout_t,
        jnp.zeros((pad, 4 * HID), jnp.float32),
    ], axis=0)                                                          # (120, 128)
    return {"enc_wxb": enc_wxb, "dec_wxb": dec_wxb, "slab": slab}


# ------------------------------ pure-JAX reference -----------------------------
def _lstm_step(x, h, c, wih, whh, bih, bhh):
    g = x @ wih + h @ whh + bih + bhh
    i = jax.nn.sigmoid(g[:, 0 * HID:1 * HID])
    f = jax.nn.sigmoid(g[:, 1 * HID:2 * HID])
    gg = jnp.tanh(g[:, 2 * HID:3 * HID])
    o = jax.nn.sigmoid(g[:, 3 * HID:4 * HID])
    c = f * c + i * gg
    h = o * jnp.tanh(c)
    return h, c


def seq2seq_reference(src, trg, params, tf_flags):
    src_emb = params["enc_emb"][src]
    h = jnp.zeros((BATCH, HID), jnp.float32)
    c = jnp.zeros((BATCH, HID), jnp.float32)
    for s in range(SRC_LEN):
        h, c = _lstm_step(src_emb[s], h, c, params["enc_wih"], params["enc_whh"],
                          params["enc_bih"], params["enc_bhh"])
    outputs = jnp.zeros((TRG_LEN, BATCH, OUT_VOCAB), jnp.float32)
    inp = trg[0]
    for t in range(1, TRG_LEN):
        x = params["dec_emb"][inp]
        h, c = _lstm_step(x, h, c, params["dec_wih"], params["dec_whh"],
                          params["dec_bih"], params["dec_bhh"])
        logits = h @ params["dec_wout"] + params["dec_bout"]
        outputs = outputs.at[t].set(logits)
        top1 = jnp.argmax(logits, axis=1)
        inp = jnp.where(tf_flags[t] > 0, trg[t], top1)
    return outputs


# ----------------------------------- main --------------------------------------
if __name__ == "__main__":
    key = jax.random.PRNGKey(0)
    ks = jax.random.split(key, 16)

    def nrm(k, shape, scale=0.1):
        return (scale * jax.random.normal(k, shape)).astype(jnp.float32)

    params = {
        "enc_emb": nrm(ks[0], (IN_VOCAB, EMB)),
        "enc_wih": nrm(ks[1], (EMB, 4 * HID)),
        "enc_whh": nrm(ks[2], (HID, 4 * HID)),
        "enc_bih": nrm(ks[3], (1, 4 * HID)),
        "enc_bhh": nrm(ks[4], (1, 4 * HID)),
        "dec_emb": nrm(ks[5], (OUT_VOCAB, EMB)),
        "dec_wih": nrm(ks[6], (EMB, 4 * HID)),
        "dec_whh": nrm(ks[7], (HID, 4 * HID)),
        "dec_bih": nrm(ks[8], (1, 4 * HID)),
        "dec_bhh": nrm(ks[9], (1, 4 * HID)),
        "dec_wout": nrm(ks[10], (HID, OUT_VOCAB)),
        "dec_bout": nrm(ks[11], (1, OUT_VOCAB)),
    }

    src = jax.random.randint(ks[12], (SRC_LEN, BATCH), 0, IN_VOCAB, dtype=jnp.int32)
    trg = jax.random.randint(ks[13], (TRG_LEN, BATCH), 0, OUT_VOCAB, dtype=jnp.int32)
    # teacher forcing coin flips (torch.rand(1) < 0.5 per step), drawn once, deterministic
    tf_flags = (jax.random.uniform(ks[14], (TRG_LEN,)) < 0.5).astype(jnp.int32)

    fused = prepare_params(params)                       # one-time weight prep
    fwd = jax.jit(seq2seq_forward)

    out = fwd(src, trg, tf_flags, fused)
    out = jax.block_until_ready(out)

    ref = seq2seq_reference(src, trg, params, tf_flags)
    np.testing.assert_allclose(np.asarray(out), np.asarray(ref), rtol=1e-2, atol=1e-2)

    print("KERNEL_OK")
</pallas_src>

<mosaic_0001>
module attributes {stable_mosaic.version = 11 : i64} {
  func.func @seq2seq_kernel(%arg0: memref<8xi32, #tpu.memory_space<smem>>, %arg1: memref<16x2x128xf32, #tpu.memory_space<vmem>>, %arg2: memref<120x128xf32, #tpu.memory_space<vmem>>, %arg3: memref<2x128xf32, #tpu.memory_space<vmem>>) attributes {dimension_semantics = [], scalar_prefetch = 0 : i64, scratch_operands = 0 : i64, tpu.core_type = #tpu.core_type<tc>} {
    %c0 = arith.constant 0 : index
    %c0_0 = arith.constant 0 : index
    %0 = vector.load %arg2[%c0, %c0_0] : memref<120x128xf32, #tpu.memory_space<vmem>>, vector<32x128xf32>
    %c32 = arith.constant 32 : index
    %c0_1 = arith.constant 0 : index
    %1 = vector.load %arg2[%c32, %c0_1] : memref<120x128xf32, #tpu.memory_space<vmem>>, vector<32x128xf32>
    %c64 = arith.constant 64 : index
    %c0_2 = arith.constant 0 : index
    %2 = vector.load %arg2[%c64, %c0_2] : memref<120x128xf32, #tpu.memory_space<vmem>>, vector<16x128xf32>
    %c80 = arith.constant 80 : index
    %c0_3 = arith.constant 0 : index
    %3 = vector.load %arg2[%c80, %c0_3] : memref<120x128xf32, #tpu.memory_space<vmem>>, vector<32x128xf32>
    %c112 = arith.constant 112 : index
    %c0_4 = arith.constant 0 : index
    %4 = vector.load %arg2[%c112, %c0_4] : memref<120x128xf32, #tpu.memory_space<vmem>>, vector<1x128xf32>
    %5 = tpu.iota {dimensions = array<i32: 1>} : vector<2x16xi32>
    %6 = tpu.iota {dimensions = array<i32: 1>} : vector<2x128xi32>
    %cst = arith.constant 0.000000e+00 : f32
    %7 = vector.broadcast %cst : f32 to vector<2x32xf32>
    %cst_5 = arith.constant 0.000000e+00 : f32
    %8 = vector.broadcast %cst_5 : f32 to vector<2x32xf32>
    %c0_i32 = arith.constant 0 : i32
    %9 = arith.index_cast %c0_i32 : i32 to index
    %c0_6 = arith.constant 0 : index
    %c0_7 = arith.constant 0 : index
    %10 = vector.load %arg1[%9, %c0_6, %c0_7] : memref<16x2x128xf32, #tpu.memory_space<vmem>>, vector<1x2x128xf32>
    %11 = vector.shape_cast %10 : vector<1x2x128xf32> to vector<2x128xf32>
    %cst_8 = arith.constant dense<0.000000e+00> : vector<2x128xf32>
    %12 = tpu.matmul %7, %0, %cst_8 {dimension_numbers = #tpu.dot_dimension_numbers<[1], [0], [0], [1], [0, 0, 1, 1], [], []>} : vector<2x32xf32>, vector<32x128xf32>, vector<2x128xf32> -> vector<2x128xf32>
    %13 = arith.addf %11, %12 : vector<2x128xf32>
    %14 = arith.negf %13 : vector<2x128xf32>
    %15 = math.exp %14 : vector<2x128xf32>
    %cst_9 = arith.constant 1.000000e+00 : f32
    %16 = vector.broadcast %cst_9 : f32 to vector<2x128xf32>
    %17 = arith.addf %16, %15 : vector<2x128xf32>
    %18 = arith.divf %16, %17 : vector<2x128xf32>
    %19 = math.tanh %13 : vector<2x128xf32>
    %20 = vector.extract_strided_slice %18 {offsets = [0, 0], sizes = [2, 32], strides = [1, 1]} : vector<2x128xf32> to vector<2x32xf32>
    %21 = vector.extract_strided_slice %18 {offsets = [0, 32], sizes = [2, 32], strides = [1, 1]} : vector<2x128xf32> to vector<2x32xf32>
    %22 = vector.extract_strided_slice %19 {offsets = [0, 64], sizes = [2, 32], strides = [1, 1]} : vector<2x128xf32> to vector<2x32xf32>
    %23 = vector.extract_strided_slice %18 {offsets = [0, 96], sizes = [2, 32], strides = [1, 1]} : vector<2x128xf32> to vector<2x32xf32>
    %24 = arith.mulf %21, %8 : vector<2x32xf32>
    %25 = arith.mulf %20, %22 : vector<2x32xf32>
    %26 = arith.addf %24, %25 : vector<2x32xf32>
    %27 = math.tanh %26 : vector<2x32xf32>
    %28 = arith.mulf %23, %27 : vector<2x32xf32>
    %c1_i32 = arith.constant 1 : i32
    %29 = arith.index_cast %c1_i32 : i32 to index
    %c0_10 = arith.constant 0 : index
    %c0_11 = arith.constant 0 : index
    %30 = vector.load %arg1[%29, %c0_10, %c0_11] : memref<16x2x128xf32, #tpu.memory_space<vmem>>, vector<1x2x128xf32>
    %31 = vector.shape_cast %30 : vector<1x2x128xf32> to vector<2x128xf32>
    %cst_12 = arith.constant dense<0.000000e+00> : vector<2x128xf32>
    %32 = tpu.matmul %28, %0, %cst_12 {dimension_numbers = #tpu.dot_dimension_numbers<[1], [0], [0], [1], [0, 0, 1, 1], [], []>} : vector<2x32xf32>, vector<32x128xf32>, vector<2x128xf32> -> vector<2x128xf32>
    %33 = arith.addf %31, %32 : vector<2x128xf32>
    %34 = arith.negf %33 : vector<2x128xf32>
    %35 = math.exp %34 : vector<2x128xf32>
    %cst_13 = arith.constant 1.000000e+00 : f32
    %36 = vector.broadcast %cst_13 : f32 to vector<2x128xf32>
    %37 = arith.addf %36, %35 : vector<2x128xf32>
    %38 = arith.divf %36, %37 : vector<2x128xf32>
    %39 = math.tanh %33 : vector<2x128xf32>
    %40 = vector.extract_strided_slice %38 {offsets = [0, 0], sizes = [2, 32], strides = [1, 1]} : vector<2x128xf32> to vector<2x32xf32>
    %41 = vector.extract_strided_slice %38 {offsets = [0, 32], sizes = [2, 32], strides = [1, 1]} : vector<2x128xf32> to vector<2x32xf32>
    %42 = vector.extract_strided_slice %39 {offsets = [0, 64], sizes = [2, 32], strides = [1, 1]} : vector<2x128xf32> to vector<2x32xf32>
    %43 = vector.extract_strided_slice %38 {offsets = [0, 96], sizes = [2, 32], strides = [1, 1]} : vector<2x128xf32> to vector<2x32xf32>
    %44 = arith.mulf %41, %26 : vector<2x32xf32>
    %45 = arith.mulf %40, %42 : vector<2x32xf32>
    %46 = arith.addf %44, %45 : vector<2x32xf32>
    %47 = math.tanh %46 : vector<2x32xf32>
    %48 = arith.mulf %43, %47 : vector<2x32xf32>
    %c2_i32 = arith.constant 2 : i32
    %49 = arith.index_cast %c2_i32 : i32 to index
    %c0_14 = arith.constant 0 : index
    %c0_15 = arith.constant 0 : index
    %50 = vector.load %arg1[%49, %c0_14, %c0_15] : memref<16x2x128xf32, #tpu.memory_space<vmem>>, vector<1x2x128xf32>
    %51 = vector.shape_cast %50 : vector<1x2x128xf32> to vector<2x128xf32>
    %cst_16 = arith.constant dense<0.000000e+00> : vector<2x128xf32>
    %52 = tpu.matmul %48, %0, %cst_16 {dimension_numbers = #tpu.dot_dimension_numbers<[1], [0], [0], [1], [0, 0, 1, 1], [], []>} : vector<2x32xf32>, vector<32x128xf32>, vector<2x128xf32> -> vector<2x128xf32>
    %53 = arith.addf %51, %52 : vector<2x128xf32>
    %54 = arith.negf %53 : vector<2x128xf32>
    %55 = math.exp %54 : vector<2x128xf32>
    %cst_17 = arith.constant 1.000000e+00 : f32
    %56 = vector.broadcast %cst_17 : f32 to vector<2x128xf32>
    %57 = arith.addf %56, %55 : vector<2x128xf32>
    %58 = arith.divf %56, %57 : vector<2x128xf32>
    %59 = math.tanh %53 : vector<2x128xf32>
    %60 = vector.extract_strided_slice %58 {offsets = [0, 0], sizes = [2, 32], strides = [1, 1]} : vector<2x128xf32> to vector<2x32xf32>
    %61 = vector.extract_strided_slice %58 {offsets = [0, 32], sizes = [2, 32], strides = [1, 1]} : vector<2x128xf32> to vector<2x32xf32>
    %62 = vector.extract_strided_slice %59 {offsets = [0, 64], sizes = [2, 32], strides = [1, 1]} : vector<2x128xf32> to vector<2x32xf32>
    %63 = vector.extract_strided_slice %58 {offsets = [0, 96], sizes = [2, 32], strides = [1, 1]} : vector<2x128xf32> to vector<2x32xf32>
    %64 = arith.mulf %61, %46 : vector<2x32xf32>
    %65 = arith.mulf %60, %62 : vector<2x32xf32>
    %66 = arith.addf %64, %65 : vector<2x32xf32>
    %67 = math.tanh %66 : vector<2x32xf32>
    %68 = arith.mulf %63, %67 : vector<2x32xf32>
    %c3_i32 = arith.constant 3 : i32
    %69 = arith.index_cast %c3_i32 : i32 to index
    %c0_18 = arith.constant 0 : index
    %c0_19 = arith.constant 0 : index
    %70 = vector.load %arg1[%69, %c0_18, %c0_19] : memref<16x2x128xf32, #tpu.memory_space<vmem>>, vector<1x2x128xf32>
    %71 = vector.shape_cast %70 : vector<1x2x128xf32> to vector<2x128xf32>
    %cst_20 = arith.constant dense<0.000000e+00> : vector<2x128xf32>
    %72 = tpu.matmul %68, %0, %cst_20 {dimension_numbers = #tpu.dot_dimension_numbers<[1], [0], [0], [1], [0, 0, 1, 1], [], []>} : vector<2x32xf32>, vector<32x128xf32>, vector<2x128xf32> -> vector<2x128xf32>
    %73 = arith.addf %71, %72 : vector<2x128xf32>
    %74 = arith.negf %73 : vector<2x128xf32>
    %75 = math.exp %74 : vector<2x128xf32>
    %cst_21 = arith.constant 1.000000e+00 : f32
    %76 = vector.broadcast %cst_21 : f32 to vector<2x128xf32>
    %77 = arith.addf %76, %75 : vector<2x128xf32>
    %78 = arith.divf %76, %77 : vector<2x128xf32>
    %79 = math.tanh %73 : vector<2x128xf32>
    %80 = vector.extract_strided_slice %78 {offsets = [0, 0], sizes = [2, 32], strides = [1, 1]} : vector<2x128xf32> to vector<2x32xf32>
    %81 = vector.extract_strided_slice %78 {offsets = [0, 32], sizes = [2, 32], strides = [1, 1]} : vector<2x128xf32> to vector<2x32xf32>
    %82 = vector.extract_strided_slice %79 {offsets = [0, 64], sizes = [2, 32], strides = [1, 1]} : vector<2x128xf32> to vector<2x32xf32>
    %83 = vector.extract_strided_slice %78 {offsets = [0, 96], sizes = [2, 32], strides = [1, 1]} : vector<2x128xf32> to vector<2x32xf32>
    %84 = arith.mulf %81, %66 : vector<2x32xf32>
    %85 = arith.mulf %80, %82 : vector<2x32xf32>
    %86 = arith.addf %84, %85 : vector<2x32xf32>
    %87 = math.tanh %86 : vector<2x32xf32>
    %88 = arith.mulf %83, %87 : vector<2x32xf32>
    %c4_i32 = arith.constant 4 : i32
    %89 = arith.index_cast %c4_i32 : i32 to index
    %c0_22 = arith.constant 0 : index
    %c0_23 = arith.constant 0 : index
    %90 = vector.load %arg1[%89, %c0_22, %c0_23] : memref<16x2x128xf32, #tpu.memory_space<vmem>>, vector<1x2x128xf32>
    %91 = vector.shape_cast %90 : vector<1x2x128xf32> to vector<2x128xf32>
    %cst_24 = arith.constant dense<0.000000e+00> : vector<2x128xf32>
    %92 = tpu.matmul %88, %0, %cst_24 {dimension_numbers = #tpu.dot_dimension_numbers<[1], [0], [0], [1], [0, 0, 1, 1], [], []>} : vector<2x32xf32>, vector<32x128xf32>, vector<2x128xf32> -> vector<2x128xf32>
    %93 = arith.addf %91, %92 : vector<2x128xf32>
    %94 = arith.negf %93 : vector<2x128xf32>
    %95 = math.exp %94 : vector<2x128xf32>
    %cst_25 = arith.constant 1.000000e+00 : f32
    %96 = vector.broadcast %cst_25 : f32 to vector<2x128xf32>
    %97 = arith.addf %96, %95 : vector<2x128xf32>
    %98 = arith.divf %96, %97 : vector<2x128xf32>
    %99 = math.tanh %93 : vector<2x128xf32>
    %100 = vector.extract_strided_slice %98 {offsets = [0, 0], sizes = [2, 32], strides = [1, 1]} : vector<2x128xf32> to vector<2x32xf32>
    %101 = vector.extract_strided_slice %98 {offsets = [0, 32], sizes = [2, 32], strides = [1, 1]} : vector<2x128xf32> to vector<2x32xf32>
    %102 = vector.extract_strided_slice %99 {offsets = [0, 64], sizes = [2, 32], strides = [1, 1]} : vector<2x128xf32> to vector<2x32xf32>
    %103 = vector.extract_strided_slice %98 {offsets = [0, 96], sizes = [2, 32], strides = [1, 1]} : vector<2x128xf32> to vector<2x32xf32>
    %104 = arith.mulf %101, %86 : vector<2x32xf32>
    %105 = arith.mulf %100, %102 : vector<2x32xf32>
    %106 = arith.addf %104, %105 : vector<2x32xf32>
    %107 = math.tanh %106 : vector<2x32xf32>
    %108 = arith.mulf %103, %107 : vector<2x32xf32>
    %c5_i32 = arith.constant 5 : i32
    %109 = arith.index_cast %c5_i32 : i32 to index
    %c0_26 = arith.constant 0 : index
    %c0_27 = arith.constant 0 : index
    %110 = vector.load %arg1[%109, %c0_26, %c0_27] : memref<16x2x128xf32, #tpu.memory_space<vmem>>, vector<1x2x128xf32>
    %111 = vector.shape_cast %110 : vector<1x2x128xf32> to vector<2x128xf32>
    %cst_28 = arith.constant dense<0.000000e+00> : vector<2x128xf32>
    %112 = tpu.matmul %108, %0, %cst_28 {dimension_numbers = #tpu.dot_dimension_numbers<[1], [0], [0], [1], [0, 0, 1, 1], [], []>} : vector<2x32xf32>, vector<32x128xf32>, vector<2x128xf32> -> vector<2x128xf32>
    %113 = arith.addf %111, %112 : vector<2x128xf32>
    %114 = arith.negf %113 : vector<2x128xf32>
    %115 = math.exp %114 : vector<2x128xf32>
    %cst_29 = arith.constant 1.000000e+00 : f32
    %116 = vector.broadcast %cst_29 : f32 to vector<2x128xf32>
    %117 = arith.addf %116, %115 : vector<2x128xf32>
    %118 = arith.divf %116, %117 : vector<2x128xf32>
    %119 = math.tanh %113 : vector<2x128xf32>
    %120 = vector.extract_strided_slice %118 {offsets = [0, 0], sizes = [2, 32], strides = [1, 1]} : vector<2x128xf32> to vector<2x32xf32>
    %121 = vector.extract_strided_slice %118 {offsets = [0, 32], sizes = [2, 32], strides = [1, 1]} : vector<2x128xf32> to vector<2x32xf32>
    %122 = vector.extract_strided_slice %119 {offsets = [0, 64], sizes = [2, 32], strides = [1, 1]} : vector<2x128xf32> to vector<2x32xf32>
    %123 = vector.extract_strided_slice %118 {offsets = [0, 96], sizes = [2, 32], strides = [1, 1]} : vector<2x128xf32> to vector<2x32xf32>
    %124 = arith.mulf %121, %106 : vector<2x32xf32>
    %125 = arith.mulf %120, %122 : vector<2x32xf32>
    %126 = arith.addf %124, %125 : vector<2x32xf32>
    %127 = math.tanh %126 : vector<2x32xf32>
    %128 = arith.mulf %123, %127 : vector<2x32xf32>
    %c6_i32 = arith.constant 6 : i32
    %129 = arith.index_cast %c6_i32 : i32 to index
    %c0_30 = arith.constant 0 : index
    %c0_31 = arith.constant 0 : index
    %130 = vector.load %arg1[%129, %c0_30, %c0_31] : memref<16x2x128xf32, #tpu.memory_space<vmem>>, vector<1x2x128xf32>
    %131 = vector.shape_cast %130 : vector<1x2x128xf32> to vector<2x128xf32>
    %cst_32 = arith.constant dense<0.000000e+00> : vector<2x128xf32>
    %132 = tpu.matmul %128, %0, %cst_32 {dimension_numbers = #tpu.dot_dimension_numbers<[1], [0], [0], [1], [0, 0, 1, 1], [], []>} : vector<2x32xf32>, vector<32x128xf32>, vector<2x128xf32> -> vector<2x128xf32>
    %133 = arith.addf %131, %132 : vector<2x128xf32>
    %134 = arith.negf %133 : vector<2x128xf32>
    %135 = math.exp %134 : vector<2x128xf32>
    %cst_33 = arith.constant 1.000000e+00 : f32
    %136 = vector.broadcast %cst_33 : f32 to vector<2x128xf32>
    %137 = arith.addf %136, %135 : vector<2x128xf32>
    %138 = arith.divf %136, %137 : vector<2x128xf32>
    %139 = math.tanh %133 : vector<2x128xf32>
    %140 = vector.extract_strided_slice %138 {offsets = [0, 0], sizes = [2, 32], strides = [1, 1]} : vector<2x128xf32> to vector<2x32xf32>
    %141 = vector.extract_strided_slice %138 {offsets = [0, 32], sizes = [2, 32], strides = [1, 1]} : vector<2x128xf32> to vector<2x32xf32>
    %142 = vector.extract_strided_slice %139 {offsets = [0, 64], sizes = [2, 32], strides = [1, 1]} : vector<2x128xf32> to vector<2x32xf32>
    %143 = vector.extract_strided_slice %138 {offsets = [0, 96], sizes = [2, 32], strides = [1, 1]} : vector<2x128xf32> to vector<2x32xf32>
    %144 = arith.mulf %141, %126 : vector<2x32xf32>
    %145 = arith.mulf %140, %142 : vector<2x32xf32>
    %146 = arith.addf %144, %145 : vector<2x32xf32>
    %147 = math.tanh %146 : vector<2x32xf32>
    %148 = arith.mulf %143, %147 : vector<2x32xf32>
    %c7_i32 = arith.constant 7 : i32
    %149 = arith.index_cast %c7_i32 : i32 to index
    %c0_34 = arith.constant 0 : index
    %c0_35 = arith.constant 0 : index
    %150 = vector.load %arg1[%149, %c0_34, %c0_35] : memref<16x2x128xf32, #tpu.memory_space<vmem>>, vector<1x2x128xf32>
    %151 = vector.shape_cast %150 : vector<1x2x128xf32> to vector<2x128xf32>
    %cst_36 = arith.constant dense<0.000000e+00> : vector<2x128xf32>
    %152 = tpu.matmul %148, %0, %cst_36 {dimension_numbers = #tpu.dot_dimension_numbers<[1], [0], [0], [1], [0, 0, 1, 1], [], []>} : vector<2x32xf32>, vector<32x128xf32>, vector<2x128xf32> -> vector<2x128xf32>
    %153 = arith.addf %151, %152 : vector<2x128xf32>
    %154 = arith.negf %153 : vector<2x128xf32>
    %155 = math.exp %154 : vector<2x128xf32>
    %cst_37 = arith.constant 1.000000e+00 : f32
    %156 = vector.broadcast %cst_37 : f32 to vector<2x128xf32>
    %157 = arith.addf %156, %155 : vector<2x128xf32>
    %158 = arith.divf %156, %157 : vector<2x128xf32>
    %159 = math.tanh %153 : vector<2x128xf32>
    %160 = vector.extract_strided_slice %158 {offsets = [0, 0], sizes = [2, 32], strides = [1, 1]} : vector<2x128xf32> to vector<2x32xf32>
    %161 = vector.extract_strided_slice %158 {offsets = [0, 32], sizes = [2, 32], strides = [1, 1]} : vector<2x128xf32> to vector<2x32xf32>
    %162 = vector.extract_strided_slice %159 {offsets = [0, 64], sizes = [2, 32], strides = [1, 1]} : vector<2x128xf32> to vector<2x32xf32>
    %163 = vector.extract_strided_slice %158 {offsets = [0, 96], sizes = [2, 32], strides = [1, 1]} : vector<2x128xf32> to vector<2x32xf32>
    %164 = arith.mulf %161, %146 : vector<2x32xf32>
    %165 = arith.mulf %160, %162 : vector<2x32xf32>
    %166 = arith.addf %164, %165 : vector<2x32xf32>
    %167 = math.tanh %166 : vector<2x32xf32>
    %168 = arith.mulf %163, %167 : vector<2x32xf32>
    %c8_i32 = arith.constant 8 : i32
    %cst_38 = arith.constant 0.000000e+00 : f32
    %169 = vector.broadcast %cst_38 : f32 to vector<2x128xf32>
    %c8 = arith.constant 8 : index
    %c0_39 = arith.constant 0 : index
    %c0_40 = arith.constant 0 : index
    %170 = vector.load %arg1[%c8, %c0_39, %c0_40] : memref<16x2x128xf32, #tpu.memory_space<vmem>>, vector<1x2x128xf32>
    %171 = vector.shape_cast %170 : vector<1x2x128xf32> to vector<2x128xf32>
    %c1_i32_41 = arith.constant 1 : i32
    %cst_42 = arith.constant dense<0.000000e+00> : vector<2x128xf32>
    %172 = tpu.matmul %168, %1, %cst_42 {dimension_numbers = #tpu.dot_dimension_numbers<[1], [0], [0], [1], [0, 0, 1, 1], [], []>} : vector<2x32xf32>, vector<32x128xf32>, vector<2x128xf32> -> vector<2x128xf32>
    %173 = arith.addf %171, %172 : vector<2x128xf32>
    %174 = arith.negf %173 : vector<2x128xf32>
    %175 = math.exp %174 : vector<2x128xf32>
    %cst_43 = arith.constant 1.000000e+00 : f32
    %176 = vector.broadcast %cst_43 : f32 to vector<2x128xf32>
    %177 = arith.addf %176, %175 : vector<2x128xf32>
    %178 = arith.divf %176, %177 : vector<2x128xf32>
    %179 = math.tanh %173 : vector<2x128xf32>
    %180 = vector.extract_strided_slice %178 {offsets = [0, 0], sizes = [2, 32], strides = [1, 1]} : vector<2x128xf32> to vector<2x32xf32>
    %181 = vector.extract_strided_slice %178 {offsets = [0, 32], sizes = [2, 32], strides = [1, 1]} : vector<2x128xf32> to vector<2x32xf32>
    %182 = vector.extract_strided_slice %179 {offsets = [0, 64], sizes = [2, 32], strides = [1, 1]} : vector<2x128xf32> to vector<2x32xf32>
    %183 = vector.extract_strided_slice %178 {offsets = [0, 96], sizes = [2, 32], strides = [1, 1]} : vector<2x128xf32> to vector<2x32xf32>
    %184 = arith.mulf %181, %166 : vector<2x32xf32>
    %185 = arith.mulf %180, %182 : vector<2x32xf32>
    %186 = arith.addf %184, %185 : vector<2x32xf32>
    %187 = math.tanh %186 : vector<2x32xf32>
    %188 = arith.mulf %183, %187 : vector<2x32xf32>
    %cst_44 = arith.constant dense<0.000000e+00> : vector<2x128xf32>
    %189 = tpu.matmul %188, %3, %cst_44 {dimension_numbers = #tpu.dot_dimension_numbers<[1], [0], [0], [1], [0, 0, 1, 1], [], []>} : vector<2x32xf32>, vector<32x128xf32>, vector<2x128xf32> -> vector<2x128xf32>
    %190 = vector.broadcast %4 : vector<1x128xf32> to vector<2x128xf32>
    %191 = arith.addf %189, %190 : vector<2x128xf32>
    %c16_i32 = arith.constant 16 : i32
    %192 = arith.muli %c1_i32_41, %c16_i32 : i32
    %193 = vector.broadcast %192 : i32 to vector<2x128xi32>
    %194 = arith.cmpi sge, %6, %193 : vector<2x128xi32>
    %c1_i32_45 = arith.constant 1 : i32
    %195 = arith.addi %c1_i32_41, %c1_i32_45 : i32
    %c16_i32_46 = arith.constant 16 : i32
    %196 = arith.muli %195, %c16_i32_46 : i32
    %197 = vector.broadcast %196 : i32 to vector<2x128xi32>
    %198 = arith.cmpi slt, %6, %197 : vector<2x128xi32>
    %199 = arith.andi %194, %198 : vector<2x128xi1>
    %200 = arith.select %199, %191, %169 : vector<2x128xi1>, vector<2x128xf32>
    %201 = vector.extract_strided_slice %191 {offsets = [0, 0], sizes = [2, 16], strides = [1, 1]} : vector<2x128xf32> to vector<2x16xf32>
    %cst_47 = arith.constant dense<0xFF800000> : vector<2xf32>
    %202 = vector.multi_reduction <maximumf>, %201, %cst_47 [1] : vector<2x16xf32> to vector<2xf32>
    %203 = vector.shape_cast %202 : vector<2xf32> to vector<2x1xf32>
    %204 = vector.broadcast %203 : vector<2x1xf32> to vector<2x16xf32>
    %205 = arith.cmpf oeq, %201, %204 : vector<2x16xf32>
    %c16_i32_48 = arith.constant 16 : i32
    %206 = vector.broadcast %c16_i32_48 : i32 to vector<2x16xi32>
    %207 = arith.select %205, %5, %206 : vector<2x16xi1>, vector<2x16xi32>
    %cst_49 = arith.constant dense<2147483647> : vector<2xi32>
    %208 = vector.multi_reduction <minsi>, %207, %cst_49 [1] : vector<2x16xi32> to vector<2xi32>
    %209 = vector.shape_cast %208 : vector<2xi32> to vector<2x1xi32>
    %210 = vector.broadcast %209 : vector<2x1xi32> to vector<2x16xi32>
    %211 = arith.cmpi eq, %5, %210 : vector<2x16xi32>
    %212 = arith.extui %211 : vector<2x16xi1> to vector<2x16xi32>
    %213 = arith.sitofp %212 : vector<2x16xi32> to vector<2x16xf32>
    %cst_50 = arith.constant dense<0.000000e+00> : vector<2x128xf32>
    %214 = tpu.matmul %213, %2, %cst_50 {dimension_numbers = #tpu.dot_dimension_numbers<[1], [0], [0], [1], [0, 0, 1, 1], [], []>} : vector<2x16xf32>, vector<16x128xf32>, vector<2x128xf32> -> vector<2x128xf32>
    %215 = arith.index_cast %c1_i32_41 : i32 to index
    %216 = memref.load %arg0[%215] : memref<8xi32, #tpu.memory_space<smem>>
    %c0_i32_51 = arith.constant 0 : i32
    %217 = arith.cmpi sgt, %216, %c0_i32_51 : i32
    %c8_i32_52 = arith.constant 8 : i32
    %218 = arith.addi %c8_i32_52, %c1_i32_41 : i32
    %219 = arith.index_cast %218 : i32 to index
    %c0_53 = arith.constant 0 : index
    %c0_54 = arith.constant 0 : index
    %220 = vector.load %arg1[%219, %c0_53, %c0_54] : memref<16x2x128xf32, #tpu.memory_space<vmem>>, vector<1x2x128xf32>
    %221 = vector.shape_cast %220 : vector<1x2x128xf32> to vector<2x128xf32>
    %222 = arith.select %217, %221, %214 : vector<2x128xf32>
    %c2_i32_55 = arith.constant 2 : i32
    %cst_56 = arith.constant dense<0.000000e+00> : vector<2x128xf32>
    %223 = tpu.matmul %188, %1, %cst_56 {dimension_numbers = #tpu.dot_dimension_numbers<[1], [0], [0], [1], [0, 0, 1, 1], [], []>} : vector<2x32xf32>, vector<32x128xf32>, vector<2x128xf32> -> vector<2x128xf32>
    %224 = arith.addf %222, %223 : vector<2x128xf32>
    %225 = arith.negf %224 : vector<2x128xf32>
    %226 = math.exp %225 : vector<2x128xf32>
    %cst_57 = arith.constant 1.000000e+00 : f32
    %227 = vector.broadcast %cst_57 : f32 to vector<2x128xf32>
    %228 = arith.addf %227, %226 : vector<2x128xf32>
    %229 = arith.divf %227, %228 : vector<2x128xf32>
    %230 = math.tanh %224 : vector<2x128xf32>
    %231 = vector.extract_strided_slice %229 {offsets = [0, 0], sizes = [2, 32], strides = [1, 1]} : vector<2x128xf32> to vector<2x32xf32>
    %232 = vector.extract_strided_slice %229 {offsets = [0, 32], sizes = [2, 32], strides = [1, 1]} : vector<2x128xf32> to vector<2x32xf32>
    %233 = vector.extract_strided_slice %230 {offsets = [0, 64], sizes = [2, 32], strides = [1, 1]} : vector<2x128xf32> to vector<2x32xf32>
    %234 = vector.extract_strided_slice %229 {offsets = [0, 96], sizes = [2, 32], strides = [1, 1]} : vector<2x128xf32> to vector<2x32xf32>
    %235 = arith.mulf %232, %186 : vector<2x32xf32>
    %236 = arith.mulf %231, %233 : vector<2x32xf32>
    %237 = arith.addf %235, %236 : vector<2x32xf32>
    %238 = math.tanh %237 : vector<2x32xf32>
    %239 = arith.mulf %234, %238 : vector<2x32xf32>
    %cst_58 = arith.constant dense<0.000000e+00> : vector<2x128xf32>
    %240 = tpu.matmul %239, %3, %cst_58 {dimension_numbers = #tpu.dot_dimension_numbers<[1], [0], [0], [1], [0, 0, 1, 1], [], []>} : vector<2x32xf32>, vector<32x128xf32>, vector<2x128xf32> -> vector<2x128xf32>
    %241 = vector.broadcast %4 : vector<1x128xf32> to vector<2x128xf32>
    %242 = arith.addf %240, %241 : vector<2x128xf32>
    %c16_i32_59 = arith.constant 16 : i32
    %243 = arith.muli %c2_i32_55, %c16_i32_59 : i32
    %244 = vector.broadcast %243 : i32 to vector<2x128xi32>
    %245 = arith.cmpi sge, %6, %244 : vector<2x128xi32>
    %c1_i32_60 = arith.constant 1 : i32
    %246 = arith.addi %c2_i32_55, %c1_i32_60 : i32
    %c16_i32_61 = arith.constant 16 : i32
    %247 = arith.muli %246, %c16_i32_61 : i32
    %248 = vector.broadcast %247 : i32 to vector<2x128xi32>
    %249 = arith.cmpi slt, %6, %248 : vector<2x128xi32>
    %250 = arith.andi %245, %249 : vector<2x128xi1>
    %251 = arith.select %250, %242, %200 : vector<2x128xi1>, vector<2x128xf32>
    %252 = vector.extract_strided_slice %242 {offsets = [0, 0], sizes = [2, 16], strides = [1, 1]} : vector<2x128xf32> to vector<2x16xf32>
    %cst_62 = arith.constant dense<0xFF800000> : vector<2xf32>
    %253 = vector.multi_reduction <maximumf>, %252, %cst_62 [1] : vector<2x16xf32> to vector<2xf32>
    %254 = vector.shape_cast %253 : vector<2xf32> to vector<2x1xf32>
    %255 = vector.broadcast %254 : vector<2x1xf32> to vector<2x16xf32>
    %256 = arith.cmpf oeq, %252, %255 : vector<2x16xf32>
    %c16_i32_63 = arith.constant 16 : i32
    %257 = vector.broadcast %c16_i32_63 : i32 to vector<2x16xi32>
    %258 = arith.select %256, %5, %257 : vector<2x16xi1>, vector<2x16xi32>
    %cst_64 = arith.constant dense<2147483647> : vector<2xi32>
    %259 = vector.multi_reduction <minsi>, %258, %cst_64 [1] : vector<2x16xi32> to vector<2xi32>
    %260 = vector.shape_cast %259 : vector<2xi32> to vector<2x1xi32>
    %261 = vector.broadcast %260 : vector<2x1xi32> to vector<2x16xi32>
    %262 = arith.cmpi eq, %5, %261 : vector<2x16xi32>
    %263 = arith.extui %262 : vector<2x16xi1> to vector<2x16xi32>
    %264 = arith.sitofp %263 : vector<2x16xi32> to vector<2x16xf32>
    %cst_65 = arith.constant dense<0.000000e+00> : vector<2x128xf32>
    %265 = tpu.matmul %264, %2, %cst_65 {dimension_numbers = #tpu.dot_dimension_numbers<[1], [0], [0], [1], [0, 0, 1, 1], [], []>} : vector<2x16xf32>, vector<16x128xf32>, vector<2x128xf32> -> vector<2x128xf32>
    %266 = arith.index_cast %c2_i32_55 : i32 to index
    %267 = memref.load %arg0[%266] : memref<8xi32, #tpu.memory_space<smem>>
    %c0_i32_66 = arith.constant 0 : i32
    %268 = arith.cmpi sgt, %267, %c0_i32_66 : i32
    %c8_i32_67 = arith.constant 8 : i32
    %269 = arith.addi %c8_i32_67, %c2_i32_55 : i32
    %270 = arith.index_cast %269 : i32 to index
    %c0_68 = arith.constant 0 : index
    %c0_69 = arith.constant 0 : index
    %271 = vector.load %arg1[%270, %c0_68, %c0_69] : memref<16x2x128xf32, #tpu.memory_space<vmem>>, vector<1x2x128xf32>
    %272 = vector.shape_cast %271 : vector<1x2x128xf32> to vector<2x128xf32>
    %273 = arith.select %268, %272, %265 : vector<2x128xf32>
    %c3_i32_70 = arith.constant 3 : i32
    %cst_71 = arith.constant dense<0.000000e+00> : vector<2x128xf32>
    %274 = tpu.matmul %239, %1, %cst_71 {dimension_numbers = #tpu.dot_dimension_numbers<[1], [0], [0], [1], [0, 0, 1, 1], [], []>} : vector<2x32xf32>, vector<32x128xf32>, vector<2x128xf32> -> vector<2x128xf32>
    %275 = arith.addf %273, %274 : vector<2x128xf32>
    %276 = arith.negf %275 : vector<2x128xf32>
    %277 = math.exp %276 : vector<2x128xf32>
    %cst_72 = arith.constant 1.000000e+00 : f32
    %278 = vector.broadcast %cst_72 : f32 to vector<2x128xf32>
    %279 = arith.addf %278, %277 : vector<2x128xf32>
    %280 = arith.divf %278, %279 : vector<2x128xf32>
    %281 = math.tanh %275 : vector<2x128xf32>
    %282 = vector.extract_strided_slice %280 {offsets = [0, 0], sizes = [2, 32], strides = [1, 1]} : vector<2x128xf32> to vector<2x32xf32>
    %283 = vector.extract_strided_slice %280 {offsets = [0, 32], sizes = [2, 32], strides = [1, 1]} : vector<2x128xf32> to vector<2x32xf32>
    %284 = vector.extract_strided_slice %281 {offsets = [0, 64], sizes = [2, 32], strides = [1, 1]} : vector<2x128xf32> to vector<2x32xf32>
    %285 = vector.extract_strided_slice %280 {offsets = [0, 96], sizes = [2, 32], strides = [1, 1]} : vector<2x128xf32> to vector<2x32xf32>
    %286 = arith.mulf %283, %237 : vector<2x32xf32>
    %287 = arith.mulf %282, %284 : vector<2x32xf32>
    %288 = arith.addf %286, %287 : vector<2x32xf32>
    %289 = math.tanh %288 : vector<2x32xf32>
    %290 = arith.mulf %285, %289 : vector<2x32xf32>
    %cst_73 = arith.constant dense<0.000000e+00> : vector<2x128xf32>
    %291 = tpu.matmul %290, %3, %cst_73 {dimension_numbers = #tpu.dot_dimension_numbers<[1], [0], [0], [1], [0, 0, 1, 1], [], []>} : vector<2x32xf32>, vector<32x128xf32>, vector<2x128xf32> -> vector<2x128xf32>
    %292 = vector.broadcast %4 : vector<1x128xf32> to vector<2x128xf32>
    %293 = arith.addf %291, %292 : vector<2x128xf32>
    %c16_i32_74 = arith.constant 16 : i32
    %294 = arith.muli %c3_i32_70, %c16_i32_74 : i32
    %295 = vector.broadcast %294 : i32 to vector<2x128xi32>
    %296 = arith.cmpi sge, %6, %295 : vector<2x128xi32>
    %c1_i32_75 = arith.constant 1 : i32
    %297 = arith.addi %c3_i32_70, %c1_i32_75 : i32
    %c16_i32_76 = arith.constant 16 : i32
    %298 = arith.muli %297, %c16_i32_76 : i32
    %299 = vector.broadcast %298 : i32 to vector<2x128xi32>
    %300 = arith.cmpi slt, %6, %299 : vector<2x128xi32>
    %301 = arith.andi %296, %300 : vector<2x128xi1>
    %302 = arith.select %301, %293, %251 : vector<2x128xi1>, vector<2x128xf32>
    %303 = vector.extract_strided_slice %293 {offsets = [0, 0], sizes = [2, 16], strides = [1, 1]} : vector<2x128xf32> to vector<2x16xf32>
    %cst_77 = arith.constant dense<0xFF800000> : vector<2xf32>
    %304 = vector.multi_reduction <maximumf>, %303, %cst_77 [1] : vector<2x16xf32> to vector<2xf32>
    %305 = vector.shape_cast %304 : vector<2xf32> to vector<2x1xf32>
    %306 = vector.broadcast %305 : vector<2x1xf32> to vector<2x16xf32>
    %307 = arith.cmpf oeq, %303, %306 : vector<2x16xf32>
    %c16_i32_78 = arith.constant 16 : i32
    %308 = vector.broadcast %c16_i32_78 : i32 to vector<2x16xi32>
    %309 = arith.select %307, %5, %308 : vector<2x16xi1>, vector<2x16xi32>
    %cst_79 = arith.constant dense<2147483647> : vector<2xi32>
    %310 = vector.multi_reduction <minsi>, %309, %cst_79 [1] : vector<2x16xi32> to vector<2xi32>
    %311 = vector.shape_cast %310 : vector<2xi32> to vector<2x1xi32>
    %312 = vector.broadcast %311 : vector<2x1xi32> to vector<2x16xi32>
    %313 = arith.cmpi eq, %5, %312 : vector<2x16xi32>
    %314 = arith.extui %313 : vector<2x16xi1> to vector<2x16xi32>
    %315 = arith.sitofp %314 : vector<2x16xi32> to vector<2x16xf32>
    %cst_80 = arith.constant dense<0.000000e+00> : vector<2x128xf32>
    %316 = tpu.matmul %315, %2, %cst_80 {dimension_numbers = #tpu.dot_dimension_numbers<[1], [0], [0], [1], [0, 0, 1, 1], [], []>} : vector<2x16xf32>, vector<16x128xf32>, vector<2x128xf32> -> vector<2x128xf32>
    %317 = arith.index_cast %c3_i32_70 : i32 to index
    %318 = memref.load %arg0[%317] : memref<8xi32, #tpu.memory_space<smem>>
    %c0_i32_81 = arith.constant 0 : i32
    %319 = arith.cmpi sgt, %318, %c0_i32_81 : i32
    %c8_i32_82 = arith.constant 8 : i32
    %320 = arith.addi %c8_i32_82, %c3_i32_70 : i32
    %321 = arith.index_cast %320 : i32 to index
    %c0_83 = arith.constant 0 : index
    %c0_84 = arith.constant 0 : index
    %322 = vector.load %arg1[%321, %c0_83, %c0_84] : memref<16x2x128xf32, #tpu.memory_space<vmem>>, vector<1x2x128xf32>
    %323 = vector.shape_cast %322 : vector<1x2x128xf32> to vector<2x128xf32>
    %324 = arith.select %319, %323, %316 : vector<2x128xf32>
    %c4_i32_85 = arith.constant 4 : i32
    %cst_86 = arith.constant dense<0.000000e+00> : vector<2x128xf32>
    %325 = tpu.matmul %290, %1, %cst_86 {dimension_numbers = #tpu.dot_dimension_numbers<[1], [0], [0], [1], [0, 0, 1, 1], [], []>} : vector<2x32xf32>, vector<32x128xf32>, vector<2x128xf32> -> vector<2x128xf32>
    %326 = arith.addf %324, %325 : vector<2x128xf32>
    %327 = arith.negf %326 : vector<2x128xf32>
    %328 = math.exp %327 : vector<2x128xf32>
    %cst_87 = arith.constant 1.000000e+00 : f32
    %329 = vector.broadcast %cst_87 : f32 to vector<2x128xf32>
    %330 = arith.addf %329, %328 : vector<2x128xf32>
    %331 = arith.divf %329, %330 : vector<2x128xf32>
    %332 = math.tanh %326 : vector<2x128xf32>
    %333 = vector.extract_strided_slice %331 {offsets = [0, 0], sizes = [2, 32], strides = [1, 1]} : vector<2x128xf32> to vector<2x32xf32>
    %334 = vector.extract_strided_slice %331 {offsets = [0, 32], sizes = [2, 32], strides = [1, 1]} : vector<2x128xf32> to vector<2x32xf32>
    %335 = vector.extract_strided_slice %332 {offsets = [0, 64], sizes = [2, 32], strides = [1, 1]} : vector<2x128xf32> to vector<2x32xf32>
    %336 = vector.extract_strided_slice %331 {offsets = [0, 96], sizes = [2, 32], strides = [1, 1]} : vector<2x128xf32> to vector<2x32xf32>
    %337 = arith.mulf %334, %288 : vector<2x32xf32>
    %338 = arith.mulf %333, %335 : vector<2x32xf32>
    %339 = arith.addf %337, %338 : vector<2x32xf32>
    %340 = math.tanh %339 : vector<2x32xf32>
    %341 = arith.mulf %336, %340 : vector<2x32xf32>
    %cst_88 = arith.constant dense<0.000000e+00> : vector<2x128xf32>
    %342 = tpu.matmul %341, %3, %cst_88 {dimension_numbers = #tpu.dot_dimension_numbers<[1], [0], [0], [1], [0, 0, 1, 1], [], []>} : vector<2x32xf32>, vector<32x128xf32>, vector<2x128xf32> -> vector<2x128xf32>
    %343 = vector.broadcast %4 : vector<1x128xf32> to vector<2x128xf32>
    %344 = arith.addf %342, %343 : vector<2x128xf32>
    %c16_i32_89 = arith.constant 16 : i32
    %345 = arith.muli %c4_i32_85, %c16_i32_89 : i32
    %346 = vector.broadcast %345 : i32 to vector<2x128xi32>
    %347 = arith.cmpi sge, %6, %346 : vector<2x128xi32>
    %c1_i32_90 = arith.constant 1 : i32
    %348 = arith.addi %c4_i32_85, %c1_i32_90 : i32
    %c16_i32_91 = arith.constant 16 : i32
    %349 = arith.muli %348, %c16_i32_91 : i32
    %350 = vector.broadcast %349 : i32 to vector<2x128xi32>
    %351 = arith.cmpi slt, %6, %350 : vector<2x128xi32>
    %352 = arith.andi %347, %351 : vector<2x128xi1>
    %353 = arith.select %352, %344, %302 : vector<2x128xi1>, vector<2x128xf32>
    %354 = vector.extract_strided_slice %344 {offsets = [0, 0], sizes = [2, 16], strides = [1, 1]} : vector<2x128xf32> to vector<2x16xf32>
    %cst_92 = arith.constant dense<0xFF800000> : vector<2xf32>
    %355 = vector.multi_reduction <maximumf>, %354, %cst_92 [1] : vector<2x16xf32> to vector<2xf32>
    %356 = vector.shape_cast %355 : vector<2xf32> to vector<2x1xf32>
    %357 = vector.broadcast %356 : vector<2x1xf32> to vector<2x16xf32>
    %358 = arith.cmpf oeq, %354, %357 : vector<2x16xf32>
    %c16_i32_93 = arith.constant 16 : i32
    %359 = vector.broadcast %c16_i32_93 : i32 to vector<2x16xi32>
    %360 = arith.select %358, %5, %359 : vector<2x16xi1>, vector<2x16xi32>
    %cst_94 = arith.constant dense<2147483647> : vector<2xi32>
    %361 = vector.multi_reduction <minsi>, %360, %cst_94 [1] : vector<2x16xi32> to vector<2xi32>
    %362 = vector.shape_cast %361 : vector<2xi32> to vector<2x1xi32>
    %363 = vector.broadcast %362 : vector<2x1xi32> to vector<2x16xi32>
    %364 = arith.cmpi eq, %5, %363 : vector<2x16xi32>
    %365 = arith.extui %364 : vector<2x16xi1> to vector<2x16xi32>
    %366 = arith.sitofp %365 : vector<2x16xi32> to vector<2x16xf32>
    %cst_95 = arith.constant dense<0.000000e+00> : vector<2x128xf32>
    %367 = tpu.matmul %366, %2, %cst_95 {dimension_numbers = #tpu.dot_dimension_numbers<[1], [0], [0], [1], [0, 0, 1, 1], [], []>} : vector<2x16xf32>, vector<16x128xf32>, vector<2x128xf32> -> vector<2x128xf32>
    %368 = arith.index_cast %c4_i32_85 : i32 to index
    %369 = memref.load %arg0[%368] : memref<8xi32, #tpu.memory_space<smem>>
    %c0_i32_96 = arith.constant 0 : i32
    %370 = arith.cmpi sgt, %369, %c0_i32_96 : i32
    %c8_i32_97 = arith.constant 8 : i32
    %371 = arith.addi %c8_i32_97, %c4_i32_85 : i32
    %372 = arith.index_cast %371 : i32 to index
    %c0_98 = arith.constant 0 : index
    %c0_99 = arith.constant 0 : index
    %373 = vector.load %arg1[%372, %c0_98, %c0_99] : memref<16x2x128xf32, #tpu.memory_space<vmem>>, vector<1x2x128xf32>
    %374 = vector.shape_cast %373 : vector<1x2x128xf32> to vector<2x128xf32>
    %375 = arith.select %370, %374, %367 : vector<2x128xf32>
    %c5_i32_100 = arith.constant 5 : i32
    %cst_101 = arith.constant dense<0.000000e+00> : vector<2x128xf32>
    %376 = tpu.matmul %341, %1, %cst_101 {dimension_numbers = #tpu.dot_dimension_numbers<[1], [0], [0], [1], [0, 0, 1, 1], [], []>} : vector<2x32xf32>, vector<32x128xf32>, vector<2x128xf32> -> vector<2x128xf32>
    %377 = arith.addf %375, %376 : vector<2x128xf32>
    %378 = arith.negf %377 : vector<2x128xf32>
    %379 = math.exp %378 : vector<2x128xf32>
    %cst_102 = arith.constant 1.000000e+00 : f32
    %380 = vector.broadcast %cst_102 : f32 to vector<2x128xf32>
    %381 = arith.addf %380, %379 : vector<2x128xf32>
    %382 = arith.divf %380, %381 : vector<2x128xf32>
    %383 = math.tanh %377 : vector<2x128xf32>
    %384 = vector.extract_strided_slice %382 {offsets = [0, 0], sizes = [2, 32], strides = [1, 1]} : vector<2x128xf32> to vector<2x32xf32>
    %385 = vector.extract_strided_slice %382 {offsets = [0, 32], sizes = [2, 32], strides = [1, 1]} : vector<2x128xf32> to vector<2x32xf32>
    %386 = vector.extract_strided_slice %383 {offsets = [0, 64], sizes = [2, 32], strides = [1, 1]} : vector<2x128xf32> to vector<2x32xf32>
    %387 = vector.extract_strided_slice %382 {offsets = [0, 96], sizes = [2, 32], strides = [1, 1]} : vector<2x128xf32> to vector<2x32xf32>
    %388 = arith.mulf %385, %339 : vector<2x32xf32>
    %389 = arith.mulf %384, %386 : vector<2x32xf32>
    %390 = arith.addf %388, %389 : vector<2x32xf32>
    %391 = math.tanh %390 : vector<2x32xf32>
    %392 = arith.mulf %387, %391 : vector<2x32xf32>
    %cst_103 = arith.constant dense<0.000000e+00> : vector<2x128xf32>
    %393 = tpu.matmul %392, %3, %cst_103 {dimension_numbers = #tpu.dot_dimension_numbers<[1], [0], [0], [1], [0, 0, 1, 1], [], []>} : vector<2x32xf32>, vector<32x128xf32>, vector<2x128xf32> -> vector<2x128xf32>
    %394 = vector.broadcast %4 : vector<1x128xf32> to vector<2x128xf32>
    %395 = arith.addf %393, %394 : vector<2x128xf32>
    %c16_i32_104 = arith.constant 16 : i32
    %396 = arith.muli %c5_i32_100, %c16_i32_104 : i32
    %397 = vector.broadcast %396 : i32 to vector<2x128xi32>
    %398 = arith.cmpi sge, %6, %397 : vector<2x128xi32>
    %c1_i32_105 = arith.constant 1 : i32
    %399 = arith.addi %c5_i32_100, %c1_i32_105 : i32
    %c16_i32_106 = arith.constant 16 : i32
    %400 = arith.muli %399, %c16_i32_106 : i32
    %401 = vector.broadcast %400 : i32 to vector<2x128xi32>
    %402 = arith.cmpi slt, %6, %401 : vector<2x128xi32>
    %403 = arith.andi %398, %402 : vector<2x128xi1>
    %404 = arith.select %403, %395, %353 : vector<2x128xi1>, vector<2x128xf32>
    %405 = vector.extract_strided_slice %395 {offsets = [0, 0], sizes = [2, 16], strides = [1, 1]} : vector<2x128xf32> to vector<2x16xf32>
    %cst_107 = arith.constant dense<0xFF800000> : vector<2xf32>
    %406 = vector.multi_reduction <maximumf>, %405, %cst_107 [1] : vector<2x16xf32> to vector<2xf32>
    %407 = vector.shape_cast %406 : vector<2xf32> to vector<2x1xf32>
    %408 = vector.broadcast %407 : vector<2x1xf32> to vector<2x16xf32>
    %409 = arith.cmpf oeq, %405, %408 : vector<2x16xf32>
    %c16_i32_108 = arith.constant 16 : i32
    %410 = vector.broadcast %c16_i32_108 : i32 to vector<2x16xi32>
    %411 = arith.select %409, %5, %410 : vector<2x16xi1>, vector<2x16xi32>
    %cst_109 = arith.constant dense<2147483647> : vector<2xi32>
    %412 = vector.multi_reduction <minsi>, %411, %cst_109 [1] : vector<2x16xi32> to vector<2xi32>
    %413 = vector.shape_cast %412 : vector<2xi32> to vector<2x1xi32>
    %414 = vector.broadcast %413 : vector<2x1xi32> to vector<2x16xi32>
    %415 = arith.cmpi eq, %5, %414 : vector<2x16xi32>
    %416 = arith.extui %415 : vector<2x16xi1> to vector<2x16xi32>
    %417 = arith.sitofp %416 : vector<2x16xi32> to vector<2x16xf32>
    %cst_110 = arith.constant dense<0.000000e+00> : vector<2x128xf32>
    %418 = tpu.matmul %417, %2, %cst_110 {dimension_numbers = #tpu.dot_dimension_numbers<[1], [0], [0], [1], [0, 0, 1, 1], [], []>} : vector<2x16xf32>, vector<16x128xf32>, vector<2x128xf32> -> vector<2x128xf32>
    %419 = arith.index_cast %c5_i32_100 : i32 to index
    %420 = memref.load %arg0[%419] : memref<8xi32, #tpu.memory_space<smem>>
    %c0_i32_111 = arith.constant 0 : i32
    %421 = arith.cmpi sgt, %420, %c0_i32_111 : i32
    %c8_i32_112 = arith.constant 8 : i32
    %422 = arith.addi %c8_i32_112, %c5_i32_100 : i32
    %423 = arith.index_cast %422 : i32 to index
    %c0_113 = arith.constant 0 : index
    %c0_114 = arith.constant 0 : index
    %424 = vector.load %arg1[%423, %c0_113, %c0_114] : memref<16x2x128xf32, #tpu.memory_space<vmem>>, vector<1x2x128xf32>
    %425 = vector.shape_cast %424 : vector<1x2x128xf32> to vector<2x128xf32>
    %426 = arith.select %421, %425, %418 : vector<2x128xf32>
    %c6_i32_115 = arith.constant 6 : i32
    %cst_116 = arith.constant dense<0.000000e+00> : vector<2x128xf32>
    %427 = tpu.matmul %392, %1, %cst_116 {dimension_numbers = #tpu.dot_dimension_numbers<[1], [0], [0], [1], [0, 0, 1, 1], [], []>} : vector<2x32xf32>, vector<32x128xf32>, vector<2x128xf32> -> vector<2x128xf32>
    %428 = arith.addf %426, %427 : vector<2x128xf32>
    %429 = arith.negf %428 : vector<2x128xf32>
    %430 = math.exp %429 : vector<2x128xf32>
    %cst_117 = arith.constant 1.000000e+00 : f32
    %431 = vector.broadcast %cst_117 : f32 to vector<2x128xf32>
    %432 = arith.addf %431, %430 : vector<2x128xf32>
    %433 = arith.divf %431, %432 : vector<2x128xf32>
    %434 = math.tanh %428 : vector<2x128xf32>
    %435 = vector.extract_strided_slice %433 {offsets = [0, 0], sizes = [2, 32], strides = [1, 1]} : vector<2x128xf32> to vector<2x32xf32>
    %436 = vector.extract_strided_slice %433 {offsets = [0, 32], sizes = [2, 32], strides = [1, 1]} : vector<2x128xf32> to vector<2x32xf32>
    %437 = vector.extract_strided_slice %434 {offsets = [0, 64], sizes = [2, 32], strides = [1, 1]} : vector<2x128xf32> to vector<2x32xf32>
    %438 = vector.extract_strided_slice %433 {offsets = [0, 96], sizes = [2, 32], strides = [1, 1]} : vector<2x128xf32> to vector<2x32xf32>
    %439 = arith.mulf %436, %390 : vector<2x32xf32>
    %440 = arith.mulf %435, %437 : vector<2x32xf32>
    %441 = arith.addf %439, %440 : vector<2x32xf32>
    %442 = math.tanh %441 : vector<2x32xf32>
    %443 = arith.mulf %438, %442 : vector<2x32xf32>
    %cst_118 = arith.constant dense<0.000000e+00> : vector<2x128xf32>
    %444 = tpu.matmul %443, %3, %cst_118 {dimension_numbers = #tpu.dot_dimension_numbers<[1], [0], [0], [1], [0, 0, 1, 1], [], []>} : vector<2x32xf32>, vector<32x128xf32>, vector<2x128xf32> -> vector<2x128xf32>
    %445 = vector.broadcast %4 : vector<1x128xf32> to vector<2x128xf32>
    %446 = arith.addf %444, %445 : vector<2x128xf32>
    %c16_i32_119 = arith.constant 16 : i32
    %447 = arith.muli %c6_i32_115, %c16_i32_119 : i32
    %448 = vector.broadcast %447 : i32 to vector<2x128xi32>
    %449 = arith.cmpi sge, %6, %448 : vector<2x128xi32>
    %c1_i32_120 = arith.constant 1 : i32
    %450 = arith.addi %c6_i32_115, %c1_i32_120 : i32
    %c16_i32_121 = arith.constant 16 : i32
    %451 = arith.muli %450, %c16_i32_121 : i32
    %452 = vector.broadcast %451 : i32 to vector<2x128xi32>
    %453 = arith.cmpi slt, %6, %452 : vector<2x128xi32>
    %454 = arith.andi %449, %453 : vector<2x128xi1>
    %455 = arith.select %454, %446, %404 : vector<2x128xi1>, vector<2x128xf32>
    %456 = vector.extract_strided_slice %446 {offsets = [0, 0], sizes = [2, 16], strides = [1, 1]} : vector<2x128xf32> to vector<2x16xf32>
    %cst_122 = arith.constant dense<0xFF800000> : vector<2xf32>
    %457 = vector.multi_reduction <maximumf>, %456, %cst_122 [1] : vector<2x16xf32> to vector<2xf32>
    %458 = vector.shape_cast %457 : vector<2xf32> to vector<2x1xf32>
    %459 = vector.broadcast %458 : vector<2x1xf32> to vector<2x16xf32>
    %460 = arith.cmpf oeq, %456, %459 : vector<2x16xf32>
    %c16_i32_123 = arith.constant 16 : i32
    %461 = vector.broadcast %c16_i32_123 : i32 to vector<2x16xi32>
    %462 = arith.select %460, %5, %461 : vector<2x16xi1>, vector<2x16xi32>
    %cst_124 = arith.constant dense<2147483647> : vector<2xi32>
    %463 = vector.multi_reduction <minsi>, %462, %cst_124 [1] : vector<2x16xi32> to vector<2xi32>
    %464 = vector.shape_cast %463 : vector<2xi32> to vector<2x1xi32>
    %465 = vector.broadcast %464 : vector<2x1xi32> to vector<2x16xi32>
    %466 = arith.cmpi eq, %5, %465 : vector<2x16xi32>
    %467 = arith.extui %466 : vector<2x16xi1> to vector<2x16xi32>
    %468 = arith.sitofp %467 : vector<2x16xi32> to vector<2x16xf32>
    %cst_125 = arith.constant dense<0.000000e+00> : vector<2x128xf32>
    %469 = tpu.matmul %468, %2, %cst_125 {dimension_numbers = #tpu.dot_dimension_numbers<[1], [0], [0], [1], [0, 0, 1, 1], [], []>} : vector<2x16xf32>, vector<16x128xf32>, vector<2x128xf32> -> vector<2x128xf32>
    %470 = arith.index_cast %c6_i32_115 : i32 to index
    %471 = memref.load %arg0[%470] : memref<8xi32, #tpu.memory_space<smem>>
    %c0_i32_126 = arith.constant 0 : i32
    %472 = arith.cmpi sgt, %471, %c0_i32_126 : i32
    %c8_i32_127 = arith.constant 8 : i32
    %473 = arith.addi %c8_i32_127, %c6_i32_115 : i32
    %474 = arith.index_cast %473 : i32 to index
    %c0_128 = arith.constant 0 : index
    %c0_129 = arith.constant 0 : index
    %475 = vector.load %arg1[%474, %c0_128, %c0_129] : memref<16x2x128xf32, #tpu.memory_space<vmem>>, vector<1x2x128xf32>
    %476 = vector.shape_cast %475 : vector<1x2x128xf32> to vector<2x128xf32>
    %477 = arith.select %472, %476, %469 : vector<2x128xf32>
    %c7_i32_130 = arith.constant 7 : i32
    %cst_131 = arith.constant dense<0.000000e+00> : vector<2x128xf32>
    %478 = tpu.matmul %443, %1, %cst_131 {dimension_numbers = #tpu.dot_dimension_numbers<[1], [0], [0], [1], [0, 0, 1, 1], [], []>} : vector<2x32xf32>, vector<32x128xf32>, vector<2x128xf32> -> vector<2x128xf32>
    %479 = arith.addf %477, %478 : vector<2x128xf32>
    %480 = arith.negf %479 : vector<2x128xf32>
    %481 = math.exp %480 : vector<2x128xf32>
    %cst_132 = arith.constant 1.000000e+00 : f32
    %482 = vector.broadcast %cst_132 : f32 to vector<2x128xf32>
    %483 = arith.addf %482, %481 : vector<2x128xf32>
    %484 = arith.divf %482, %483 : vector<2x128xf32>
    %485 = math.tanh %479 : vector<2x128xf32>
    %486 = vector.extract_strided_slice %484 {offsets = [0, 0], sizes = [2, 32], strides = [1, 1]} : vector<2x128xf32> to vector<2x32xf32>
    %487 = vector.extract_strided_slice %484 {offsets = [0, 32], sizes = [2, 32], strides = [1, 1]} : vector<2x128xf32> to vector<2x32xf32>
    %488 = vector.extract_strided_slice %485 {offsets = [0, 64], sizes = [2, 32], strides = [1, 1]} : vector<2x128xf32> to vector<2x32xf32>
    %489 = vector.extract_strided_slice %484 {offsets = [0, 96], sizes = [2, 32], strides = [1, 1]} : vector<2x128xf32> to vector<2x32xf32>
    %490 = arith.mulf %487, %441 : vector<2x32xf32>
    %491 = arith.mulf %486, %488 : vector<2x32xf32>
    %492 = arith.addf %490, %491 : vector<2x32xf32>
    %493 = math.tanh %492 : vector<2x32xf32>
    %494 = arith.mulf %489, %493 : vector<2x32xf32>
    %cst_133 = arith.constant dense<0.000000e+00> : vector<2x128xf32>
    %495 = tpu.matmul %494, %3, %cst_133 {dimension_numbers = #tpu.dot_dimension_numbers<[1], [0], [0], [1], [0, 0, 1, 1], [], []>} : vector<2x32xf32>, vector<32x128xf32>, vector<2x128xf32> -> vector<2x128xf32>
    %496 = vector.broadcast %4 : vector<1x128xf32> to vector<2x128xf32>
    %497 = arith.addf %495, %496 : vector<2x128xf32>
    %c16_i32_134 = arith.constant 16 : i32
    %498 = arith.muli %c7_i32_130, %c16_i32_134 : i32
    %499 = vector.broadcast %498 : i32 to vector<2x128xi32>
    %500 = arith.cmpi sge, %6, %499 : vector<2x128xi32>
    %c1_i32_135 = arith.constant 1 : i32
    %501 = arith.addi %c7_i32_130, %c1_i32_135 : i32
    %c16_i32_136 = arith.constant 16 : i32
    %502 = arith.muli %501, %c16_i32_136 : i32
    %503 = vector.broadcast %502 : i32 to vector<2x128xi32>
    %504 = arith.cmpi slt, %6, %503 : vector<2x128xi32>
    %505 = arith.andi %500, %504 : vector<2x128xi1>
    %506 = arith.select %505, %497, %455 : vector<2x128xi1>, vector<2x128xf32>
    %507 = vector.extract_strided_slice %497 {offsets = [0, 0], sizes = [2, 16], strides = [1, 1]} : vector<2x128xf32> to vector<2x16xf32>
    %cst_137 = arith.constant dense<0xFF800000> : vector<2xf32>
    %508 = vector.multi_reduction <maximumf>, %507, %cst_137 [1] : vector<2x16xf32> to vector<2xf32>
    %509 = vector.shape_cast %508 : vector<2xf32> to vector<2x1xf32>
    %510 = vector.broadcast %509 : vector<2x1xf32> to vector<2x16xf32>
    %511 = arith.cmpf oeq, %507, %510 : vector<2x16xf32>
    %c16_i32_138 = arith.constant 16 : i32
    %512 = vector.broadcast %c16_i32_138 : i32 to vector<2x16xi32>
    %513 = arith.select %511, %5, %512 : vector<2x16xi1>, vector<2x16xi32>
    %cst_139 = arith.constant dense<2147483647> : vector<2xi32>
    %514 = vector.multi_reduction <minsi>, %513, %cst_139 [1] : vector<2x16xi32> to vector<2xi32>
    %515 = vector.shape_cast %514 : vector<2xi32> to vector<2x1xi32>
    %516 = vector.broadcast %515 : vector<2x1xi32> to vector<2x16xi32>
    %517 = arith.cmpi eq, %5, %516 : vector<2x16xi32>
    %518 = arith.extui %517 : vector<2x16xi1> to vector<2x16xi32>
    %519 = arith.sitofp %518 : vector<2x16xi32> to vector<2x16xf32>
    %cst_140 = arith.constant dense<0.000000e+00> : vector<2x128xf32>
    %520 = tpu.matmul %519, %2, %cst_140 {dimension_numbers = #tpu.dot_dimension_numbers<[1], [0], [0], [1], [0, 0, 1, 1], [], []>} : vector<2x16xf32>, vector<16x128xf32>, vector<2x128xf32> -> vector<2x128xf32>
    %521 = arith.index_cast %c7_i32_130 : i32 to index
    %522 = memref.load %arg0[%521] : memref<8xi32, #tpu.memory_space<smem>>
    %c0_i32_141 = arith.constant 0 : i32
    %523 = arith.cmpi sgt, %522, %c0_i32_141 : i32
    %c8_i32_142 = arith.constant 8 : i32
    %524 = arith.addi %c8_i32_142, %c7_i32_130 : i32
    %525 = arith.index_cast %524 : i32 to index
    %c0_143 = arith.constant 0 : index
    %c0_144 = arith.constant 0 : index
    %526 = vector.load %arg1[%525, %c0_143, %c0_144] : memref<16x2x128xf32, #tpu.memory_space<vmem>>, vector<1x2x128xf32>
    %527 = vector.shape_cast %526 : vector<1x2x128xf32> to vector<2x128xf32>
    %528 = arith.select %523, %527, %520 : vector<2x128xf32>
    %c7_i32_145 = arith.constant 7 : i32
    %c0_146 = arith.constant 0 : index
    %c0_147 = arith.constant 0 : index
    %529 = vector.load %arg3[%c0_146, %c0_147] : memref<2x128xf32, #tpu.memory_space<vmem>>, vector<2x128xf32>
    tpu.vector_store %arg3[%c0_146, %c0_147], %506 {strides = array<i32>} : memref<2x128xf32, #tpu.memory_space<vmem>>, vector<2x128xf32>,
    return
  }
}

</mosaic_0001>

<llo_original>
// kernel: seq2seq_forward.1
$region0: #{seq2seq_forward.1}
  #allocation0 [shape = 'u32[]', space=smem, size = 0x4, offset = 0x4, fixed_abs, tag = 'smem constant byte address 0x4 - core index']
  #allocation1 [shape = 'u32[144,128]{1,0:T(1,128)}', space=vmem, size = 0x12000, scoped, tag = 'internal scratch']
  %s0 = inlined_call_operand.vmem [shape: s32[8], index: 0, kind: input, shape index: {}]
  %s1 = inlined_call_operand.vmem [shape: f32[16,2,128], index: 1, kind: input, shape index: {}]
  %s2 = inlined_call_operand.vmem [shape: f32[120,128], index: 2, kind: input, shape index: {}]
  %s3 = inlined_call_operand.vmem [shape: f32[2,128], index: 3, kind: output, shape index: {}]
  %s4 = sld [smem:[#allocation0]]
  $region26: #{seq2seq_forward.1} parent=0
    _
  %s6 = ssub.s32 1, %s4
  %s7 = scalar_select 0, %s6, %s4
  $region1: #{seq2seq_forward.1} parent=0
    #allocation2 [shape = 'u8[512]{0}', space=smem, size = 0x200, scoped, tag = 'input window, operand 0, single buffered']
    #allocation3 [shape = 's32[1]{0}', space=sflag, size = 0x4, scoped, tag = 'scoped memory for seq2seq_forward.1']
    %8 = vsyncpa [#allocation3], 0
    // Predicated region
    $region2: #{seq2seq_forward.1} parent=1 // pred_check
      _
    $region3: #{seq2seq_forward.1} parent=1 // pred_check_branch
      %10 = sbr.rel (0) target = $region5
    $region4: #{seq2seq_forward.1} parent=1 // pred_region
      %s12 = ssub.s32 16, 16
      %13 = vsyncadd [#allocation3], %s12
      %s15 = sshll.u32 %s0, 4
      %s16 = int_to_ptr.vmem [resolvable:$true] %s15
      %18 = dma.vmem_to_smem %s16, 16, [#allocation2], [#allocation3]
    $region5: #{seq2seq_forward.1} parent=1 // pred_fallthru
      _
    // Predicated region
    $region6: #{seq2seq_forward.1} parent=1 // pred_check
      _
    $region7: #{seq2seq_forward.1} parent=1 // pred_check_branch
      %20 = sbr.rel (0) target = $region9
    $region8: #{seq2seq_forward.1} parent=1 // pred_region
      _
    $region9: #{seq2seq_forward.1} parent=1 // pred_fallthru
      _
    // Predicated region
    $region10: #{seq2seq_forward.1} parent=1 // pred_check
      _
    $region11: #{seq2seq_forward.1} parent=1 // pred_check_branch
      %22 = sbr.rel (0) target = $region13
    $region12: #{seq2seq_forward.1} parent=1 // pred_region
      _
    $region13: #{seq2seq_forward.1} parent=1 // pred_fallthru
      _
    // Predicated region
    $region14: #{seq2seq_forward.1} parent=1 // pred_check
      _
    $region15: #{seq2seq_forward.1} parent=1 // pred_check_branch
      %24 = sbr.rel (0) target = $region17
    $region16: #{seq2seq_forward.1} parent=1 // pred_region
      %25 = dma.done [#allocation3], 16
    $region17: #{seq2seq_forward.1} parent=1 // pred_fallthru
      _
    %26 = sfence
    %v27 = vld [vmem:[%s2] sm:$0xff]
    %v28 = vld [vmem:[%s2 + $0x8] sm:$0xff]
    %v29 = vld [vmem:[%s2 + $0x10] sm:$0xff]
    %v30 = vld [vmem:[%s2 + $0x18] sm:$0xff]
    %v31 = vld [vmem:[%s2 + $0x20] sm:$0xff]
    %v32 = vld [vmem:[%s2 + $0x28] sm:$0xff]
    %v33 = vld [vmem:[%s2 + $0x30] sm:$0xff]
    %v34 = vld [vmem:[%s2 + $0x38] sm:$0xff]
    %v35 = vld [vmem:[%s2 + $0x40] sm:$0xff]
    %v36 = vld [vmem:[%s2 + $0x48] sm:$0xff]
    %v37 = vld [vmem:[%s2 + $0x50] sm:$0xff]
    %v38 = vld [vmem:[%s2 + $0x58] sm:$0xff]
    %v39 = vld [vmem:[%s2 + $0x60] sm:$0xff]
    %v40 = vld [vmem:[%s2 + $0x68] sm:$0xff]
    %v41 = vld [vmem:[%s2 + $0x70] sm:$0x1]
    %v42 = vlaneseq
    %v43 = vand.u32 %v42, 127
    %v44 = vld [vmem:[%s1] sm:$0x3]
    %vm45 = vcmask 261120
    %v47 = vsel %vm45, 0.0, 0
    %49 = vmatprep.subr.mxu0 0.0
    %50 = vmatpush1.msra.mxu0 0.0
    %51 = vmatprep.subr.mxu0 0.0
    %52 = vmatpush1.msra.mxu0 0.0
    %53 = vmatprep.subr.mxu0 0.0
    %54 = vmatpush1.msra.mxu0 0.0
    %55 = vmatprep.subr.mxu0 0.0
    %56 = vmatpush1.msra.mxu0 0.0
    %57 = vmatprep.subr.mxu0 0.0
    %58 = vmatpush1.msra.mxu0 0.0
    %59 = vmatprep.subr.mxu0 0.0
    %60 = vmatpush1.msra.mxu0 0.0
    %61 = vmatprep.subr.mxu0 0.0
    %62 = vmatpush1.msra.mxu0 0.0
    %63 = vmatprep.subr.mxu0 0.0
    %64 = vmatpush1.msra.mxu0 0.0
    %65 = vmatprep.subr.mxu0 0.0
    %66 = vmatpush1.msra.mxu0 0.0
    %67 = vmatprep.subr.mxu0 0.0
    %68 = vmatpush1.msra.mxu0 0.0
    %69 = vmatprep.subr.mxu0 0.0
    %70 = vmatpush1.msra.mxu0 0.0
    %71 = vmatprep.subr.mxu0 0.0
    %72 = vmatpush1.msra.mxu0 0.0
    %73 = vmatprep.subr.mxu0 0.0
    %74 = vmatpush1.msra.mxu0 %v30
    %75 = vmatprep.subr.mxu0 0.0
    %76 = vmatpush1.msra.mxu0 %v29
    %77 = vmatprep.subr.mxu0 0.0
    %78 = vmatpush1.msra.mxu0 %v28
    %79 = vmatprep.subr.mxu0 0.0
    %80 = vmatpush1.msra.mxu0 %v27
    %81 = vmatprep.subr.mxu0 0.0
    %82 = vmatpush2.msra.mxu0 0.0
    %83 = vmatprep.subr.mxu0 0.0
    %84 = vmatpush2.msra.mxu0 0.0
    %85 = vmatprep.subr.mxu0 0.0
    %86 = vmatpush2.msra.mxu0 0.0
    %87 = vmatprep.subr.mxu0 0.0
    %88 = vmatpush2.msra.mxu0 0.0
    %89 = vmatprep.subr.mxu0 0.0
    %90 = vmatpush2.msra.mxu0 0.0
    %91 = vmatprep.subr.mxu0 0.0
    %92 = vmatpush2.msra.mxu0 0.0
    %93 = vmatprep.subr.mxu0 0.0
    %94 = vmatpush2.msra.mxu0 0.0
    %95 = vmatprep.subr.mxu0 0.0
    %96 = vmatpush2.msra.mxu0 0.0
    %97 = vmatprep.subr.mxu0 0.0
    %98 = vmatpush2.msra.mxu0 0.0
    %99 = vmatprep.subr.mxu0 0.0
    %100 = vmatpush2.msra.mxu0 0.0
    %101 = vmatprep.subr.mxu0 0.0
    %102 = vmatpush2.msra.mxu0 0.0
    %103 = vmatprep.subr.mxu0 0.0
    %104 = vmatpush2.msra.mxu0 0.0
    %105 = vmatprep.subr.mxu0 0.0
    %106 = vmatpush2.msra.mxu0 0.0
    %107 = vmatprep.subr.mxu0 0.0
    %108 = vmatpush2.msra.mxu0 0.0
    %109 = vmatprep.subr.mxu0 0.0
    %110 = vmatpush2.msra.mxu0 0.0
    %111 = vmatprep.subr.mxu0 0.0
    %112 = vmatpush2.msra.mxu0 0.0
    %113 = vmatprep.mubr.f32.mxu0 0.0
    %114 = vmatmul.mubr.f32.gmra.mxu0 %v47
    %v115 = vpop.f32.mrf.mxu0
    %v116 = vadd.f32 0.0, %v115
    %v117 = vpop.f32.mrf.mxu0
    %118 = vdwg.mxu0
    %v119 = vadd.f32 %v44, %v116
    %v120 = vxor.u32 %v119, 2147483648
    %v121 = vmul.f32 %v120, 1.442695
    %v122 = vpow.pop %v121
    %v123 = vadd.f32 %v122, 1.0
    %v124 = vrcp.pop %v123
    %v125 = vmul.f32 1.0, %v124
    %v126 = vtanh.pop %v119
    %v127 = vmul.f32 %v125, 0.0
    %129 = vrot.lane.b32.xlu0 %v126, 64
    %v130 = vpop.permute.xlu0 %129
    %v132 = vmul.f32 %v125, %v130
    %134 = vrot.lane.b32.xlu0 %v132, 32
    %v135 = vpop.permute.xlu0 %134
    %v137 = vadd.f32 %v127, %v135
    %v138 = vtanh.pop %v137
    %140 = vrot.lane.b32.xlu0 %v138, 64
    %v141 = vpop.permute.xlu0 %140
    %v143 = vmul.f32 %v125, %v141
    %s144 = scalar_lea.vmem %s1, 2
    %v145 = vld [vmem:[%s144] sm:$0x3]
    %147 = vrot.lane.b32.xlu0 %v143, 32
    %v148 = vpop.permute.xlu0 %147
    %v149 = vsel %vm45, %v148, 0
    %151 = vmatprep.subr.mxu0 0.0
    %152 = vmatpush1.msra.mxu0 0.0
    %153 = vmatprep.subr.mxu0 0.0
    %154 = vmatpush1.msra.mxu0 0.0
    %155 = vmatprep.subr.mxu0 0.0
    %156 = vmatpush1.msra.mxu0 0.0
    %157 = vmatprep.subr.mxu0 0.0
    %158 = vmatpush1.msra.mxu0 0.0
    %159 = vmatprep.subr.mxu0 0.0
    %160 = vmatpush1.msra.mxu0 0.0
    %161 = vmatprep.subr.mxu0 0.0
    %162 = vmatpush1.msra.mxu0 0.0
    %163 = vmatprep.subr.mxu0 0.0
    %164 = vmatpush1.msra.mxu0 0.0
    %165 = vmatprep.subr.mxu0 0.0
    %166 = vmatpush1.msra.mxu0 0.0
    %167 = vmatprep.subr.mxu0 0.0
    %168 = vmatpush1.msra.mxu0 0.0
    %169 = vmatprep.subr.mxu0 0.0
    %170 = vmatpush1.msra.mxu0 0.0
    %171 = vmatprep.subr.mxu0 0.0
    %172 = vmatpush1.msra.mxu0 0.0
    %173 = vmatprep.subr.mxu0 0.0
    %174 = vmatpush1.msra.mxu0 0.0
    %175 = vmatprep.subr.mxu0 0.0
    %176 = vmatpush1.msra.mxu0 %v30
    %177 = vmatprep.subr.mxu0 0.0
    %178 = vmatpush1.msra.mxu0 %v29
    %179 = vmatprep.subr.mxu0 0.0
    %180 = vmatpush1.msra.mxu0 %v28
    %181 = vmatprep.subr.mxu0 0.0
    %182 = vmatpush1.msra.mxu0 %v27
    %183 = vmatprep.subr.mxu0 0.0
    %184 = vmatpush2.msra.mxu0 0.0
    %185 = vmatprep.subr.mxu0 0.0
    %186 = vmatpush2.msra.mxu0 0.0
    %187 = vmatprep.subr.mxu0 0.0
    %188 = vmatpush2.msra.mxu0 0.0
    %189 = vmatprep.subr.mxu0 0.0
    %190 = vmatpush2.msra.mxu0 0.0
    %191 = vmatprep.subr.mxu0 0.0
    %192 = vmatpush2.msra.mxu0 0.0
    %193 = vmatprep.subr.mxu0 0.0
    %194 = vmatpush2.msra.mxu0 0.0
    %195 = vmatprep.subr.mxu0 0.0
    %196 = vmatpush2.msra.mxu0 0.0
    %197 = vmatprep.subr.mxu0 0.0
    %198 = vmatpush2.msra.mxu0 0.0
    %199 = vmatprep.subr.mxu0 0.0
    %200 = vmatpush2.msra.mxu0 0.0
    %201 = vmatprep.subr.mxu0 0.0
    %202 = vmatpush2.msra.mxu0 0.0
    %203 = vmatprep.subr.mxu0 0.0
    %204 = vmatpush2.msra.mxu0 0.0
    %205 = vmatprep.subr.mxu0 0.0
    %206 = vmatpush2.msra.mxu0 0.0
    %207 = vmatprep.subr.mxu0 0.0
    %208 = vmatpush2.msra.mxu0 0.0
    %209 = vmatprep.subr.mxu0 0.0
    %210 = vmatpush2.msra.mxu0 0.0
    %211 = vmatprep.subr.mxu0 0.0
    %212 = vmatpush2.msra.mxu0 0.0
    %213 = vmatprep.subr.mxu0 0.0
    %214 = vmatpush2.msra.mxu0 0.0
    %215 = vmatprep.mubr.f32.mxu0 0.0
    %216 = vmatmul.mubr.f32.gmra.mxu0 %v149
    %v217 = vpop.f32.mrf.mxu0
    %v218 = vadd.f32 0.0, %v217
    %v219 = vpop.f32.mrf.mxu0
    %220 = vdwg.mxu0
    %v221 = vadd.f32 %v145, %v218
    %v222 = vxor.u32 %v221, 2147483648
    %v223 = vmul.f32 %v222, 1.442695
    %v224 = vpow.pop %v223
    %v225 = vadd.f32 %v224, 1.0
    %v226 = vrcp.pop %v225
    %v227 = vmul.f32 1.0, %v226
    %v228 = vtanh.pop %v221
    %v229 = vmul.f32 %v227, %v137
    %231 = vrot.lane.b32.xlu0 %v228, 64
    %v232 = vpop.permute.xlu0 %231
    %v234 = vmul.f32 %v227, %v232
    %236 = vrot.lane.b32.xlu0 %v234, 32
    %v237 = vpop.permute.xlu0 %236
    %v239 = vadd.f32 %v229, %v237
    %v240 = vtanh.pop %v239
    %242 = vrot.lane.b32.xlu0 %v240, 64
    %v243 = vpop.permute.xlu0 %242
    %v245 = vmul.f32 %v227, %v243
    %s246 = scalar_lea.vmem %s1, 4
    %v247 = vld [vmem:[%s246] sm:$0x3]
    %249 = vrot.lane.b32.xlu0 %v245, 32
    %v250 = vpop.permute.xlu0 %249
    %v251 = vsel %vm45, %v250, 0
    %253 = vmatprep.subr.mxu0 0.0
    %254 = vmatpush1.msra.mxu0 0.0
    %255 = vmatprep.subr.mxu0 0.0
    %256 = vmatpush1.msra.mxu0 0.0
    %257 = vmatprep.subr.mxu0 0.0
    %258 = vmatpush1.msra.mxu0 0.0
    %259 = vmatprep.subr.mxu0 0.0
    %260 = vmatpush1.msra.mxu0 0.0
    %261 = vmatprep.subr.mxu0 0.0
    %262 = vmatpush1.msra.mxu0 0.0
    %263 = vmatprep.subr.mxu0 0.0
    %264 = vmatpush1.msra.mxu0 0.0
    %265 = vmatprep.subr.mxu0 0.0
    %266 = vmatpush1.msra.mxu0 0.0
    %267 = vmatprep.subr.mxu0 0.0
    %268 = vmatpush1.msra.mxu0 0.0
    %269 = vmatprep.subr.mxu0 0.0
    %270 = vmatpush1.msra.mxu0 0.0
    %271 = vmatprep.subr.mxu0 0.0
    %272 = vmatpush1.msra.mxu0 0.0
    %273 = vmatprep.subr.mxu0 0.0
    %274 = vmatpush1.msra.mxu0 0.0
    %275 = vmatprep.subr.mxu0 0.0
    %276 = vmatpush1.msra.mxu0 0.0
    %277 = vmatprep.subr.mxu0 0.0
    %278 = vmatpush1.msra.mxu0 %v30
    %279 = vmatprep.subr.mxu0 0.0
    %280 = vmatpush1.msra.mxu0 %v29
    %281 = vmatprep.subr.mxu0 0.0
    %282 = vmatpush1.msra.mxu0 %v28
    %283 = vmatprep.subr.mxu0 0.0
    %284 = vmatpush1.msra.mxu0 %v27
    %285 = vmatprep.subr.mxu0 0.0
    %286 = vmatpush2.msra.mxu0 0.0
    %287 = vmatprep.subr.mxu0 0.0
    %288 = vmatpush2.msra.mxu0 0.0
    %289 = vmatprep.subr.mxu0 0.0
    %290 = vmatpush2.msra.mxu0 0.0
    %291 = vmatprep.subr.mxu0 0.0
    %292 = vmatpush2.msra.mxu0 0.0
    %293 = vmatprep.subr.mxu0 0.0
    %294 = vmatpush2.msra.mxu0 0.0
    %295 = vmatprep.subr.mxu0 0.0
    %296 = vmatpush2.msra.mxu0 0.0
    %297 = vmatprep.subr.mxu0 0.0
    %298 = vmatpush2.msra.mxu0 0.0
    %299 = vmatprep.subr.mxu0 0.0
    %300 = vmatpush2.msra.mxu0 0.0
    %301 = vmatprep.subr.mxu0 0.0
    %302 = vmatpush2.msra.mxu0 0.0
    %303 = vmatprep.subr.mxu0 0.0
    %304 = vmatpush2.msra.mxu0 0.0
    %305 = vmatprep.subr.mxu0 0.0
    %306 = vmatpush2.msra.mxu0 0.0
    %307 = vmatprep.subr.mxu0 0.0
    %308 = vmatpush2.msra.mxu0 0.0
    %309 = vmatprep.subr.mxu0 0.0
    %310 = vmatpush2.msra.mxu0 0.0
    %311 = vmatprep.subr.mxu0 0.0
    %312 = vmatpush2.msra.mxu0 0.0
    %313 = vmatprep.subr.mxu0 0.0
    %314 = vmatpush2.msra.mxu0 0.0
    %315 = vmatprep.subr.mxu0 0.0
    %316 = vmatpush2.msra.mxu0 0.0
    %317 = vmatprep.mubr.f32.mxu0 0.0
    %318 = vmatmul.mubr.f32.gmra.mxu0 %v251
    %v319 = vpop.f32.mrf.mxu0
    %v320 = vadd.f32 0.0, %v319
    %v321 = vpop.f32.mrf.mxu0
    %322 = vdwg.mxu0
    %v323 = vadd.f32 %v247, %v320
    %v324 = vxor.u32 %v323, 2147483648
    %v325 = vmul.f32 %v324, 1.442695
    %v326 = vpow.pop %v325
    %v327 = vadd.f32 %v326, 1.0
    %v328 = vrcp.pop %v327
    %v329 = vmul.f32 1.0, %v328
    %v330 = vtanh.pop %v323
    %v331 = vmul.f32 %v329, %v239
    %333 = vrot.lane.b32.xlu0 %v330, 64
    %v334 = vpop.permute.xlu0 %333
    %v336 = vmul.f32 %v329, %v334
    %338 = vrot.lane.b32.xlu0 %v336, 32
    %v339 = vpop.permute.xlu0 %338
    %v341 = vadd.f32 %v331, %v339
    %v342 = vtanh.pop %v341
    %344 = vrot.lane.b32.xlu0 %v342, 64
    %v345 = vpop.permute.xlu0 %344
    %v347 = vmul.f32 %v329, %v345
    %s348 = scalar_lea.vmem %s1, 6
    %v349 = vld [vmem:[%s348] sm:$0x3]
    %351 = vrot.lane.b32.xlu0 %v347, 32
    %v352 = vpop.permute.xlu0 %351
    %v353 = vsel %vm45, %v352, 0
    %355 = vmatprep.subr.mxu0 0.0
    %356 = vmatpush1.msra.mxu0 0.0
    %357 = vmatprep.subr.mxu0 0.0
    %358 = vmatpush1.msra.mxu0 0.0
    %359 = vmatprep.subr.mxu0 0.0
    %360 = vmatpush1.msra.mxu0 0.0
    %361 = vmatprep.subr.mxu0 0.0
    %362 = vmatpush1.msra.mxu0 0.0
    %363 = vmatprep.subr.mxu0 0.0
    %364 = vmatpush1.msra.mxu0 0.0
    %365 = vmatprep.subr.mxu0 0.0
    %366 = vmatpush1.msra.mxu0 0.0
    %367 = vmatprep.subr.mxu0 0.0
    %368 = vmatpush1.msra.mxu0 0.0
    %369 = vmatprep.subr.mxu0 0.0
    %370 = vmatpush1.msra.mxu0 0.0
    %371 = vmatprep.subr.mxu0 0.0
    %372 = vmatpush1.msra.mxu0 0.0
    %373 = vmatprep.subr.mxu0 0.0
    %374 = vmatpush1.msra.mxu0 0.0
    %375 = vmatprep.subr.mxu0 0.0
    %376 = vmatpush1.msra.mxu0 0.0
    %377 = vmatprep.subr.mxu0 0.0
    %378 = vmatpush1.msra.mxu0 0.0
    %379 = vmatprep.subr.mxu0 0.0
    %380 = vmatpush1.msra.mxu0 %v30
    %381 = vmatprep.subr.mxu0 0.0
    %382 = vmatpush1.msra.mxu0 %v29
    %383 = vmatprep.subr.mxu0 0.0
    %384 = vmatpush1.msra.mxu0 %v28
    %385 = vmatprep.subr.mxu0 0.0
    %386 = vmatpush1.msra.mxu0 %v27
    %387 = vmatprep.subr.mxu0 0.0
    %388 = vmatpush2.msra.mxu0 0.0
    %389 = vmatprep.subr.mxu0 0.0
    %390 = vmatpush2.msra.mxu0 0.0
    %391 = vmatprep.subr.mxu0 0.0
    %392 = vmatpush2.msra.mxu0 0.0
    %393 = vmatprep.subr.mxu0 0.0
    %394 = vmatpush2.msra.mxu0 0.0
    %395 = vmatprep.subr.mxu0 0.0
    %396 = vmatpush2.msra.mxu0 0.0
    %397 = vmatprep.subr.mxu0 0.0
    %398 = vmatpush2.msra.mxu0 0.0
    %399 = vmatprep.subr.mxu0 0.0
    %400 = vmatpush2.msra.mxu0 0.0
    %401 = vmatprep.subr.mxu0 0.0
    %402 = vmatpush2.msra.mxu0 0.0
    %403 = vmatprep.subr.mxu0 0.0
    %404 = vmatpush2.msra.mxu0 0.0
    %405 = vmatprep.subr.mxu0 0.0
    %406 = vmatpush2.msra.mxu0 0.0
    %407 = vmatprep.subr.mxu0 0.0
    %408 = vmatpush2.msra.mxu0 0.0
    %409 = vmatprep.subr.mxu0 0.0
    %410 = vmatpush2.msra.mxu0 0.0
    %411 = vmatprep.subr.mxu0 0.0
    %412 = vmatpush2.msra.mxu0 0.0
    %413 = vmatprep.subr.mxu0 0.0
    %414 = vmatpush2.msra.mxu0 0.0
    %415 = vmatprep.subr.mxu0 0.0
    %416 = vmatpush2.msra.mxu0 0.0
    %417 = vmatprep.subr.mxu0 0.0
    %418 = vmatpush2.msra.mxu0 0.0
    %419 = vmatprep.mubr.f32.mxu0 0.0
    %420 = vmatmul.mubr.f32.gmra.mxu0 %v353
    %v421 = vpop.f32.mrf.mxu0
    %v422 = vadd.f32 0.0, %v421
    %v423 = vpop.f32.mrf.mxu0
    %424 = vdwg.mxu0
    %v425 = vadd.f32 %v349, %v422
    %v426 = vxor.u32 %v425, 2147483648
    %v427 = vmul.f32 %v426, 1.442695
    %v428 = vpow.pop %v427
    %v429 = vadd.f32 %v428, 1.0
    %v430 = vrcp.pop %v429
    %v431 = vmul.f32 1.0, %v430
    %v432 = vtanh.pop %v425
    %v433 = vmul.f32 %v431, %v341
    %435 = vrot.lane.b32.xlu0 %v432, 64
    %v436 = vpop.permute.xlu0 %435
    %v438 = vmul.f32 %v431, %v436
    %440 = vrot.lane.b32.xlu0 %v438, 32
    %v441 = vpop.permute.xlu0 %440
    %v443 = vadd.f32 %v433, %v441
    %v444 = vtanh.pop %v443
    %446 = vrot.lane.b32.xlu0 %v444, 64
    %v447 = vpop.permute.xlu0 %446
    %v449 = vmul.f32 %v431, %v447
    %s450 = scalar_lea.vmem %s1, 8
    %v451 = vld [vmem:[%s450] sm:$0x3]
    %453 = vrot.lane.b32.xlu0 %v449, 32
    %v454 = vpop.permute.xlu0 %453
    %v455 = vsel %vm45, %v454, 0
    %457 = vmatprep.subr.mxu0 0.0
    %458 = vmatpush1.msra.mxu0 0.0
    %459 = vmatprep.subr.mxu0 0.0
    %460 = vmatpush1.msra.mxu0 0.0
    %461 = vmatprep.subr.mxu0 0.0
    %462 = vmatpush1.msra.mxu0 0.0
    %463 = vmatprep.subr.mxu0 0.0
    %464 = vmatpush1.msra.mxu0 0.0
    %465 = vmatprep.subr.mxu0 0.0
    %466 = vmatpush1.msra.mxu0 0.0
    %467 = vmatprep.subr.mxu0 0.0
    %468 = vmatpush1.msra.mxu0 0.0
    %469 = vmatprep.subr.mxu0 0.0
    %470 = vmatpush1.msra.mxu0 0.0
    %471 = vmatprep.subr.mxu0 0.0
    %472 = vmatpush1.msra.mxu0 0.0
    %473 = vmatprep.subr.mxu0 0.0
    %474 = vmatpush1.msra.mxu0 0.0
    %475 = vmatprep.subr.mxu0 0.0
    %476 = vmatpush1.msra.mxu0 0.0
    %477 = vmatprep.subr.mxu0 0.0
    %478 = vmatpush1.msra.mxu0 0.0
    %479 = vmatprep.subr.mxu0 0.0
    %480 = vmatpush1.msra.mxu0 0.0
    %481 = vmatprep.subr.mxu0 0.0
    %482 = vmatpush1.msra.mxu0 %v30
    %483 = vmatprep.subr.mxu0 0.0
    %484 = vmatpush1.msra.mxu0 %v29
    %485 = vmatprep.subr.mxu0 0.0
    %486 = vmatpush1.msra.mxu0 %v28
    %487 = vmatprep.subr.mxu0 0.0
    %488 = vmatpush1.msra.mxu0 %v27
    %489 = vmatprep.subr.mxu0 0.0
    %490 = vmatpush2.msra.mxu0 0.0
    %491 = vmatprep.subr.mxu0 0.0
    %492 = vmatpush2.msra.mxu0 0.0
    %493 = vmatprep.subr.mxu0 0.0
    %494 = vmatpush2.msra.mxu0 0.0
    %495 = vmatprep.subr.mxu0 0.0
    %496 = vmatpush2.msra.mxu0 0.0
    %497 = vmatprep.subr.mxu0 0.0
    %498 = vmatpush2.msra.mxu0 0.0
    %499 = vmatprep.subr.mxu0 0.0
    %500 = vmatpush2.msra.mxu0 0.0
    %501 = vmatprep.subr.mxu0 0.0
    %502 = vmatpush2.msra.mxu0 0.0
    %503 = vmatprep.subr.mxu0 0.0
    %504 = vmatpush2.msra.mxu0 0.0
    %505 = vmatprep.subr.mxu0 0.0
    %506 = vmatpush2.msra.mxu0 0.0
    %507 = vmatprep.subr.mxu0 0.0
    %508 = vmatpush2.msra.mxu0 0.0
    %509 = vmatprep.subr.mxu0 0.0
    %510 = vmatpush2.msra.mxu0 0.0
    %511 = vmatprep.subr.mxu0 0.0
    %512 = vmatpush2.msra.mxu0 0.0
    %513 = vmatprep.subr.mxu0 0.0
    %514 = vmatpush2.msra.mxu0 0.0
    %515 = vmatprep.subr.mxu0 0.0
    %516 = vmatpush2.msra.mxu0 0.0
    %517 = vmatprep.subr.mxu0 0.0
    %518 = vmatpush2.msra.mxu0 0.0
    %519 = vmatprep.subr.mxu0 0.0
    %520 = vmatpush2.msra.mxu0 0.0
    %521 = vmatprep.mubr.f32.mxu0 0.0
    %522 = vmatmul.mubr.f32.gmra.mxu0 %v455
    %v523 = vpop.f32.mrf.mxu0
    %v524 = vadd.f32 0.0, %v523
    %v525 = vpop.f32.mrf.mxu0
    %526 = vdwg.mxu0
    %v527 = vadd.f32 %v451, %v524
    %v528 = vxor.u32 %v527, 2147483648
    %v529 = vmul.f32 %v528, 1.442695
    %v530 = vpow.pop %v529
    %v531 = vadd.f32 %v530, 1.0
    %v532 = vrcp.pop %v531
    %v533 = vmul.f32 1.0, %v532
    %v534 = vtanh.pop %v527
    %v535 = vmul.f32 %v533, %v443
    %537 = vrot.lane.b32.xlu0 %v534, 64
    %v538 = vpop.permute.xlu0 %537
    %v540 = vmul.f32 %v533, %v538
    %542 = vrot.lane.b32.xlu0 %v540, 32
    %v543 = vpop.permute.xlu0 %542
    %v545 = vadd.f32 %v535, %v543
    %v546 = vtanh.pop %v545
    %548 = vrot.lane.b32.xlu0 %v546, 64
    %v549 = vpop.permute.xlu0 %548
    %v551 = vmul.f32 %v533, %v549
    %s552 = scalar_lea.vmem %s1, 10
    %v553 = vld [vmem:[%s552] sm:$0x3]
    %555 = vrot.lane.b32.xlu0 %v551, 32
    %v556 = vpop.permute.xlu0 %555
    %v557 = vsel %vm45, %v556, 0
    %559 = vmatprep.subr.mxu0 0.0
    %560 = vmatpush1.msra.mxu0 0.0
    %561 = vmatprep.subr.mxu0 0.0
    %562 = vmatpush1.msra.mxu0 0.0
    %563 = vmatprep.subr.mxu0 0.0
    %564 = vmatpush1.msra.mxu0 0.0
    %565 = vmatprep.subr.mxu0 0.0
    %566 = vmatpush1.msra.mxu0 0.0
    %567 = vmatprep.subr.mxu0 0.0
    %568 = vmatpush1.msra.mxu0 0.0
    %569 = vmatprep.subr.mxu0 0.0
    %570 = vmatpush1.msra.mxu0 0.0
    %571 = vmatprep.subr.mxu0 0.0
    %572 = vmatpush1.msra.mxu0 0.0
    %573 = vmatprep.subr.mxu0 0.0
    %574 = vmatpush1.msra.mxu0 0.0
    %575 = vmatprep.subr.mxu0 0.0
    %576 = vmatpush1.msra.mxu0 0.0
    %577 = vmatprep.subr.mxu0 0.0
    %578 = vmatpush1.msra.mxu0 0.0
    %579 = vmatprep.subr.mxu0 0.0
    %580 = vmatpush1.msra.mxu0 0.0
    %581 = vmatprep.subr.mxu0 0.0
    %582 = vmatpush1.msra.mxu0 0.0
    %583 = vmatprep.subr.mxu0 0.0
    %584 = vmatpush1.msra.mxu0 %v30
    %585 = vmatprep.subr.mxu0 0.0
    %586 = vmatpush1.msra.mxu0 %v29
    %587 = vmatprep.subr.mxu0 0.0
    %588 = vmatpush1.msra.mxu0 %v28
    %589 = vmatprep.subr.mxu0 0.0
    %590 = vmatpush1.msra.mxu0 %v27
    %591 = vmatprep.subr.mxu0 0.0
    %592 = vmatpush2.msra.mxu0 0.0
    %593 = vmatprep.subr.mxu0 0.0
    %594 = vmatpush2.msra.mxu0 0.0
    %595 = vmatprep.subr.mxu0 0.0
    %596 = vmatpush2.msra.mxu0 0.0
    %597 = vmatprep.subr.mxu0 0.0
    %598 = vmatpush2.msra.mxu0 0.0
    %599 = vmatprep.subr.mxu0 0.0
    %600 = vmatpush2.msra.mxu0 0.0
    %601 = vmatprep.subr.mxu0 0.0
    %602 = vmatpush2.msra.mxu0 0.0
    %603 = vmatprep.subr.mxu0 0.0
    %604 = vmatpush2.msra.mxu0 0.0
    %605 = vmatprep.subr.mxu0 0.0
    %606 = vmatpush2.msra.mxu0 0.0
    %607 = vmatprep.subr.mxu0 0.0
    %608 = vmatpush2.msra.mxu0 0.0
    %609 = vmatprep.subr.mxu0 0.0
    %610 = vmatpush2.msra.mxu0 0.0
    %611 = vmatprep.subr.mxu0 0.0
    %612 = vmatpush2.msra.mxu0 0.0
    %613 = vmatprep.subr.mxu0 0.0
    %614 = vmatpush2.msra.mxu0 0.0
    %615 = vmatprep.subr.mxu0 0.0
    %616 = vmatpush2.msra.mxu0 0.0
    %617 = vmatprep.subr.mxu0 0.0
    %618 = vmatpush2.msra.mxu0 0.0
    %619 = vmatprep.subr.mxu0 0.0
    %620 = vmatpush2.msra.mxu0 0.0
    %621 = vmatprep.subr.mxu0 0.0
    %622 = vmatpush2.msra.mxu0 0.0
    %623 = vmatprep.mubr.f32.mxu0 0.0
    %624 = vmatmul.mubr.f32.gmra.mxu0 %v557
    %v625 = vpop.f32.mrf.mxu0
    %v626 = vadd.f32 0.0, %v625
    %v627 = vpop.f32.mrf.mxu0
    %628 = vdwg.mxu0
    %v629 = vadd.f32 %v553, %v626
    %v630 = vxor.u32 %v629, 2147483648
    %v631 = vmul.f32 %v630, 1.442695
    %v632 = vpow.pop %v631
    %v633 = vadd.f32 %v632, 1.0
    %v634 = vrcp.pop %v633
    %v635 = vmul.f32 1.0, %v634
    %v636 = vtanh.pop %v629
    %v637 = vmul.f32 %v635, %v545
    %639 = vrot.lane.b32.xlu0 %v636, 64
    %v640 = vpop.permute.xlu0 %639
    %v642 = vmul.f32 %v635, %v640
    %644 = vrot.lane.b32.xlu0 %v642, 32
    %v645 = vpop.permute.xlu0 %644
    %v647 = vadd.f32 %v637, %v645
    %v648 = vtanh.pop %v647
    %650 = vrot.lane.b32.xlu0 %v648, 64
    %v651 = vpop.permute.xlu0 %650
    %v653 = vmul.f32 %v635, %v651
    %s654 = scalar_lea.vmem %s1, 12
    %v655 = vld [vmem:[%s654] sm:$0x3]
    %657 = vrot.lane.b32.xlu0 %v653, 32
    %v658 = vpop.permute.xlu0 %657
    %v659 = vsel %vm45, %v658, 0
    %661 = vmatprep.subr.mxu0 0.0
    %662 = vmatpush1.msra.mxu0 0.0
    %663 = vmatprep.subr.mxu0 0.0
    %664 = vmatpush1.msra.mxu0 0.0
    %665 = vmatprep.subr.mxu0 0.0
    %666 = vmatpush1.msra.mxu0 0.0
    %667 = vmatprep.subr.mxu0 0.0
    %668 = vmatpush1.msra.mxu0 0.0
    %669 = vmatprep.subr.mxu0 0.0
    %670 = vmatpush1.msra.mxu0 0.0
    %671 = vmatprep.subr.mxu0 0.0
    %672 = vmatpush1.msra.mxu0 0.0
    %673 = vmatprep.subr.mxu0 0.0
    %674 = vmatpush1.msra.mxu0 0.0
    %675 = vmatprep.subr.mxu0 0.0
    %676 = vmatpush1.msra.mxu0 0.0
    %677 = vmatprep.subr.mxu0 0.0
    %678 = vmatpush1.msra.mxu0 0.0
    %679 = vmatprep.subr.mxu0 0.0
    %680 = vmatpush1.msra.mxu0 0.0
    %681 = vmatprep.subr.mxu0 0.0
    %682 = vmatpush1.msra.mxu0 0.0
    %683 = vmatprep.subr.mxu0 0.0
    %684 = vmatpush1.msra.mxu0 0.0
    %685 = vmatprep.subr.mxu0 0.0
    %686 = vmatpush1.msra.mxu0 %v30
    %687 = vmatprep.subr.mxu0 0.0
    %688 = vmatpush1.msra.mxu0 %v29
    %689 = vmatprep.subr.mxu0 0.0
    %690 = vmatpush1.msra.mxu0 %v28
    %691 = vmatprep.subr.mxu0 0.0
    %692 = vmatpush1.msra.mxu0 %v27
    %693 = vmatprep.subr.mxu0 0.0
    %694 = vmatpush2.msra.mxu0 0.0
    %695 = vmatprep.subr.mxu0 0.0
    %696 = vmatpush2.msra.mxu0 0.0
    %697 = vmatprep.subr.mxu0 0.0
    %698 = vmatpush2.msra.mxu0 0.0
    %699 = vmatprep.subr.mxu0 0.0
    %700 = vmatpush2.msra.mxu0 0.0
    %701 = vmatprep.subr.mxu0 0.0
    %702 = vmatpush2.msra.mxu0 0.0
    %703 = vmatprep.subr.mxu0 0.0
    %704 = vmatpush2.msra.mxu0 0.0
    %705 = vmatprep.subr.mxu0 0.0
    %706 = vmatpush2.msra.mxu0 0.0
    %707 = vmatprep.subr.mxu0 0.0
    %708 = vmatpush2.msra.mxu0 0.0
    %709 = vmatprep.subr.mxu0 0.0
    %710 = vmatpush2.msra.mxu0 0.0
    %711 = vmatprep.subr.mxu0 0.0
    %712 = vmatpush2.msra.mxu0 0.0
    %713 = vmatprep.subr.mxu0 0.0
    %714 = vmatpush2.msra.mxu0 0.0
    %715 = vmatprep.subr.mxu0 0.0
    %716 = vmatpush2.msra.mxu0 0.0
    %717 = vmatprep.subr.mxu0 0.0
    %718 = vmatpush2.msra.mxu0 0.0
    %719 = vmatprep.subr.mxu0 0.0
    %720 = vmatpush2.msra.mxu0 0.0
    %721 = vmatprep.subr.mxu0 0.0
    %722 = vmatpush2.msra.mxu0 0.0
    %723 = vmatprep.subr.mxu0 0.0
    %724 = vmatpush2.msra.mxu0 0.0
    %725 = vmatprep.mubr.f32.mxu0 0.0
    %726 = vmatmul.mubr.f32.gmra.mxu0 %v659
    %v727 = vpop.f32.mrf.mxu0
    %v728 = vadd.f32 0.0, %v727
    %v729 = vpop.f32.mrf.mxu0
    %730 = vdwg.mxu0
    %v731 = vadd.f32 %v655, %v728
    %v732 = vxor.u32 %v731, 2147483648
    %v733 = vmul.f32 %v732, 1.442695
    %v734 = vpow.pop %v733
    %v735 = vadd.f32 %v734, 1.0
    %v736 = vrcp.pop %v735
    %v737 = vmul.f32 1.0, %v736
    %v738 = vtanh.pop %v731
    %v739 = vmul.f32 %v737, %v647
    %741 = vrot.lane.b32.xlu0 %v738, 64
    %v742 = vpop.permute.xlu0 %741
    %v744 = vmul.f32 %v737, %v742
    %746 = vrot.lane.b32.xlu0 %v744, 32
    %v747 = vpop.permute.xlu0 %746
    %v749 = vadd.f32 %v739, %v747
    %v750 = vtanh.pop %v749
    %752 = vrot.lane.b32.xlu0 %v750, 64
    %v753 = vpop.permute.xlu0 %752
    %v755 = vmul.f32 %v737, %v753
    %s756 = scalar_lea.vmem %s1, 14
    %v757 = vld [vmem:[%s756] sm:$0x3]
    %759 = vrot.lane.b32.xlu0 %v755, 32
    %v760 = vpop.permute.xlu0 %759
    %v761 = vsel %vm45, %v760, 0
    %763 = vmatprep.subr.mxu0 0.0
    %764 = vmatpush1.msra.mxu0 0.0
    %765 = vmatprep.subr.mxu0 0.0
    %766 = vmatpush1.msra.mxu0 0.0
    %767 = vmatprep.subr.mxu0 0.0
    %768 = vmatpush1.msra.mxu0 0.0
    %769 = vmatprep.subr.mxu0 0.0
    %770 = vmatpush1.msra.mxu0 0.0
    %771 = vmatprep.subr.mxu0 0.0
    %772 = vmatpush1.msra.mxu0 0.0
    %773 = vmatprep.subr.mxu0 0.0
    %774 = vmatpush1.msra.mxu0 0.0
    %775 = vmatprep.subr.mxu0 0.0
    %776 = vmatpush1.msra.mxu0 0.0
    %777 = vmatprep.subr.mxu0 0.0
    %778 = vmatpush1.msra.mxu0 0.0
    %779 = vmatprep.subr.mxu0 0.0
    %780 = vmatpush1.msra.mxu0 0.0
    %781 = vmatprep.subr.mxu0 0.0
    %782 = vmatpush1.msra.mxu0 0.0
    %783 = vmatprep.subr.mxu0 0.0
    %784 = vmatpush1.msra.mxu0 0.0
    %785 = vmatprep.subr.mxu0 0.0
    %786 = vmatpush1.msra.mxu0 0.0
    %787 = vmatprep.subr.mxu0 0.0
    %788 = vmatpush1.msra.mxu0 %v30
    %789 = vmatprep.subr.mxu0 0.0
    %790 = vmatpush1.msra.mxu0 %v29
    %791 = vmatprep.subr.mxu0 0.0
    %792 = vmatpush1.msra.mxu0 %v28
    %793 = vmatprep.subr.mxu0 0.0
    %794 = vmatpush1.msra.mxu0 %v27
    %795 = vmatprep.subr.mxu0 0.0
    %796 = vmatpush2.msra.mxu0 0.0
    %797 = vmatprep.subr.mxu0 0.0
    %798 = vmatpush2.msra.mxu0 0.0
    %799 = vmatprep.subr.mxu0 0.0
    %800 = vmatpush2.msra.mxu0 0.0
    %801 = vmatprep.subr.mxu0 0.0
    %802 = vmatpush2.msra.mxu0 0.0
    %803 = vmatprep.subr.mxu0 0.0
    %804 = vmatpush2.msra.mxu0 0.0
    %805 = vmatprep.subr.mxu0 0.0
    %806 = vmatpush2.msra.mxu0 0.0
    %807 = vmatprep.subr.mxu0 0.0
    %808 = vmatpush2.msra.mxu0 0.0
    %809 = vmatprep.subr.mxu0 0.0
    %810 = vmatpush2.msra.mxu0 0.0
    %811 = vmatprep.subr.mxu0 0.0
    %812 = vmatpush2.msra.mxu0 0.0
    %813 = vmatprep.subr.mxu0 0.0
    %814 = vmatpush2.msra.mxu0 0.0
    %815 = vmatprep.subr.mxu0 0.0
    %816 = vmatpush2.msra.mxu0 0.0
    %817 = vmatprep.subr.mxu0 0.0
    %818 = vmatpush2.msra.mxu0 0.0
    %819 = vmatprep.subr.mxu0 0.0
    %820 = vmatpush2.msra.mxu0 0.0
    %821 = vmatprep.subr.mxu0 0.0
    %822 = vmatpush2.msra.mxu0 0.0
    %823 = vmatprep.subr.mxu0 0.0
    %824 = vmatpush2.msra.mxu0 0.0
    %825 = vmatprep.subr.mxu0 0.0
    %826 = vmatpush2.msra.mxu0 0.0
    %827 = vmatprep.mubr.f32.mxu0 0.0
    %828 = vmatmul.mubr.f32.gmra.mxu0 %v761
    %v829 = vpop.f32.mrf.mxu0
    %v830 = vadd.f32 0.0, %v829
    %v831 = vpop.f32.mrf.mxu0
    %832 = vdwg.mxu0
    %v833 = vadd.f32 %v757, %v830
    %v834 = vxor.u32 %v833, 2147483648
    %v835 = vmul.f32 %v834, 1.442695
    %v836 = vpow.pop %v835
    %v837 = vadd.f32 %v836, 1.0
    %v838 = vrcp.pop %v837
    %v839 = vmul.f32 1.0, %v838
    %v840 = vtanh.pop %v833
    %v841 = vmul.f32 %v839, %v749
    %843 = vrot.lane.b32.xlu0 %v840, 64
    %v844 = vpop.permute.xlu0 %843
    %v846 = vmul.f32 %v839, %v844
    %848 = vrot.lane.b32.xlu0 %v846, 32
    %v849 = vpop.permute.xlu0 %848
    %v851 = vadd.f32 %v841, %v849
    %v852 = vtanh.pop %v851
    %854 = vrot.lane.b32.xlu0 %v852, 64
    %v855 = vpop.permute.xlu0 %854
    %v857 = vmul.f32 %v839, %v855
    %s858 = scalar_lea.vmem %s1, 16
    %v859 = vld [vmem:[%s858] sm:$0x3]
    %861 = vrot.lane.b32.xlu0 %v857, 32
    %v862 = vpop.permute.xlu0 %861
    %v863 = vsel %vm45, %v862, 0
    %865 = vmatprep.subr.mxu0 0.0
    %866 = vmatpush1.msra.mxu0 0.0
    %867 = vmatprep.subr.mxu0 0.0
    %868 = vmatpush1.msra.mxu0 0.0
    %869 = vmatprep.subr.mxu0 0.0
    %870 = vmatpush1.msra.mxu0 0.0
    %871 = vmatprep.subr.mxu0 0.0
    %872 = vmatpush1.msra.mxu0 0.0
    %873 = vmatprep.subr.mxu0 0.0
    %874 = vmatpush1.msra.mxu0 0.0
    %875 = vmatprep.subr.mxu0 0.0
    %876 = vmatpush1.msra.mxu0 0.0
    %877 = vmatprep.subr.mxu0 0.0
    %878 = vmatpush1.msra.mxu0 0.0
    %879 = vmatprep.subr.mxu0 0.0
    %880 = vmatpush1.msra.mxu0 0.0
    %881 = vmatprep.subr.mxu0 0.0
    %882 = vmatpush1.msra.mxu0 0.0
    %883 = vmatprep.subr.mxu0 0.0
    %884 = vmatpush1.msra.mxu0 0.0
    %885 = vmatprep.subr.mxu0 0.0
    %886 = vmatpush1.msra.mxu0 0.0
    %887 = vmatprep.subr.mxu0 0.0
    %888 = vmatpush1.msra.mxu0 0.0
    %889 = vmatprep.subr.mxu0 0.0
    %890 = vmatpush1.msra.mxu0 %v34
    %891 = vmatprep.subr.mxu0 0.0
    %892 = vmatpush1.msra.mxu0 %v33
    %893 = vmatprep.subr.mxu0 0.0
    %894 = vmatpush1.msra.mxu0 %v32
    %895 = vmatprep.subr.mxu0 0.0
    %896 = vmatpush1.msra.mxu0 %v31
    %897 = vmatprep.subr.mxu0 0.0
    %898 = vmatpush2.msra.mxu0 0.0
    %899 = vmatprep.subr.mxu0 0.0
    %900 = vmatpush2.msra.mxu0 0.0
    %901 = vmatprep.subr.mxu0 0.0
    %902 = vmatpush2.msra.mxu0 0.0
    %903 = vmatprep.subr.mxu0 0.0
    %904 = vmatpush2.msra.mxu0 0.0
    %905 = vmatprep.subr.mxu0 0.0
    %906 = vmatpush2.msra.mxu0 0.0
    %907 = vmatprep.subr.mxu0 0.0
    %908 = vmatpush2.msra.mxu0 0.0
    %909 = vmatprep.subr.mxu0 0.0
    %910 = vmatpush2.msra.mxu0 0.0
    %911 = vmatprep.subr.mxu0 0.0
    %912 = vmatpush2.msra.mxu0 0.0
    %913 = vmatprep.subr.mxu0 0.0
    %914 = vmatpush2.msra.mxu0 0.0
    %915 = vmatprep.subr.mxu0 0.0
    %916 = vmatpush2.msra.mxu0 0.0
    %917 = vmatprep.subr.mxu0 0.0
    %918 = vmatpush2.msra.mxu0 0.0
    %919 = vmatprep.subr.mxu0 0.0
    %920 = vmatpush2.msra.mxu0 0.0
    %921 = vmatprep.subr.mxu0 0.0
    %922 = vmatpush2.msra.mxu0 0.0
    %923 = vmatprep.subr.mxu0 0.0
    %924 = vmatpush2.msra.mxu0 0.0
    %925 = vmatprep.subr.mxu0 0.0
    %926 = vmatpush2.msra.mxu0 0.0
    %927 = vmatprep.subr.mxu0 0.0
    %928 = vmatpush2.msra.mxu0 0.0
    %929 = vmatprep.mubr.f32.mxu0 0.0
    %930 = vmatmul.mubr.f32.gmra.mxu0 %v863
    %v931 = vpop.f32.mrf.mxu0
    %v932 = vadd.f32 0.0, %v931
    %v933 = vpop.f32.mrf.mxu0
    %934 = vdwg.mxu0
    %v935 = vadd.f32 %v859, %v932
    %v936 = vxor.u32 %v935, 2147483648
    %v937 = vmul.f32 %v936, 1.442695
    %v938 = vpow.pop %v937
    %v939 = vadd.f32 %v938, 1.0
    %v940 = vrcp.pop %v939
    %v941 = vmul.f32 1.0, %v940
    %v942 = vtanh.pop %v935
    %v943 = vmul.f32 %v941, %v851
    %945 = vrot.lane.b32.xlu0 %v942, 64
    %v946 = vpop.permute.xlu0 %945
    %v948 = vmul.f32 %v941, %v946
    %950 = vrot.lane.b32.xlu0 %v948, 32
    %v951 = vpop.permute.xlu0 %950
    %v953 = vadd.f32 %v943, %v951
    %v954 = vtanh.pop %v953
    %956 = vrot.lane.b32.xlu0 %v954, 64
    %v957 = vpop.permute.xlu0 %956
    %v959 = vmul.f32 %v941, %v957
    %v960 = vlaneseq
    %v961 = vshrl.u32 %v960, 7
    %v962 = vsub.s32 0, %v961
    %v963 = vrot.slane %v41, %v962
    %965 = vrot.lane.b32.xlu0 %v959, 32
    %v966 = vpop.permute.xlu0 %965
    %v967 = vsel %vm45, %v966, 0
    %969 = vmatprep.subr.mxu0 0.0
    %970 = vmatpush1.msra.mxu0 0.0
    %971 = vmatprep.subr.mxu0 0.0
    %972 = vmatpush1.msra.mxu0 0.0
    %973 = vmatprep.subr.mxu0 0.0
    %974 = vmatpush1.msra.mxu0 0.0
    %975 = vmatprep.subr.mxu0 0.0
    %976 = vmatpush1.msra.mxu0 0.0
    %977 = vmatprep.subr.mxu0 0.0
    %978 = vmatpush1.msra.mxu0 0.0
    %979 = vmatprep.subr.mxu0 0.0
    %980 = vmatpush1.msra.mxu0 0.0
    %981 = vmatprep.subr.mxu0 0.0
    %982 = vmatpush1.msra.mxu0 0.0
    %983 = vmatprep.subr.mxu0 0.0
    %984 = vmatpush1.msra.mxu0 0.0
    %985 = vmatprep.subr.mxu0 0.0
    %986 = vmatpush1.msra.mxu0 0.0
    %987 = vmatprep.subr.mxu0 0.0
    %988 = vmatpush1.msra.mxu0 0.0
    %989 = vmatprep.subr.mxu0 0.0
    %990 = vmatpush1.msra.mxu0 0.0
    %991 = vmatprep.subr.mxu0 0.0
    %992 = vmatpush1.msra.mxu0 0.0
    %993 = vmatprep.subr.mxu0 0.0
    %994 = vmatpush1.msra.mxu0 %v40
    %995 = vmatprep.subr.mxu0 0.0
    %996 = vmatpush1.msra.mxu0 %v39
    %997 = vmatprep.subr.mxu0 0.0
    %998 = vmatpush1.msra.mxu0 %v38
    %999 = vmatprep.subr.mxu0 0.0
    %1000 = vmatpush1.msra.mxu0 %v37
    %1001 = vmatprep.subr.mxu0 0.0
    %1002 = vmatpush2.msra.mxu0 0.0
    %1003 = vmatprep.subr.mxu0 0.0
    %1004 = vmatpush2.msra.mxu0 0.0
    %1005 = vmatprep.subr.mxu0 0.0
    %1006 = vmatpush2.msra.mxu0 0.0
    %1007 = vmatprep.subr.mxu0 0.0
    %1008 = vmatpush2.msra.mxu0 0.0
    %1009 = vmatprep.subr.mxu0 0.0
    %1010 = vmatpush2.msra.mxu0 0.0
    %1011 = vmatprep.subr.mxu0 0.0
    %1012 = vmatpush2.msra.mxu0 0.0
    %1013 = vmatprep.subr.mxu0 0.0
    %1014 = vmatpush2.msra.mxu0 0.0
    %1015 = vmatprep.subr.mxu0 0.0
    %1016 = vmatpush2.msra.mxu0 0.0
    %1017 = vmatprep.subr.mxu0 0.0
    %1018 = vmatpush2.msra.mxu0 0.0
    %1019 = vmatprep.subr.mxu0 0.0
    %1020 = vmatpush2.msra.mxu0 0.0
    %1021 = vmatprep.subr.mxu0 0.0
    %1022 = vmatpush2.msra.mxu0 0.0
    %1023 = vmatprep.subr.mxu0 0.0
    %1024 = vmatpush2.msra.mxu0 0.0
    %1025 = vmatprep.subr.mxu0 0.0
    %1026 = vmatpush2.msra.mxu0 0.0
    %1027 = vmatprep.subr.mxu0 0.0
    %1028 = vmatpush2.msra.mxu0 0.0
    %1029 = vmatprep.subr.mxu0 0.0
    %1030 = vmatpush2.msra.mxu0 0.0
    %1031 = vmatprep.subr.mxu0 0.0
    %1032 = vmatpush2.msra.mxu0 0.0
    %1033 = vmatprep.mubr.f32.mxu0 0.0
    %1034 = vmatmul.mubr.f32.gmra.mxu0 %v967
    %v1035 = vpop.f32.mrf.mxu0
    %v1036 = vadd.f32 %v963, %v1035
    %v1037 = vpop.f32.mrf.mxu0
    %1038 = vdwg.mxu0
    %vm1039 = vcmp.ge.s32.totalorder %v43, 16
    %vm1040 = vcmp.lt.s32.totalorder %v43, 32
    %vm1041 = vmand %vm1039, %vm1040
    %v1042 = vsel %vm1041, %v1036, 0.0
    %vm1043 = vcmask 123904
    %v1044 = vsel %vm1043, %v1036, -inf
    %1045 = vmax.xlane.f32.xlu0 %v1044
    %v1046 = vpop.xlane.xlu0 %1045
    %vm1047 = vcmp.eq.f32.partialorder %v1036, %v1046
    %v1048 = vsel %vm1047, %v43, 16
    %v1049 = vsel %vm1043, %v1048, 2147483647
    %v1050 = vand.u32 %v1049, 65535
    %v1051 = vshra.s32 %v1049, 16
    %v1052 = vcvt.s32.f32 %v1050
    %v1053 = vcvt.s32.f32 %v1051
    %1054 = vmin.xlane.f32.xlu0 %v1053
    %v1055 = vpop.xlane.xlu0 %1054
    %vm1056 = vcmp.eq.f32.partialorder %v1053, %v1055
    %v1057 = vsel %vm1056, %v1052, inf
    %1058 = vmin.xlane.f32.xlu0 %v1057
    %v1059 = vpop.xlane.xlu0 %1058
    %v1060 = vcvt.f32.s32 %v1059
    %v1061 = vcvt.f32.s32 %v1055
    %v1062 = vshll.u32 %v1061, 16
    %v1063 = vadd.s32 %v1062, %v1060
    %vm1064 = vcmp.eq.s32.totalorder %v43, %v1063
    %v1065 = vsel %vm1064, 1, 0
    %v1066 = vcvt.s32.f32 %v1065
    %vm1067 = vcmask 130048
    %v1069 = vsel %vm1067, %v1066, 0
    %1071 = vmatprep.subr.mxu0 0.0
    %1072 = vmatpush1.msra.mxu0 0.0
    %1073 = vmatprep.subr.mxu0 0.0
    %1074 = vmatpush1.msra.mxu0 0.0
    %1075 = vmatprep.subr.mxu0 0.0
    %1076 = vmatpush1.msra.mxu0 0.0
    %1077 = vmatprep.subr.mxu0 0.0
    %1078 = vmatpush1.msra.mxu0 0.0
    %1079 = vmatprep.subr.mxu0 0.0
    %1080 = vmatpush1.msra.mxu0 0.0
    %1081 = vmatprep.subr.mxu0 0.0
    %1082 = vmatpush1.msra.mxu0 0.0
    %1083 = vmatprep.subr.mxu0 0.0
    %1084 = vmatpush1.msra.mxu0 0.0
    %1085 = vmatprep.subr.mxu0 0.0
    %1086 = vmatpush1.msra.mxu0 0.0
    %1087 = vmatprep.subr.mxu0 0.0
    %1088 = vmatpush1.msra.mxu0 0.0
    %1089 = vmatprep.subr.mxu0 0.0
    %1090 = vmatpush1.msra.mxu0 0.0
    %1091 = vmatprep.subr.mxu0 0.0
    %1092 = vmatpush1.msra.mxu0 0.0
    %1093 = vmatprep.subr.mxu0 0.0
    %1094 = vmatpush1.msra.mxu0 0.0
    %1095 = vmatprep.subr.mxu0 0.0
    %1096 = vmatpush1.msra.mxu0 0.0
    %1097 = vmatprep.subr.mxu0 0.0
    %1098 = vmatpush1.msra.mxu0 0.0
    %1099 = vmatprep.subr.mxu0 0.0
    %1100 = vmatpush1.msra.mxu0 %v36
    %1101 = vmatprep.subr.mxu0 0.0
    %1102 = vmatpush1.msra.mxu0 %v35
    %1103 = vmatprep.subr.mxu0 0.0
    %1104 = vmatpush2.msra.mxu0 0.0
    %1105 = vmatprep.subr.mxu0 0.0
    %1106 = vmatpush2.msra.mxu0 0.0
    %1107 = vmatprep.subr.mxu0 0.0
    %1108 = vmatpush2.msra.mxu0 0.0
    %1109 = vmatprep.subr.mxu0 0.0
    %1110 = vmatpush2.msra.mxu0 0.0
    %1111 = vmatprep.subr.mxu0 0.0
    %1112 = vmatpush2.msra.mxu0 0.0
    %1113 = vmatprep.subr.mxu0 0.0
    %1114 = vmatpush2.msra.mxu0 0.0
    %1115 = vmatprep.subr.mxu0 0.0
    %1116 = vmatpush2.msra.mxu0 0.0
    %1117 = vmatprep.subr.mxu0 0.0
    %1118 = vmatpush2.msra.mxu0 0.0
    %1119 = vmatprep.subr.mxu0 0.0
    %1120 = vmatpush2.msra.mxu0 0.0
    %1121 = vmatprep.subr.mxu0 0.0
    %1122 = vmatpush2.msra.mxu0 0.0
    %1123 = vmatprep.subr.mxu0 0.0
    %1124 = vmatpush2.msra.mxu0 0.0
    %1125 = vmatprep.subr.mxu0 0.0
    %1126 = vmatpush2.msra.mxu0 0.0
    %1127 = vmatprep.subr.mxu0 0.0
    %1128 = vmatpush2.msra.mxu0 0.0
    %1129 = vmatprep.subr.mxu0 0.0
    %1130 = vmatpush2.msra.mxu0 0.0
    %1131 = vmatprep.subr.mxu0 0.0
    %1132 = vmatpush2.msra.mxu0 0.0
    %1133 = vmatprep.subr.mxu0 0.0
    %1134 = vmatpush2.msra.mxu0 0.0
    %1135 = vmatprep.mubr.f32.mxu0 0.0
    %1136 = vmatmul.mubr.f32.gmra.mxu0 %v1069
    %v1137 = vpop.f32.mrf.mxu0
    %v1138 = vadd.f32 0.0, %v1137
    %v1139 = vpop.f32.mrf.mxu0
    %1140 = vdwg.mxu0
    %s1141 = sld [smem:[#allocation2 + $0x1]]
    %p1142 = scmp.gt.s32.totalorder %s1141, 0
    %s1143 = scalar_lea.vmem %s1, 18
    %v1144 = vld [vmem:[%s1143] sm:$0x3]
    %s1145 = scalar_select %p1142, 1, 0
    %v1146 = vstv %s1145
    %vm1147 = vcmp.eq.s32.totalorder %v1146, 1
    %v1148 = vsel %vm1147, %v1144, %v1138
    %1149 = vmatprep.subr.mxu0 0.0
    %1150 = vmatpush1.msra.mxu0 0.0
    %1151 = vmatprep.subr.mxu0 0.0
    %1152 = vmatpush1.msra.mxu0 0.0
    %1153 = vmatprep.subr.mxu0 0.0
    %1154 = vmatpush1.msra.mxu0 0.0
    %1155 = vmatprep.subr.mxu0 0.0
    %1156 = vmatpush1.msra.mxu0 0.0
    %1157 = vmatprep.subr.mxu0 0.0
    %1158 = vmatpush1.msra.mxu0 0.0
    %1159 = vmatprep.subr.mxu0 0.0
    %1160 = vmatpush1.msra.mxu0 0.0
    %1161 = vmatprep.subr.mxu0 0.0
    %1162 = vmatpush1.msra.mxu0 0.0
    %1163 = vmatprep.subr.mxu0 0.0
    %1164 = vmatpush1.msra.mxu0 0.0
    %1165 = vmatprep.subr.mxu0 0.0
    %1166 = vmatpush1.msra.mxu0 0.0
    %1167 = vmatprep.subr.mxu0 0.0
    %1168 = vmatpush1.msra.mxu0 0.0
    %1169 = vmatprep.subr.mxu0 0.0
    %1170 = vmatpush1.msra.mxu0 0.0
    %1171 = vmatprep.subr.mxu0 0.0
    %1172 = vmatpush1.msra.mxu0 0.0
    %1173 = vmatprep.subr.mxu0 0.0
    %1174 = vmatpush1.msra.mxu0 %v34
    %1175 = vmatprep.subr.mxu0 0.0
    %1176 = vmatpush1.msra.mxu0 %v33
    %1177 = vmatprep.subr.mxu0 0.0
    %1178 = vmatpush1.msra.mxu0 %v32
    %1179 = vmatprep.subr.mxu0 0.0
    %1180 = vmatpush1.msra.mxu0 %v31
    %1181 = vmatprep.subr.mxu0 0.0
    %1182 = vmatpush2.msra.mxu0 0.0
    %1183 = vmatprep.subr.mxu0 0.0
    %1184 = vmatpush2.msra.mxu0 0.0
    %1185 = vmatprep.subr.mxu0 0.0
    %1186 = vmatpush2.msra.mxu0 0.0
    %1187 = vmatprep.subr.mxu0 0.0
    %1188 = vmatpush2.msra.mxu0 0.0
    %1189 = vmatprep.subr.mxu0 0.0
    %1190 = vmatpush2.msra.mxu0 0.0
    %1191 = vmatprep.subr.mxu0 0.0
    %1192 = vmatpush2.msra.mxu0 0.0
    %1193 = vmatprep.subr.mxu0 0.0
    %1194 = vmatpush2.msra.mxu0 0.0
    %1195 = vmatprep.subr.mxu0 0.0
    %1196 = vmatpush2.msra.mxu0 0.0
    %1197 = vmatprep.subr.mxu0 0.0
    %1198 = vmatpush2.msra.mxu0 0.0
    %1199 = vmatprep.subr.mxu0 0.0
    %1200 = vmatpush2.msra.mxu0 0.0
    %1201 = vmatprep.subr.mxu0 0.0
    %1202 = vmatpush2.msra.mxu0 0.0
    %1203 = vmatprep.subr.mxu0 0.0
    %1204 = vmatpush2.msra.mxu0 0.0
    %1205 = vmatprep.subr.mxu0 0.0
    %1206 = vmatpush2.msra.mxu0 0.0
    %1207 = vmatprep.subr.mxu0 0.0
    %1208 = vmatpush2.msra.mxu0 0.0
    %1209 = vmatprep.subr.mxu0 0.0
    %1210 = vmatpush2.msra.mxu0 0.0
    %1211 = vmatprep.subr.mxu0 0.0
    %1212 = vmatpush2.msra.mxu0 0.0
    %1213 = vmatprep.mubr.f32.mxu0 0.0
    %1214 = vmatmul.mubr.f32.gmra.mxu0 %v967
    %v1215 = vpop.f32.mrf.mxu0
    %v1216 = vadd.f32 0.0, %v1215
    %v1217 = vpop.f32.mrf.mxu0
    %1218 = vdwg.mxu0
    %v1219 = vadd.f32 %v1148, %v1216
    %v1220 = vxor.u32 %v1219, 2147483648
    %v1221 = vmul.f32 %v1220, 1.442695
    %v1222 = vpow.pop %v1221
    %v1223 = vadd.f32 %v1222, 1.0
    %v1224 = vrcp.pop %v1223
    %v1225 = vmul.f32 1.0, %v1224
    %v1226 = vtanh.pop %v1219
    %v1227 = vmul.f32 %v1225, %v953
    %1229 = vrot.lane.b32.xlu0 %v1226, 64
    %v1230 = vpop.permute.xlu0 %1229
    %v1232 = vmul.f32 %v1225, %v1230
    %1234 = vrot.lane.b32.xlu0 %v1232, 32
    %v1235 = vpop.permute.xlu0 %1234
    %v1237 = vadd.f32 %v1227, %v1235
    %v1238 = vtanh.pop %v1237
    %1240 = vrot.lane.b32.xlu0 %v1238, 64
    %v1241 = vpop.permute.xlu0 %1240
    %v1243 = vmul.f32 %v1225, %v1241
    %1245 = vrot.lane.b32.xlu0 %v1243, 32
    %v1246 = vpop.permute.xlu0 %1245
    %v1247 = vsel %vm45, %v1246, 0
    %1249 = vmatprep.subr.mxu0 0.0
    %1250 = vmatpush1.msra.mxu0 0.0
    %1251 = vmatprep.subr.mxu0 0.0
    %1252 = vmatpush1.msra.mxu0 0.0
    %1253 = vmatprep.subr.mxu0 0.0
    %1254 = vmatpush1.msra.mxu0 0.0
    %1255 = vmatprep.subr.mxu0 0.0
    %1256 = vmatpush1.msra.mxu0 0.0
    %1257 = vmatprep.subr.mxu0 0.0
    %1258 = vmatpush1.msra.mxu0 0.0
    %1259 = vmatprep.subr.mxu0 0.0
    %1260 = vmatpush1.msra.mxu0 0.0
    %1261 = vmatprep.subr.mxu0 0.0
    %1262 = vmatpush1.msra.mxu0 0.0
    %1263 = vmatprep.subr.mxu0 0.0
    %1264 = vmatpush1.msra.mxu0 0.0
    %1265 = vmatprep.subr.mxu0 0.0
    %1266 = vmatpush1.msra.mxu0 0.0
    %1267 = vmatprep.subr.mxu0 0.0
    %1268 = vmatpush1.msra.mxu0 0.0
    %1269 = vmatprep.subr.mxu0 0.0
    %1270 = vmatpush1.msra.mxu0 0.0
    %1271 = vmatprep.subr.mxu0 0.0
    %1272 = vmatpush1.msra.mxu0 0.0
    %1273 = vmatprep.subr.mxu0 0.0
    %1274 = vmatpush1.msra.mxu0 %v40
    %1275 = vmatprep.subr.mxu0 0.0
    %1276 = vmatpush1.msra.mxu0 %v39
    %1277 = vmatprep.subr.mxu0 0.0
    %1278 = vmatpush1.msra.mxu0 %v38
    %1279 = vmatprep.subr.mxu0 0.0
    %1280 = vmatpush1.msra.mxu0 %v37
    %1281 = vmatprep.subr.mxu0 0.0
    %1282 = vmatpush2.msra.mxu0 0.0
    %1283 = vmatprep.subr.mxu0 0.0
    %1284 = vmatpush2.msra.mxu0 0.0
    %1285 = vmatprep.subr.mxu0 0.0
    %1286 = vmatpush2.msra.mxu0 0.0
    %1287 = vmatprep.subr.mxu0 0.0
    %1288 = vmatpush2.msra.mxu0 0.0
    %1289 = vmatprep.subr.mxu0 0.0
    %1290 = vmatpush2.msra.mxu0 0.0
    %1291 = vmatprep.subr.mxu0 0.0
    %1292 = vmatpush2.msra.mxu0 0.0
    %1293 = vmatprep.subr.mxu0 0.0
    %1294 = vmatpush2.msra.mxu0 0.0
    %1295 = vmatprep.subr.mxu0 0.0
    %1296 = vmatpush2.msra.mxu0 0.0
    %1297 = vmatprep.subr.mxu0 0.0
    %1298 = vmatpush2.msra.mxu0 0.0
    %1299 = vmatprep.subr.mxu0 0.0
    %1300 = vmatpush2.msra.mxu0 0.0
    %1301 = vmatprep.subr.mxu0 0.0
    %1302 = vmatpush2.msra.mxu0 0.0
    %1303 = vmatprep.subr.mxu0 0.0
    %1304 = vmatpush2.msra.mxu0 0.0
    %1305 = vmatprep.subr.mxu0 0.0
    %1306 = vmatpush2.msra.mxu0 0.0
    %1307 = vmatprep.subr.mxu0 0.0
    %1308 = vmatpush2.msra.mxu0 0.0
    %1309 = vmatprep.subr.mxu0 0.0
    %1310 = vmatpush2.msra.mxu0 0.0
    %1311 = vmatprep.subr.mxu0 0.0
    %1312 = vmatpush2.msra.mxu0 0.0
    %1313 = vmatprep.mubr.f32.mxu0 0.0
    %1314 = vmatmul.mubr.f32.gmra.mxu0 %v1247
    %v1315 = vpop.f32.mrf.mxu0
    %v1316 = vadd.f32 %v963, %v1315
    %v1317 = vpop.f32.mrf.mxu0
    %1318 = vdwg.mxu0
    %vm1319 = vcmp.ge.s32.totalorder %v43, 32
    %vm1320 = vcmp.lt.s32.totalorder %v43, 48
    %vm1321 = vmand %vm1319, %vm1320
    %v1322 = vsel %vm1321, %v1316, %v1042
    %v1323 = vsel %vm1043, %v1316, -inf
    %1324 = vmax.xlane.f32.xlu0 %v1323
    %v1325 = vpop.xlane.xlu0 %1324
    %vm1326 = vcmp.eq.f32.partialorder %v1316, %v1325
    %v1327 = vsel %vm1326, %v43, 16
    %v1328 = vsel %vm1043, %v1327, 2147483647
    %v1329 = vand.u32 %v1328, 65535
    %v1330 = vshra.s32 %v1328, 16
    %v1331 = vcvt.s32.f32 %v1329
    %v1332 = vcvt.s32.f32 %v1330
    %1333 = vmin.xlane.f32.xlu0 %v1332
    %v1334 = vpop.xlane.xlu0 %1333
    %vm1335 = vcmp.eq.f32.partialorder %v1332, %v1334
    %v1336 = vsel %vm1335, %v1331, inf
    %1337 = vmin.xlane.f32.xlu0 %v1336
    %v1338 = vpop.xlane.xlu0 %1337
    %v1339 = vcvt.f32.s32 %v1338
    %v1340 = vcvt.f32.s32 %v1334
    %v1341 = vshll.u32 %v1340, 16
    %v1342 = vadd.s32 %v1341, %v1339
    %vm1343 = vcmp.eq.s32.totalorder %v43, %v1342
    %v1344 = vsel %vm1343, 1, 0
    %v1345 = vcvt.s32.f32 %v1344
    %v1347 = vsel %vm1067, %v1345, 0
    %1349 = vmatprep.subr.mxu0 0.0
    %1350 = vmatpush1.msra.mxu0 0.0
    %1351 = vmatprep.subr.mxu0 0.0
    %1352 = vmatpush1.msra.mxu0 0.0
    %1353 = vmatprep.subr.mxu0 0.0
    %1354 = vmatpush1.msra.mxu0 0.0
    %1355 = vmatprep.subr.mxu0 0.0
    %1356 = vmatpush1.msra.mxu0 0.0
    %1357 = vmatprep.subr.mxu0 0.0
    %1358 = vmatpush1.msra.mxu0 0.0
    %1359 = vmatprep.subr.mxu0 0.0
    %1360 = vmatpush1.msra.mxu0 0.0
    %1361 = vmatprep.subr.mxu0 0.0
    %1362 = vmatpush1.msra.mxu0 0.0
    %1363 = vmatprep.subr.mxu0 0.0
    %1364 = vmatpush1.msra.mxu0 0.0
    %1365 = vmatprep.subr.mxu0 0.0
    %1366 = vmatpush1.msra.mxu0 0.0
    %1367 = vmatprep.subr.mxu0 0.0
    %1368 = vmatpush1.msra.mxu0 0.0
    %1369 = vmatprep.subr.mxu0 0.0
    %1370 = vmatpush1.msra.mxu0 0.0
    %1371 = vmatprep.subr.mxu0 0.0
    %1372 = vmatpush1.msra.mxu0 0.0
    %1373 = vmatprep.subr.mxu0 0.0
    %1374 = vmatpush1.msra.mxu0 0.0
    %1375 = vmatprep.subr.mxu0 0.0
    %1376 = vmatpush1.msra.mxu0 0.0
    %1377 = vmatprep.subr.mxu0 0.0
    %1378 = vmatpush1.msra.mxu0 %v36
    %1379 = vmatprep.subr.mxu0 0.0
    %1380 = vmatpush1.msra.mxu0 %v35
    %1381 = vmatprep.subr.mxu0 0.0
    %1382 = vmatpush2.msra.mxu0 0.0
    %1383 = vmatprep.subr.mxu0 0.0
    %1384 = vmatpush2.msra.mxu0 0.0
    %1385 = vmatprep.subr.mxu0 0.0
    %1386 = vmatpush2.msra.mxu0 0.0
    %1387 = vmatprep.subr.mxu0 0.0
    %1388 = vmatpush2.msra.mxu0 0.0
    %1389 = vmatprep.subr.mxu0 0.0
    %1390 = vmatpush2.msra.mxu0 0.0
    %1391 = vmatprep.subr.mxu0 0.0
    %1392 = vmatpush2.msra.mxu0 0.0
    %1393 = vmatprep.subr.mxu0 0.0
    %1394 = vmatpush2.msra.mxu0 0.0
    %1395 = vmatprep.subr.mxu0 0.0
    %1396 = vmatpush2.msra.mxu0 0.0
    %1397 = vmatprep.subr.mxu0 0.0
    %1398 = vmatpush2.msra.mxu0 0.0
    %1399 = vmatprep.subr.mxu0 0.0
    %1400 = vmatpush2.msra.mxu0 0.0
    %1401 = vmatprep.subr.mxu0 0.0
    %1402 = vmatpush2.msra.mxu0 0.0
    %1403 = vmatprep.subr.mxu0 0.0
    %1404 = vmatpush2.msra.mxu0 0.0
    %1405 = vmatprep.subr.mxu0 0.0
    %1406 = vmatpush2.msra.mxu0 0.0
    %1407 = vmatprep.subr.mxu0 0.0
    %1408 = vmatpush2.msra.mxu0 0.0
    %1409 = vmatprep.subr.mxu0 0.0
    %1410 = vmatpush2.msra.mxu0 0.0
    %1411 = vmatprep.subr.mxu0 0.0
    %1412 = vmatpush2.msra.mxu0 0.0
    %1413 = vmatprep.mubr.f32.mxu0 0.0
    %1414 = vmatmul.mubr.f32.gmra.mxu0 %v1347
    %v1415 = vpop.f32.mrf.mxu0
    %v1416 = vadd.f32 0.0, %v1415
    %v1417 = vpop.f32.mrf.mxu0
    %1418 = vdwg.mxu0
    %s1419 = sld [smem:[#allocation2 + $0x2]]
    %p1420 = scmp.gt.s32.totalorder %s1419, 0
    %s1421 = scalar_lea.vmem %s1, 20
    %v1422 = vld [vmem:[%s1421] sm:$0x3]
    %s1423 = scalar_select %p1420, 1, 0
    %v1424 = vstv %s1423
    %vm1425 = vcmp.eq.s32.totalorder %v1424, 1
    %v1426 = vsel %vm1425, %v1422, %v1416
    %1427 = vmatprep.subr.mxu0 0.0
    %1428 = vmatpush1.msra.mxu0 0.0
    %1429 = vmatprep.subr.mxu0 0.0
    %1430 = vmatpush1.msra.mxu0 0.0
    %1431 = vmatprep.subr.mxu0 0.0
    %1432 = vmatpush1.msra.mxu0 0.0
    %1433 = vmatprep.subr.mxu0 0.0
    %1434 = vmatpush1.msra.mxu0 0.0
    %1435 = vmatprep.subr.mxu0 0.0
    %1436 = vmatpush1.msra.mxu0 0.0
    %1437 = vmatprep.subr.mxu0 0.0
    %1438 = vmatpush1.msra.mxu0 0.0
    %1439 = vmatprep.subr.mxu0 0.0
    %1440 = vmatpush1.msra.mxu0 0.0
    %1441 = vmatprep.subr.mxu0 0.0
    %1442 = vmatpush1.msra.mxu0 0.0
    %1443 = vmatprep.subr.mxu0 0.0
    %1444 = vmatpush1.msra.mxu0 0.0
    %1445 = vmatprep.subr.mxu0 0.0
    %1446 = vmatpush1.msra.mxu0 0.0
    %1447 = vmatprep.subr.mxu0 0.0
    %1448 = vmatpush1.msra.mxu0 0.0
    %1449 = vmatprep.subr.mxu0 0.0
    %1450 = vmatpush1.msra.mxu0 0.0
    %1451 = vmatprep.subr.mxu0 0.0
    %1452 = vmatpush1.msra.mxu0 %v34
    %1453 = vmatprep.subr.mxu0 0.0
    %1454 = vmatpush1.msra.mxu0 %v33
    %1455 = vmatprep.subr.mxu0 0.0
    %1456 = vmatpush1.msra.mxu0 %v32
    %1457 = vmatprep.subr.mxu0 0.0
    %1458 = vmatpush1.msra.mxu0 %v31
    %1459 = vmatprep.subr.mxu0 0.0
    %1460 = vmatpush2.msra.mxu0 0.0
    %1461 = vmatprep.subr.mxu0 0.0
    %1462 = vmatpush2.msra.mxu0 0.0
    %1463 = vmatprep.subr.mxu0 0.0
    %1464 = vmatpush2.msra.mxu0 0.0
    %1465 = vmatprep.subr.mxu0 0.0
    %1466 = vmatpush2.msra.mxu0 0.0
    %1467 = vmatprep.subr.mxu0 0.0
    %1468 = vmatpush2.msra.mxu0 0.0
    %1469 = vmatprep.subr.mxu0 0.0
    %1470 = vmatpush2.msra.mxu0 0.0
    %1471 = vmatprep.subr.mxu0 0.0
    %1472 = vmatpush2.msra.mxu0 0.0
    %1473 = vmatprep.subr.mxu0 0.0
    %1474 = vmatpush2.msra.mxu0 0.0
    %1475 = vmatprep.subr.mxu0 0.0
    %1476 = vmatpush2.msra.mxu0 0.0
    %1477 = vmatprep.subr.mxu0 0.0
    %1478 = vmatpush2.msra.mxu0 0.0
    %1479 = vmatprep.subr.mxu0 0.0
    %1480 = vmatpush2.msra.mxu0 0.0
    %1481 = vmatprep.subr.mxu0 0.0
    %1482 = vmatpush2.msra.mxu0 0.0
    %1483 = vmatprep.subr.mxu0 0.0
    %1484 = vmatpush2.msra.mxu0 0.0
    %1485 = vmatprep.subr.mxu0 0.0
    %1486 = vmatpush2.msra.mxu0 0.0
    %1487 = vmatprep.subr.mxu0 0.0
    %1488 = vmatpush2.msra.mxu0 0.0
    %1489 = vmatprep.subr.mxu0 0.0
    %1490 = vmatpush2.msra.mxu0 0.0
    %1491 = vmatprep.mubr.f32.mxu0 0.0
    %1492 = vmatmul.mubr.f32.gmra.mxu0 %v1247
    %v1493 = vpop.f32.mrf.mxu0
    %v1494 = vadd.f32 0.0, %v1493
    %v1495 = vpop.f32.mrf.mxu0
    %1496 = vdwg.mxu0
    %v1497 = vadd.f32 %v1426, %v1494
    %v1498 = vxor.u32 %v1497, 2147483648
    %v1499 = vmul.f32 %v1498, 1.442695
    %v1500 = vpow.pop %v1499
    %v1501 = vadd.f32 %v1500, 1.0
    %v1502 = vrcp.pop %v1501
    %v1503 = vmul.f32 1.0, %v1502
    %v1504 = vtanh.pop %v1497
    %v1505 = vmul.f32 %v1503, %v1237
    %1507 = vrot.lane.b32.xlu0 %v1504, 64
    %v1508 = vpop.permute.xlu0 %1507
    %v1510 = vmul.f32 %v1503, %v1508
    %1512 = vrot.lane.b32.xlu0 %v1510, 32
    %v1513 = vpop.permute.xlu0 %1512
    %v1515 = vadd.f32 %v1505, %v1513
    %v1516 = vtanh.pop %v1515
    %1518 = vrot.lane.b32.xlu0 %v1516, 64
    %v1519 = vpop.permute.xlu0 %1518
    %v1521 = vmul.f32 %v1503, %v1519
    %1523 = vrot.lane.b32.xlu0 %v1521, 32
    %v1524 = vpop.permute.xlu0 %1523
    %v1525 = vsel %vm45, %v1524, 0
    %1527 = vmatprep.subr.mxu0 0.0
    %1528 = vmatpush1.msra.mxu0 0.0
    %1529 = vmatprep.subr.mxu0 0.0
    %1530 = vmatpush1.msra.mxu0 0.0
    %1531 = vmatprep.subr.mxu0 0.0
    %1532 = vmatpush1.msra.mxu0 0.0
    %1533 = vmatprep.subr.mxu0 0.0
    %1534 = vmatpush1.msra.mxu0 0.0
    %1535 = vmatprep.subr.mxu0 0.0
    %1536 = vmatpush1.msra.mxu0 0.0
    %1537 = vmatprep.subr.mxu0 0.0
    %1538 = vmatpush1.msra.mxu0 0.0
    %1539 = vmatprep.subr.mxu0 0.0
    %1540 = vmatpush1.msra.mxu0 0.0
    %1541 = vmatprep.subr.mxu0 0.0
    %1542 = vmatpush1.msra.mxu0 0.0
    %1543 = vmatprep.subr.mxu0 0.0
    %1544 = vmatpush1.msra.mxu0 0.0
    %1545 = vmatprep.subr.mxu0 0.0
    %1546 = vmatpush1.msra.mxu0 0.0
    %1547 = vmatprep.subr.mxu0 0.0
    %1548 = vmatpush1.msra.mxu0 0.0
    %1549 = vmatprep.subr.mxu0 0.0
    %1550 = vmatpush1.msra.mxu0 0.0
    %1551 = vmatprep.subr.mxu0 0.0
    %1552 = vmatpush1.msra.mxu0 %v40
    %1553 = vmatprep.subr.mxu0 0.0
    %1554 = vmatpush1.msra.mxu0 %v39
    %1555 = vmatprep.subr.mxu0 0.0
    %1556 = vmatpush1.msra.mxu0 %v38
    %1557 = vmatprep.subr.mxu0 0.0
    %1558 = vmatpush1.msra.mxu0 %v37
    %1559 = vmatprep.subr.mxu0 0.0
    %1560 = vmatpush2.msra.mxu0 0.0
    %1561 = vmatprep.subr.mxu0 0.0
    %1562 = vmatpush2.msra.mxu0 0.0
    %1563 = vmatprep.subr.mxu0 0.0
    %1564 = vmatpush2.msra.mxu0 0.0
    %1565 = vmatprep.subr.mxu0 0.0
    %1566 = vmatpush2.msra.mxu0 0.0
    %1567 = vmatprep.subr.mxu0 0.0
    %1568 = vmatpush2.msra.mxu0 0.0
    %1569 = vmatprep.subr.mxu0 0.0
    %1570 = vmatpush2.msra.mxu0 0.0
    %1571 = vmatprep.subr.mxu0 0.0
    %1572 = vmatpush2.msra.mxu0 0.0
    %1573 = vmatprep.subr.mxu0 0.0
    %1574 = vmatpush2.msra.mxu0 0.0
    %1575 = vmatprep.subr.mxu0 0.0
    %1576 = vmatpush2.msra.mxu0 0.0
    %1577 = vmatprep.subr.mxu0 0.0
    %1578 = vmatpush2.msra.mxu0 0.0
    %1579 = vmatprep.subr.mxu0 0.0
    %1580 = vmatpush2.msra.mxu0 0.0
    %1581 = vmatprep.subr.mxu0 0.0
    %1582 = vmatpush2.msra.mxu0 0.0
    %1583 = vmatprep.subr.mxu0 0.0
    %1584 = vmatpush2.msra.mxu0 0.0
    %1585 = vmatprep.subr.mxu0 0.0
    %1586 = vmatpush2.msra.mxu0 0.0
    %1587 = vmatprep.subr.mxu0 0.0
    %1588 = vmatpush2.msra.mxu0 0.0
    %1589 = vmatprep.subr.mxu0 0.0
    %1590 = vmatpush2.msra.mxu0 0.0
    %1591 = vmatprep.mubr.f32.mxu0 0.0
    %1592 = vmatmul.mubr.f32.gmra.mxu0 %v1525
    %v1593 = vpop.f32.mrf.mxu0
    %v1594 = vadd.f32 %v963, %v1593
    %v1595 = vpop.f32.mrf.mxu0
    %1596 = vdwg.mxu0
    %vm1597 = vcmp.ge.s32.totalorder %v43, 48
    %vm1598 = vcmp.lt.s32.totalorder %v43, 64
    %vm1599 = vmand %vm1597, %vm1598
    %v1600 = vsel %vm1599, %v1594, %v1322
    %v1601 = vsel %vm1043, %v1594, -inf
    %1602 = vmax.xlane.f32.xlu0 %v1601
    %v1603 = vpop.xlane.xlu0 %1602
    %vm1604 = vcmp.eq.f32.partialorder %v1594, %v1603
    %v1605 = vsel %vm1604, %v43, 16
    %v1606 = vsel %vm1043, %v1605, 2147483647
    %v1607 = vand.u32 %v1606, 65535
    %v1608 = vshra.s32 %v1606, 16
    %v1609 = vcvt.s32.f32 %v1607
    %v1610 = vcvt.s32.f32 %v1608
    %1611 = vmin.xlane.f32.xlu0 %v1610
    %v1612 = vpop.xlane.xlu0 %1611
    %vm1613 = vcmp.eq.f32.partialorder %v1610, %v1612
    %v1614 = vsel %vm1613, %v1609, inf
    %1615 = vmin.xlane.f32.xlu0 %v1614
    %v1616 = vpop.xlane.xlu0 %1615
    %v1617 = vcvt.f32.s32 %v1616
    %v1618 = vcvt.f32.s32 %v1612
    %v1619 = vshll.u32 %v1618, 16
    %v1620 = vadd.s32 %v1619, %v1617
    %vm1621 = vcmp.eq.s32.totalorder %v43, %v1620
    %v1622 = vsel %vm1621, 1, 0
    %v1623 = vcvt.s32.f32 %v1622
    %v1625 = vsel %vm1067, %v1623, 0
    %1627 = vmatprep.subr.mxu0 0.0
    %1628 = vmatpush1.msra.mxu0 0.0
    %1629 = vmatprep.subr.mxu0 0.0
    %1630 = vmatpush1.msra.mxu0 0.0
    %1631 = vmatprep.subr.mxu0 0.0
    %1632 = vmatpush1.msra.mxu0 0.0
    %1633 = vmatprep.subr.mxu0 0.0
    %1634 = vmatpush1.msra.mxu0 0.0
    %1635 = vmatprep.subr.mxu0 0.0
    %1636 = vmatpush1.msra.mxu0 0.0
    %1637 = vmatprep.subr.mxu0 0.0
    %1638 = vmatpush1.msra.mxu0 0.0
    %1639 = vmatprep.subr.mxu0 0.0
    %1640 = vmatpush1.msra.mxu0 0.0
    %1641 = vmatprep.subr.mxu0 0.0
    %1642 = vmatpush1.msra.mxu0 0.0
    %1643 = vmatprep.subr.mxu0 0.0
    %1644 = vmatpush1.msra.mxu0 0.0
    %1645 = vmatprep.subr.mxu0 0.0
    %1646 = vmatpush1.msra.mxu0 0.0
    %1647 = vmatprep.subr.mxu0 0.0
    %1648 = vmatpush1.msra.mxu0 0.0
    %1649 = vmatprep.subr.mxu0 0.0
    %1650 = vmatpush1.msra.mxu0 0.0
    %1651 = vmatprep.subr.mxu0 0.0
    %1652 = vmatpush1.msra.mxu0 0.0
    %1653 = vmatprep.subr.mxu0 0.0
    %1654 = vmatpush1.msra.mxu0 0.0
    %1655 = vmatprep.subr.mxu0 0.0
    %1656 = vmatpush1.msra.mxu0 %v36
    %1657 = vmatprep.subr.mxu0 0.0
    %1658 = vmatpush1.msra.mxu0 %v35
    %1659 = vmatprep.subr.mxu0 0.0
    %1660 = vmatpush2.msra.mxu0 0.0
    %1661 = vmatprep.subr.mxu0 0.0
    %1662 = vmatpush2.msra.mxu0 0.0
    %1663 = vmatprep.subr.mxu0 0.0
    %1664 = vmatpush2.msra.mxu0 0.0
    %1665 = vmatprep.subr.mxu0 0.0
    %1666 = vmatpush2.msra.mxu0 0.0
    %1667 = vmatprep.subr.mxu0 0.0
    %1668 = vmatpush2.msra.mxu0 0.0
    %1669 = vmatprep.subr.mxu0 0.0
    %1670 = vmatpush2.msra.mxu0 0.0
    %1671 = vmatprep.subr.mxu0 0.0
    %1672 = vmatpush2.msra.mxu0 0.0
    %1673 = vmatprep.subr.mxu0 0.0
    %1674 = vmatpush2.msra.mxu0 0.0
    %1675 = vmatprep.subr.mxu0 0.0
    %1676 = vmatpush2.msra.mxu0 0.0
    %1677 = vmatprep.subr.mxu0 0.0
    %1678 = vmatpush2.msra.mxu0 0.0
    %1679 = vmatprep.subr.mxu0 0.0
    %1680 = vmatpush2.msra.mxu0 0.0
    %1681 = vmatprep.subr.mxu0 0.0
    %1682 = vmatpush2.msra.mxu0 0.0
    %1683 = vmatprep.subr.mxu0 0.0
    %1684 = vmatpush2.msra.mxu0 0.0
    %1685 = vmatprep.subr.mxu0 0.0
    %1686 = vmatpush2.msra.mxu0 0.0
    %1687 = vmatprep.subr.mxu0 0.0
    %1688 = vmatpush2.msra.mxu0 0.0
    %1689 = vmatprep.subr.mxu0 0.0
    %1690 = vmatpush2.msra.mxu0 0.0
    %1691 = vmatprep.mubr.f32.mxu0 0.0
    %1692 = vmatmul.mubr.f32.gmra.mxu0 %v1625
    %v1693 = vpop.f32.mrf.mxu0
    %v1694 = vadd.f32 0.0, %v1693
    %v1695 = vpop.f32.mrf.mxu0
    %1696 = vdwg.mxu0
    %s1697 = sld [smem:[#allocation2 + $0x3]]
    %p1698 = scmp.gt.s32.totalorder %s1697, 0
    %s1699 = scalar_lea.vmem %s1, 22
    %v1700 = vld [vmem:[%s1699] sm:$0x3]
    %s1701 = scalar_select %p1698, 1, 0
    %v1702 = vstv %s1701
    %vm1703 = vcmp.eq.s32.totalorder %v1702, 1
    %v1704 = vsel %vm1703, %v1700, %v1694
    %1705 = vmatprep.subr.mxu0 0.0
    %1706 = vmatpush1.msra.mxu0 0.0
    %1707 = vmatprep.subr.mxu0 0.0
    %1708 = vmatpush1.msra.mxu0 0.0
    %1709 = vmatprep.subr.mxu0 0.0
    %1710 = vmatpush1.msra.mxu0 0.0
    %1711 = vmatprep.subr.mxu0 0.0
    %1712 = vmatpush1.msra.mxu0 0.0
    %1713 = vmatprep.subr.mxu0 0.0
    %1714 = vmatpush1.msra.mxu0 0.0
    %1715 = vmatprep.subr.mxu0 0.0
    %1716 = vmatpush1.msra.mxu0 0.0
    %1717 = vmatprep.subr.mxu0 0.0
    %1718 = vmatpush1.msra.mxu0 0.0
    %1719 = vmatprep.subr.mxu0 0.0
    %1720 = vmatpush1.msra.mxu0 0.0
    %1721 = vmatprep.subr.mxu0 0.0
    %1722 = vmatpush1.msra.mxu0 0.0
    %1723 = vmatprep.subr.mxu0 0.0
    %1724 = vmatpush1.msra.mxu0 0.0
    %1725 = vmatprep.subr.mxu0 0.0
    %1726 = vmatpush1.msra.mxu0 0.0
    %1727 = vmatprep.subr.mxu0 0.0
    %1728 = vmatpush1.msra.mxu0 0.0
    %1729 = vmatprep.subr.mxu0 0.0
    %1730 = vmatpush1.msra.mxu0 %v34
    %1731 = vmatprep.subr.mxu0 0.0
    %1732 = vmatpush1.msra.mxu0 %v33
    %1733 = vmatprep.subr.mxu0 0.0
    %1734 = vmatpush1.msra.mxu0 %v32
    %1735 = vmatprep.subr.mxu0 0.0
    %1736 = vmatpush1.msra.mxu0 %v31
    %1737 = vmatprep.subr.mxu0 0.0
    %1738 = vmatpush2.msra.mxu0 0.0
    %1739 = vmatprep.subr.mxu0 0.0
    %1740 = vmatpush2.msra.mxu0 0.0
    %1741 = vmatprep.subr.mxu0 0.0
    %1742 = vmatpush2.msra.mxu0 0.0
    %1743 = vmatprep.subr.mxu0 0.0
    %1744 = vmatpush2.msra.mxu0 0.0
    %1745 = vmatprep.subr.mxu0 0.0
    %1746 = vmatpush2.msra.mxu0 0.0
    %1747 = vmatprep.subr.mxu0 0.0
    %1748 = vmatpush2.msra.mxu0 0.0
    %1749 = vmatprep.subr.mxu0 0.0
    %1750 = vmatpush2.msra.mxu0 0.0
    %1751 = vmatprep.subr.mxu0 0.0
    %1752 = vmatpush2.msra.mxu0 0.0
    %1753 = vmatprep.subr.mxu0 0.0
    %1754 = vmatpush2.msra.mxu0 0.0
    %1755 = vmatprep.subr.mxu0 0.0
    %1756 = vmatpush2.msra.mxu0 0.0
    %1757 = vmatprep.subr.mxu0 0.0
    %1758 = vmatpush2.msra.mxu0 0.0
    %1759 = vmatprep.subr.mxu0 0.0
    %1760 = vmatpush2.msra.mxu0 0.0
    %1761 = vmatprep.subr.mxu0 0.0
    %1762 = vmatpush2.msra.mxu0 0.0
    %1763 = vmatprep.subr.mxu0 0.0
    %1764 = vmatpush2.msra.mxu0 0.0
    %1765 = vmatprep.subr.mxu0 0.0
    %1766 = vmatpush2.msra.mxu0 0.0
    %1767 = vmatprep.subr.mxu0 0.0
    %1768 = vmatpush2.msra.mxu0 0.0
    %1769 = vmatprep.mubr.f32.mxu0 0.0
    %1770 = vmatmul.mubr.f32.gmra.mxu0 %v1525
    %v1771 = vpop.f32.mrf.mxu0
    %v1772 = vadd.f32 0.0, %v1771
    %v1773 = vpop.f32.mrf.mxu0
    %1774 = vdwg.mxu0
    %v1775 = vadd.f32 %v1704, %v1772
    %v1776 = vxor.u32 %v1775, 2147483648
    %v1777 = vmul.f32 %v1776, 1.442695
    %v1778 = vpow.pop %v1777
    %v1779 = vadd.f32 %v1778, 1.0
    %v1780 = vrcp.pop %v1779
    %v1781 = vmul.f32 1.0, %v1780
    %v1782 = vtanh.pop %v1775
    %v1783 = vmul.f32 %v1781, %v1515
    %1785 = vrot.lane.b32.xlu0 %v1782, 64
    %v1786 = vpop.permute.xlu0 %1785
    %v1788 = vmul.f32 %v1781, %v1786
    %1790 = vrot.lane.b32.xlu0 %v1788, 32
    %v1791 = vpop.permute.xlu0 %1790
    %v1793 = vadd.f32 %v1783, %v1791
    %v1794 = vtanh.pop %v1793
    %1796 = vrot.lane.b32.xlu0 %v1794, 64
    %v1797 = vpop.permute.xlu0 %1796
    %v1799 = vmul.f32 %v1781, %v1797
    %1801 = vrot.lane.b32.xlu0 %v1799, 32
    %v1802 = vpop.permute.xlu0 %1801
    %v1803 = vsel %vm45, %v1802, 0
    %1805 = vmatprep.subr.mxu0 0.0
    %1806 = vmatpush1.msra.mxu0 0.0
    %1807 = vmatprep.subr.mxu0 0.0
    %1808 = vmatpush1.msra.mxu0 0.0
    %1809 = vmatprep.subr.mxu0 0.0
    %1810 = vmatpush1.msra.mxu0 0.0
    %1811 = vmatprep.subr.mxu0 0.0
    %1812 = vmatpush1.msra.mxu0 0.0
    %1813 = vmatprep.subr.mxu0 0.0
    %1814 = vmatpush1.msra.mxu0 0.0
    %1815 = vmatprep.subr.mxu0 0.0
    %1816 = vmatpush1.msra.mxu0 0.0
    %1817 = vmatprep.subr.mxu0 0.0
    %1818 = vmatpush1.msra.mxu0 0.0
    %1819 = vmatprep.subr.mxu0 0.0
    %1820 = vmatpush1.msra.mxu0 0.0
    %1821 = vmatprep.subr.mxu0 0.0
    %1822 = vmatpush1.msra.mxu0 0.0
    %1823 = vmatprep.subr.mxu0 0.0
    %1824 = vmatpush1.msra.mxu0 0.0
    %1825 = vmatprep.subr.mxu0 0.0
    %1826 = vmatpush1.msra.mxu0 0.0
    %1827 = vmatprep.subr.mxu0 0.0
    %1828 = vmatpush1.msra.mxu0 0.0
    %1829 = vmatprep.subr.mxu0 0.0
    %1830 = vmatpush1.msra.mxu0 %v40
    %1831 = vmatprep.subr.mxu0 0.0
    %1832 = vmatpush1.msra.mxu0 %v39
    %1833 = vmatprep.subr.mxu0 0.0
    %1834 = vmatpush1.msra.mxu0 %v38
    %1835 = vmatprep.subr.mxu0 0.0
    %1836 = vmatpush1.msra.mxu0 %v37
    %1837 = vmatprep.subr.mxu0 0.0
    %1838 = vmatpush2.msra.mxu0 0.0
    %1839 = vmatprep.subr.mxu0 0.0
    %1840 = vmatpush2.msra.mxu0 0.0
    %1841 = vmatprep.subr.mxu0 0.0
    %1842 = vmatpush2.msra.mxu0 0.0
    %1843 = vmatprep.subr.mxu0 0.0
    %1844 = vmatpush2.msra.mxu0 0.0
    %1845 = vmatprep.subr.mxu0 0.0
    %1846 = vmatpush2.msra.mxu0 0.0
    %1847 = vmatprep.subr.mxu0 0.0
    %1848 = vmatpush2.msra.mxu0 0.0
    %1849 = vmatprep.subr.mxu0 0.0
    %1850 = vmatpush2.msra.mxu0 0.0
    %1851 = vmatprep.subr.mxu0 0.0
    %1852 = vmatpush2.msra.mxu0 0.0
    %1853 = vmatprep.subr.mxu0 0.0
    %1854 = vmatpush2.msra.mxu0 0.0
    %1855 = vmatprep.subr.mxu0 0.0
    %1856 = vmatpush2.msra.mxu0 0.0
    %1857 = vmatprep.subr.mxu0 0.0
    %1858 = vmatpush2.msra.mxu0 0.0
    %1859 = vmatprep.subr.mxu0 0.0
    %1860 = vmatpush2.msra.mxu0 0.0
    %1861 = vmatprep.subr.mxu0 0.0
    %1862 = vmatpush2.msra.mxu0 0.0
    %1863 = vmatprep.subr.mxu0 0.0
    %1864 = vmatpush2.msra.mxu0 0.0
    %1865 = vmatprep.subr.mxu0 0.0
    %1866 = vmatpush2.msra.mxu0 0.0
    %1867 = vmatprep.subr.mxu0 0.0
    %1868 = vmatpush2.msra.mxu0 0.0
    %1869 = vmatprep.mubr.f32.mxu0 0.0
    %1870 = vmatmul.mubr.f32.gmra.mxu0 %v1803
    %v1871 = vpop.f32.mrf.mxu0
    %v1872 = vadd.f32 %v963, %v1871
    %v1873 = vpop.f32.mrf.mxu0
    %1874 = vdwg.mxu0
    %vm1875 = vcmp.ge.s32.totalorder %v43, 64
    %vm1876 = vcmp.lt.s32.totalorder %v43, 80
    %vm1877 = vmand %vm1875, %vm1876
    %v1878 = vsel %vm1877, %v1872, %v1600
    %v1879 = vsel %vm1043, %v1872, -inf
    %1880 = vmax.xlane.f32.xlu0 %v1879
    %v1881 = vpop.xlane.xlu0 %1880
    %vm1882 = vcmp.eq.f32.partialorder %v1872, %v1881
    %v1883 = vsel %vm1882, %v43, 16
    %v1884 = vsel %vm1043, %v1883, 2147483647
    %v1885 = vand.u32 %v1884, 65535
    %v1886 = vshra.s32 %v1884, 16
    %v1887 = vcvt.s32.f32 %v1885
    %v1888 = vcvt.s32.f32 %v1886
    %1889 = vmin.xlane.f32.xlu0 %v1888
    %v1890 = vpop.xlane.xlu0 %1889
    %vm1891 = vcmp.eq.f32.partialorder %v1888, %v1890
    %v1892 = vsel %vm1891, %v1887, inf
    %1893 = vmin.xlane.f32.xlu0 %v1892
    %v1894 = vpop.xlane.xlu0 %1893
    %v1895 = vcvt.f32.s32 %v1894
    %v1896 = vcvt.f32.s32 %v1890
    %v1897 = vshll.u32 %v1896, 16
    %v1898 = vadd.s32 %v1897, %v1895
    %vm1899 = vcmp.eq.s32.totalorder %v43, %v1898
    %v1900 = vsel %vm1899, 1, 0
    %v1901 = vcvt.s32.f32 %v1900
    %v1903 = vsel %vm1067, %v1901, 0
    %1905 = vmatprep.subr.mxu0 0.0
    %1906 = vmatpush1.msra.mxu0 0.0
    %1907 = vmatprep.subr.mxu0 0.0
    %1908 = vmatpush1.msra.mxu0 0.0
    %1909 = vmatprep.subr.mxu0 0.0
    %1910 = vmatpush1.msra.mxu0 0.0
    %1911 = vmatprep.subr.mxu0 0.0
    %1912 = vmatpush1.msra.mxu0 0.0
    %1913 = vmatprep.subr.mxu0 0.0
    %1914 = vmatpush1.msra.mxu0 0.0
    %1915 = vmatprep.subr.mxu0 0.0
    %1916 = vmatpush1.msra.mxu0 0.0
    %1917 = vmatprep.subr.mxu0 0.0
    %1918 = vmatpush1.msra.mxu0 0.0
    %1919 = vmatprep.subr.mxu0 0.0
    %1920 = vmatpush1.msra.mxu0 0.0
    %1921 = vmatprep.subr.mxu0 0.0
    %1922 = vmatpush1.msra.mxu0 0.0
    %1923 = vmatprep.subr.mxu0 0.0
    %1924 = vmatpush1.msra.mxu0 0.0
    %1925 = vmatprep.subr.mxu0 0.0
    %1926 = vmatpush1.msra.mxu0 0.0
    %1927 = vmatprep.subr.mxu0 0.0
    %1928 = vmatpush1.msra.mxu0 0.0
    %1929 = vmatprep.subr.mxu0 0.0
    %1930 = vmatpush1.msra.mxu0 0.0
    %1931 = vmatprep.subr.mxu0 0.0
    %1932 = vmatpush1.msra.mxu0 0.0
    %1933 = vmatprep.subr.mxu0 0.0
    %1934 = vmatpush1.msra.mxu0 %v36
    %1935 = vmatprep.subr.mxu0 0.0
    %1936 = vmatpush1.msra.mxu0 %v35
    %1937 = vmatprep.subr.mxu0 0.0
    %1938 = vmatpush2.msra.mxu0 0.0
    %1939 = vmatprep.subr.mxu0 0.0
    %1940 = vmatpush2.msra.mxu0 0.0
    %1941 = vmatprep.subr.mxu0 0.0
    %1942 = vmatpush2.msra.mxu0 0.0
    %1943 = vmatprep.subr.mxu0 0.0
    %1944 = vmatpush2.msra.mxu0 0.0
    %1945 = vmatprep.subr.mxu0 0.0
    %1946 = vmatpush2.msra.mxu0 0.0
    %1947 = vmatprep.subr.mxu0 0.0
    %1948 = vmatpush2.msra.mxu0 0.0
    %1949 = vmatprep.subr.mxu0 0.0
    %1950 = vmatpush2.msra.mxu0 0.0
    %1951 = vmatprep.subr.mxu0 0.0
    %1952 = vmatpush2.msra.mxu0 0.0
    %1953 = vmatprep.subr.mxu0 0.0
    %1954 = vmatpush2.msra.mxu0 0.0
    %1955 = vmatprep.subr.mxu0 0.0
    %1956 = vmatpush2.msra.mxu0 0.0
    %1957 = vmatprep.subr.mxu0 0.0
    %1958 = vmatpush2.msra.mxu0 0.0
    %1959 = vmatprep.subr.mxu0 0.0
    %1960 = vmatpush2.msra.mxu0 0.0
    %1961 = vmatprep.subr.mxu0 0.0
    %1962 = vmatpush2.msra.mxu0 0.0
    %1963 = vmatprep.subr.mxu0 0.0
    %1964 = vmatpush2.msra.mxu0 0.0
    %1965 = vmatprep.subr.mxu0 0.0
    %1966 = vmatpush2.msra.mxu0 0.0
    %1967 = vmatprep.subr.mxu0 0.0
    %1968 = vmatpush2.msra.mxu0 0.0
    %1969 = vmatprep.mubr.f32.mxu0 0.0
    %1970 = vmatmul.mubr.f32.gmra.mxu0 %v1903
    %v1971 = vpop.f32.mrf.mxu0
    %v1972 = vadd.f32 0.0, %v1971
    %v1973 = vpop.f32.mrf.mxu0
    %1974 = vdwg.mxu0
    %s1975 = sld [smem:[#allocation2 + $0x4]]
    %p1976 = scmp.gt.s32.totalorder %s1975, 0
    %s1977 = scalar_lea.vmem %s1, 24
    %v1978 = vld [vmem:[%s1977] sm:$0x3]
    %s1979 = scalar_select %p1976, 1, 0
    %v1980 = vstv %s1979
    %vm1981 = vcmp.eq.s32.totalorder %v1980, 1
    %v1982 = vsel %vm1981, %v1978, %v1972
    %1983 = vmatprep.subr.mxu0 0.0
    %1984 = vmatpush1.msra.mxu0 0.0
    %1985 = vmatprep.subr.mxu0 0.0
    %1986 = vmatpush1.msra.mxu0 0.0
    %1987 = vmatprep.subr.mxu0 0.0
    %1988 = vmatpush1.msra.mxu0 0.0
    %1989 = vmatprep.subr.mxu0 0.0
    %1990 = vmatpush1.msra.mxu0 0.0
    %1991 = vmatprep.subr.mxu0 0.0
    %1992 = vmatpush1.msra.mxu0 0.0
    %1993 = vmatprep.subr.mxu0 0.0
    %1994 = vmatpush1.msra.mxu0 0.0
    %1995 = vmatprep.subr.mxu0 0.0
    %1996 = vmatpush1.msra.mxu0 0.0
    %1997 = vmatprep.subr.mxu0 0.0
    %1998 = vmatpush1.msra.mxu0 0.0
    %1999 = vmatprep.subr.mxu0 0.0
    %2000 = vmatpush1.msra.mxu0 0.0
    %2001 = vmatprep.subr.mxu0 0.0
    %2002 = vmatpush1.msra.mxu0 0.0
    %2003 = vmatprep.subr.mxu0 0.0
    %2004 = vmatpush1.msra.mxu0 0.0
    %2005 = vmatprep.subr.mxu0 0.0
    %2006 = vmatpush1.msra.mxu0 0.0
    %2007 = vmatprep.subr.mxu0 0.0
    %2008 = vmatpush1.msra.mxu0 %v34
    %2009 = vmatprep.subr.mxu0 0.0
    %2010 = vmatpush1.msra.mxu0 %v33
    %2011 = vmatprep.subr.mxu0 0.0
    %2012 = vmatpush1.msra.mxu0 %v32
    %2013 = vmatprep.subr.mxu0 0.0
    %2014 = vmatpush1.msra.mxu0 %v31
    %2015 = vmatprep.subr.mxu0 0.0
    %2016 = vmatpush2.msra.mxu0 0.0
    %2017 = vmatprep.subr.mxu0 0.0
    %2018 = vmatpush2.msra.mxu0 0.0
    %2019 = vmatprep.subr.mxu0 0.0
    %2020 = vmatpush2.msra.mxu0 0.0
    %2021 = vmatprep.subr.mxu0 0.0
    %2022 = vmatpush2.msra.mxu0 0.0
    %2023 = vmatprep.subr.mxu0 0.0
    %2024 = vmatpush2.msra.mxu0 0.0
    %2025 = vmatprep.subr.mxu0 0.0
    %2026 = vmatpush2.msra.mxu0 0.0
    %2027 = vmatprep.subr.mxu0 0.0
    %2028 = vmatpush2.msra.mxu0 0.0
    %2029 = vmatprep.subr.mxu0 0.0
    %2030 = vmatpush2.msra.mxu0 0.0
    %2031 = vmatprep.subr.mxu0 0.0
    %2032 = vmatpush2.msra.mxu0 0.0
    %2033 = vmatprep.subr.mxu0 0.0
    %2034 = vmatpush2.msra.mxu0 0.0
    %2035 = vmatprep.subr.mxu0 0.0
    %2036 = vmatpush2.msra.mxu0 0.0
    %2037 = vmatprep.subr.mxu0 0.0
    %2038 = vmatpush2.msra.mxu0 0.0
    %2039 = vmatprep.subr.mxu0 0.0
    %2040 = vmatpush2.msra.mxu0 0.0
    %2041 = vmatprep.subr.mxu0 0.0
    %2042 = vmatpush2.msra.mxu0 0.0
    %2043 = vmatprep.subr.mxu0 0.0
    %2044 = vmatpush2.msra.mxu0 0.0
    %2045 = vmatprep.subr.mxu0 0.0
    %2046 = vmatpush2.msra.mxu0 0.0
    %2047 = vmatprep.mubr.f32.mxu0 0.0
    %2048 = vmatmul.mubr.f32.gmra.mxu0 %v1803
    %v2049 = vpop.f32.mrf.mxu0
    %v2050 = vadd.f32 0.0, %v2049
    %v2051 = vpop.f32.mrf.mxu0
    %2052 = vdwg.mxu0
    %v2053 = vadd.f32 %v1982, %v2050
    %v2054 = vxor.u32 %v2053, 2147483648
    %v2055 = vmul.f32 %v2054, 1.442695
    %v2056 = vpow.pop %v2055
    %v2057 = vadd.f32 %v2056, 1.0
    %v2058 = vrcp.pop %v2057
    %v2059 = vmul.f32 1.0, %v2058
    %v2060 = vtanh.pop %v2053
    %v2061 = vmul.f32 %v2059, %v1793
    %2063 = vrot.lane.b32.xlu0 %v2060, 64
    %v2064 = vpop.permute.xlu0 %2063
    %v2066 = vmul.f32 %v2059, %v2064
    %2068 = vrot.lane.b32.xlu0 %v2066, 32
    %v2069 = vpop.permute.xlu0 %2068
    %v2071 = vadd.f32 %v2061, %v2069
    %v2072 = vtanh.pop %v2071
    %2074 = vrot.lane.b32.xlu0 %v2072, 64
    %v2075 = vpop.permute.xlu0 %2074
    %v2077 = vmul.f32 %v2059, %v2075
    %2079 = vrot.lane.b32.xlu0 %v2077, 32
    %v2080 = vpop.permute.xlu0 %2079
    %v2081 = vsel %vm45, %v2080, 0
    %2083 = vmatprep.subr.mxu0 0.0
    %2084 = vmatpush1.msra.mxu0 0.0
    %2085 = vmatprep.subr.mxu0 0.0
    %2086 = vmatpush1.msra.mxu0 0.0
    %2087 = vmatprep.subr.mxu0 0.0
    %2088 = vmatpush1.msra.mxu0 0.0
    %2089 = vmatprep.subr.mxu0 0.0
    %2090 = vmatpush1.msra.mxu0 0.0
    %2091 = vmatprep.subr.mxu0 0.0
    %2092 = vmatpush1.msra.mxu0 0.0
    %2093 = vmatprep.subr.mxu0 0.0
    %2094 = vmatpush1.msra.mxu0 0.0
    %2095 = vmatprep.subr.mxu0 0.0
    %2096 = vmatpush1.msra.mxu0 0.0
    %2097 = vmatprep.subr.mxu0 0.0
    %2098 = vmatpush1.msra.mxu0 0.0
    %2099 = vmatprep.subr.mxu0 0.0
    %2100 = vmatpush1.msra.mxu0 0.0
    %2101 = vmatprep.subr.mxu0 0.0
    %2102 = vmatpush1.msra.mxu0 0.0
    %2103 = vmatprep.subr.mxu0 0.0
    %2104 = vmatpush1.msra.mxu0 0.0
    %2105 = vmatprep.subr.mxu0 0.0
    %2106 = vmatpush1.msra.mxu0 0.0
    %2107 = vmatprep.subr.mxu0 0.0
    %2108 = vmatpush1.msra.mxu0 %v40
    %2109 = vmatprep.subr.mxu0 0.0
    %2110 = vmatpush1.msra.mxu0 %v39
    %2111 = vmatprep.subr.mxu0 0.0
    %2112 = vmatpush1.msra.mxu0 %v38
    %2113 = vmatprep.subr.mxu0 0.0
    %2114 = vmatpush1.msra.mxu0 %v37
    %2115 = vmatprep.subr.mxu0 0.0
    %2116 = vmatpush2.msra.mxu0 0.0
    %2117 = vmatprep.subr.mxu0 0.0
    %2118 = vmatpush2.msra.mxu0 0.0
    %2119 = vmatprep.subr.mxu0 0.0
    %2120 = vmatpush2.msra.mxu0 0.0
    %2121 = vmatprep.subr.mxu0 0.0
    %2122 = vmatpush2.msra.mxu0 0.0
    %2123 = vmatprep.subr.mxu0 0.0
    %2124 = vmatpush2.msra.mxu0 0.0
    %2125 = vmatprep.subr.mxu0 0.0
    %2126 = vmatpush2.msra.mxu0 0.0
    %2127 = vmatprep.subr.mxu0 0.0
    %2128 = vmatpush2.msra.mxu0 0.0
    %2129 = vmatprep.subr.mxu0 0.0
    %2130 = vmatpush2.msra.mxu0 0.0
    %2131 = vmatprep.subr.mxu0 0.0
    %2132 = vmatpush2.msra.mxu0 0.0
    %2133 = vmatprep.subr.mxu0 0.0
    %2134 = vmatpush2.msra.mxu0 0.0
    %2135 = vmatprep.subr.mxu0 0.0
    %2136 = vmatpush2.msra.mxu0 0.0
    %2137 = vmatprep.subr.mxu0 0.0
    %2138 = vmatpush2.msra.mxu0 0.0
    %2139 = vmatprep.subr.mxu0 0.0
    %2140 = vmatpush2.msra.mxu0 0.0
    %2141 = vmatprep.subr.mxu0 0.0
    %2142 = vmatpush2.msra.mxu0 0.0
    %2143 = vmatprep.subr.mxu0 0.0
    %2144 = vmatpush2.msra.mxu0 0.0
    %2145 = vmatprep.subr.mxu0 0.0
    %2146 = vmatpush2.msra.mxu0 0.0
    %2147 = vmatprep.mubr.f32.mxu0 0.0
    %2148 = vmatmul.mubr.f32.gmra.mxu0 %v2081
    %v2149 = vpop.f32.mrf.mxu0
    %v2150 = vadd.f32 %v963, %v2149
    %v2151 = vpop.f32.mrf.mxu0
    %2152 = vdwg.mxu0
    %vm2153 = vcmp.ge.s32.totalorder %v43, 80
    %vm2154 = vcmp.lt.s32.totalorder %v43, 96
    %vm2155 = vmand %vm2153, %vm2154
    %v2156 = vsel %vm2155, %v2150, %v1878
    %v2157 = vsel %vm1043, %v2150, -inf
    %2158 = vmax.xlane.f32.xlu0 %v2157
    %v2159 = vpop.xlane.xlu0 %2158
    %vm2160 = vcmp.eq.f32.partialorder %v2150, %v2159
    %v2161 = vsel %vm2160, %v43, 16
    %v2162 = vsel %vm1043, %v2161, 2147483647
    %v2163 = vand.u32 %v2162, 65535
    %v2164 = vshra.s32 %v2162, 16
    %v2165 = vcvt.s32.f32 %v2163
    %v2166 = vcvt.s32.f32 %v2164
    %2167 = vmin.xlane.f32.xlu0 %v2166
    %v2168 = vpop.xlane.xlu0 %2167
    %vm2169 = vcmp.eq.f32.partialorder %v2166, %v2168
    %v2170 = vsel %vm2169, %v2165, inf
    %2171 = vmin.xlane.f32.xlu0 %v2170
    %v2172 = vpop.xlane.xlu0 %2171
    %v2173 = vcvt.f32.s32 %v2172
    %v2174 = vcvt.f32.s32 %v2168
    %v2175 = vshll.u32 %v2174, 16
    %v2176 = vadd.s32 %v2175, %v2173
    %vm2177 = vcmp.eq.s32.totalorder %v43, %v2176
    %v2178 = vsel %vm2177, 1, 0
    %v2179 = vcvt.s32.f32 %v2178
    %v2181 = vsel %vm1067, %v2179, 0
    %2183 = vmatprep.subr.mxu0 0.0
    %2184 = vmatpush1.msra.mxu0 0.0
    %2185 = vmatprep.subr.mxu0 0.0
    %2186 = vmatpush1.msra.mxu0 0.0
    %2187 = vmatprep.subr.mxu0 0.0
    %2188 = vmatpush1.msra.mxu0 0.0
    %2189 = vmatprep.subr.mxu0 0.0
    %2190 = vmatpush1.msra.mxu0 0.0
    %2191 = vmatprep.subr.mxu0 0.0
    %2192 = vmatpush1.msra.mxu0 0.0
    %2193 = vmatprep.subr.mxu0 0.0
    %2194 = vmatpush1.msra.mxu0 0.0
    %2195 = vmatprep.subr.mxu0 0.0
    %2196 = vmatpush1.msra.mxu0 0.0
    %2197 = vmatprep.subr.mxu0 0.0
    %2198 = vmatpush1.msra.mxu0 0.0
    %2199 = vmatprep.subr.mxu0 0.0
    %2200 = vmatpush1.msra.mxu0 0.0
    %2201 = vmatprep.subr.mxu0 0.0
    %2202 = vmatpush1.msra.mxu0 0.0
    %2203 = vmatprep.subr.mxu0 0.0
    %2204 = vmatpush1.msra.mxu0 0.0
    %2205 = vmatprep.subr.mxu0 0.0
    %2206 = vmatpush1.msra.mxu0 0.0
    %2207 = vmatprep.subr.mxu0 0.0
    %2208 = vmatpush1.msra.mxu0 0.0
    %2209 = vmatprep.subr.mxu0 0.0
    %2210 = vmatpush1.msra.mxu0 0.0
    %2211 = vmatprep.subr.mxu0 0.0
    %2212 = vmatpush1.msra.mxu0 %v36
    %2213 = vmatprep.subr.mxu0 0.0
    %2214 = vmatpush1.msra.mxu0 %v35
    %2215 = vmatprep.subr.mxu0 0.0
    %2216 = vmatpush2.msra.mxu0 0.0
    %2217 = vmatprep.subr.mxu0 0.0
    %2218 = vmatpush2.msra.mxu0 0.0
    %2219 = vmatprep.subr.mxu0 0.0
    %2220 = vmatpush2.msra.mxu0 0.0
    %2221 = vmatprep.subr.mxu0 0.0
    %2222 = vmatpush2.msra.mxu0 0.0
    %2223 = vmatprep.subr.mxu0 0.0
    %2224 = vmatpush2.msra.mxu0 0.0
    %2225 = vmatprep.subr.mxu0 0.0
    %2226 = vmatpush2.msra.mxu0 0.0
    %2227 = vmatprep.subr.mxu0 0.0
    %2228 = vmatpush2.msra.mxu0 0.0
    %2229 = vmatprep.subr.mxu0 0.0
    %2230 = vmatpush2.msra.mxu0 0.0
    %2231 = vmatprep.subr.mxu0 0.0
    %2232 = vmatpush2.msra.mxu0 0.0
    %2233 = vmatprep.subr.mxu0 0.0
    %2234 = vmatpush2.msra.mxu0 0.0
    %2235 = vmatprep.subr.mxu0 0.0
    %2236 = vmatpush2.msra.mxu0 0.0
    %2237 = vmatprep.subr.mxu0 0.0
    %2238 = vmatpush2.msra.mxu0 0.0
    %2239 = vmatprep.subr.mxu0 0.0
    %2240 = vmatpush2.msra.mxu0 0.0
    %2241 = vmatprep.subr.mxu0 0.0
    %2242 = vmatpush2.msra.mxu0 0.0
    %2243 = vmatprep.subr.mxu0 0.0
    %2244 = vmatpush2.msra.mxu0 0.0
    %2245 = vmatprep.subr.mxu0 0.0
    %2246 = vmatpush2.msra.mxu0 0.0
    %2247 = vmatprep.mubr.f32.mxu0 0.0
    %2248 = vmatmul.mubr.f32.gmra.mxu0 %v2181
    %v2249 = vpop.f32.mrf.mxu0
    %v2250 = vadd.f32 0.0, %v2249
    %v2251 = vpop.f32.mrf.mxu0
    %2252 = vdwg.mxu0
    %s2253 = sld [smem:[#allocation2 + $0x5]]
    %p2254 = scmp.gt.s32.totalorder %s2253, 0
    %s2255 = scalar_lea.vmem %s1, 26
    %v2256 = vld [vmem:[%s2255] sm:$0x3]
    %s2257 = scalar_select %p2254, 1, 0
    %v2258 = vstv %s2257
    %vm2259 = vcmp.eq.s32.totalorder %v2258, 1
    %v2260 = vsel %vm2259, %v2256, %v2250
    %2261 = vmatprep.subr.mxu0 0.0
    %2262 = vmatpush1.msra.mxu0 0.0
    %2263 = vmatprep.subr.mxu0 0.0
    %2264 = vmatpush1.msra.mxu0 0.0
    %2265 = vmatprep.subr.mxu0 0.0
    %2266 = vmatpush1.msra.mxu0 0.0
    %2267 = vmatprep.subr.mxu0 0.0
    %2268 = vmatpush1.msra.mxu0 0.0
    %2269 = vmatprep.subr.mxu0 0.0
    %2270 = vmatpush1.msra.mxu0 0.0
    %2271 = vmatprep.subr.mxu0 0.0
    %2272 = vmatpush1.msra.mxu0 0.0
    %2273 = vmatprep.subr.mxu0 0.0
    %2274 = vmatpush1.msra.mxu0 0.0
    %2275 = vmatprep.subr.mxu0 0.0
    %2276 = vmatpush1.msra.mxu0 0.0
    %2277 = vmatprep.subr.mxu0 0.0
    %2278 = vmatpush1.msra.mxu0 0.0
    %2279 = vmatprep.subr.mxu0 0.0
    %2280 = vmatpush1.msra.mxu0 0.0
    %2281 = vmatprep.subr.mxu0 0.0
    %2282 = vmatpush1.msra.mxu0 0.0
    %2283 = vmatprep.subr.mxu0 0.0
    %2284 = vmatpush1.msra.mxu0 0.0
    %2285 = vmatprep.subr.mxu0 0.0
    %2286 = vmatpush1.msra.mxu0 %v34
    %2287 = vmatprep.subr.mxu0 0.0
    %2288 = vmatpush1.msra.mxu0 %v33
    %2289 = vmatprep.subr.mxu0 0.0
    %2290 = vmatpush1.msra.mxu0 %v32
    %2291 = vmatprep.subr.mxu0 0.0
    %2292 = vmatpush1.msra.mxu0 %v31
    %2293 = vmatprep.subr.mxu0 0.0
    %2294 = vmatpush2.msra.mxu0 0.0
    %2295 = vmatprep.subr.mxu0 0.0
    %2296 = vmatpush2.msra.mxu0 0.0
    %2297 = vmatprep.subr.mxu0 0.0
    %2298 = vmatpush2.msra.mxu0 0.0
    %2299 = vmatprep.subr.mxu0 0.0
    %2300 = vmatpush2.msra.mxu0 0.0
    %2301 = vmatprep.subr.mxu0 0.0
    %2302 = vmatpush2.msra.mxu0 0.0
    %2303 = vmatprep.subr.mxu0 0.0
    %2304 = vmatpush2.msra.mxu0 0.0
    %2305 = vmatprep.subr.mxu0 0.0
    %2306 = vmatpush2.msra.mxu0 0.0
    %2307 = vmatprep.subr.mxu0 0.0
    %2308 = vmatpush2.msra.mxu0 0.0
    %2309 = vmatprep.subr.mxu0 0.0
    %2310 = vmatpush2.msra.mxu0 0.0
    %2311 = vmatprep.subr.mxu0 0.0
    %2312 = vmatpush2.msra.mxu0 0.0
    %2313 = vmatprep.subr.mxu0 0.0
    %2314 = vmatpush2.msra.mxu0 0.0
    %2315 = vmatprep.subr.mxu0 0.0
    %2316 = vmatpush2.msra.mxu0 0.0
    %2317 = vmatprep.subr.mxu0 0.0
    %2318 = vmatpush2.msra.mxu0 0.0
    %2319 = vmatprep.subr.mxu0 0.0
    %2320 = vmatpush2.msra.mxu0 0.0
    %2321 = vmatprep.subr.mxu0 0.0
    %2322 = vmatpush2.msra.mxu0 0.0
    %2323 = vmatprep.subr.mxu0 0.0
    %2324 = vmatpush2.msra.mxu0 0.0
    %2325 = vmatprep.mubr.f32.mxu0 0.0
    %2326 = vmatmul.mubr.f32.gmra.mxu0 %v2081
    %v2327 = vpop.f32.mrf.mxu0
    %v2328 = vadd.f32 0.0, %v2327
    %v2329 = vpop.f32.mrf.mxu0
    %2330 = vdwg.mxu0
    %v2331 = vadd.f32 %v2260, %v2328
    %v2332 = vxor.u32 %v2331, 2147483648
    %v2333 = vmul.f32 %v2332, 1.442695
    %v2334 = vpow.pop %v2333
    %v2335 = vadd.f32 %v2334, 1.0
    %v2336 = vrcp.pop %v2335
    %v2337 = vmul.f32 1.0, %v2336
    %v2338 = vtanh.pop %v2331
    %v2339 = vmul.f32 %v2337, %v2071
    %2341 = vrot.lane.b32.xlu0 %v2338, 64
    %v2342 = vpop.permute.xlu0 %2341
    %v2344 = vmul.f32 %v2337, %v2342
    %2346 = vrot.lane.b32.xlu0 %v2344, 32
    %v2347 = vpop.permute.xlu0 %2346
    %v2349 = vadd.f32 %v2339, %v2347
    %v2350 = vtanh.pop %v2349
    %2352 = vrot.lane.b32.xlu0 %v2350, 64
    %v2353 = vpop.permute.xlu0 %2352
    %v2355 = vmul.f32 %v2337, %v2353
    %2357 = vrot.lane.b32.xlu0 %v2355, 32
    %v2358 = vpop.permute.xlu0 %2357
    %v2359 = vsel %vm45, %v2358, 0
    %2361 = vmatprep.subr.mxu0 0.0
    %2362 = vmatpush1.msra.mxu0 0.0
    %2363 = vmatprep.subr.mxu0 0.0
    %2364 = vmatpush1.msra.mxu0 0.0
    %2365 = vmatprep.subr.mxu0 0.0
    %2366 = vmatpush1.msra.mxu0 0.0
    %2367 = vmatprep.subr.mxu0 0.0
    %2368 = vmatpush1.msra.mxu0 0.0
    %2369 = vmatprep.subr.mxu0 0.0
    %2370 = vmatpush1.msra.mxu0 0.0
    %2371 = vmatprep.subr.mxu0 0.0
    %2372 = vmatpush1.msra.mxu0 0.0
    %2373 = vmatprep.subr.mxu0 0.0
    %2374 = vmatpush1.msra.mxu0 0.0
    %2375 = vmatprep.subr.mxu0 0.0
    %2376 = vmatpush1.msra.mxu0 0.0
    %2377 = vmatprep.subr.mxu0 0.0
    %2378 = vmatpush1.msra.mxu0 0.0
    %2379 = vmatprep.subr.mxu0 0.0
    %2380 = vmatpush1.msra.mxu0 0.0
    %2381 = vmatprep.subr.mxu0 0.0
    %2382 = vmatpush1.msra.mxu0 0.0
    %2383 = vmatprep.subr.mxu0 0.0
    %2384 = vmatpush1.msra.mxu0 0.0
    %2385 = vmatprep.subr.mxu0 0.0
    %2386 = vmatpush1.msra.mxu0 %v40
    %2387 = vmatprep.subr.mxu0 0.0
    %2388 = vmatpush1.msra.mxu0 %v39
    %2389 = vmatprep.subr.mxu0 0.0
    %2390 = vmatpush1.msra.mxu0 %v38
    %2391 = vmatprep.subr.mxu0 0.0
    %2392 = vmatpush1.msra.mxu0 %v37
    %2393 = vmatprep.subr.mxu0 0.0
    %2394 = vmatpush2.msra.mxu0 0.0
    %2395 = vmatprep.subr.mxu0 0.0
    %2396 = vmatpush2.msra.mxu0 0.0
    %2397 = vmatprep.subr.mxu0 0.0
    %2398 = vmatpush2.msra.mxu0 0.0
    %2399 = vmatprep.subr.mxu0 0.0
    %2400 = vmatpush2.msra.mxu0 0.0
    %2401 = vmatprep.subr.mxu0 0.0
    %2402 = vmatpush2.msra.mxu0 0.0
    %2403 = vmatprep.subr.mxu0 0.0
    %2404 = vmatpush2.msra.mxu0 0.0
    %2405 = vmatprep.subr.mxu0 0.0
    %2406 = vmatpush2.msra.mxu0 0.0
    %2407 = vmatprep.subr.mxu0 0.0
    %2408 = vmatpush2.msra.mxu0 0.0
    %2409 = vmatprep.subr.mxu0 0.0
    %2410 = vmatpush2.msra.mxu0 0.0
    %2411 = vmatprep.subr.mxu0 0.0
    %2412 = vmatpush2.msra.mxu0 0.0
    %2413 = vmatprep.subr.mxu0 0.0
    %2414 = vmatpush2.msra.mxu0 0.0
    %2415 = vmatprep.subr.mxu0 0.0
    %2416 = vmatpush2.msra.mxu0 0.0
    %2417 = vmatprep.subr.mxu0 0.0
    %2418 = vmatpush2.msra.mxu0 0.0
    %2419 = vmatprep.subr.mxu0 0.0
    %2420 = vmatpush2.msra.mxu0 0.0
    %2421 = vmatprep.subr.mxu0 0.0
    %2422 = vmatpush2.msra.mxu0 0.0
    %2423 = vmatprep.subr.mxu0 0.0
    %2424 = vmatpush2.msra.mxu0 0.0
    %2425 = vmatprep.mubr.f32.mxu0 0.0
    %2426 = vmatmul.mubr.f32.gmra.mxu0 %v2359
    %v2427 = vpop.f32.mrf.mxu0
    %v2428 = vadd.f32 %v963, %v2427
    %v2429 = vpop.f32.mrf.mxu0
    %2430 = vdwg.mxu0
    %vm2431 = vcmp.ge.s32.totalorder %v43, 96
    %vm2432 = vcmp.lt.s32.totalorder %v43, 112
    %vm2433 = vmand %vm2431, %vm2432
    %v2434 = vsel %vm2433, %v2428, %v2156
    %v2435 = vsel %vm1043, %v2428, -inf
    %2436 = vmax.xlane.f32.xlu0 %v2435
    %v2437 = vpop.xlane.xlu0 %2436
    %vm2438 = vcmp.eq.f32.partialorder %v2428, %v2437
    %v2439 = vsel %vm2438, %v43, 16
    %v2440 = vsel %vm1043, %v2439, 2147483647
    %v2441 = vand.u32 %v2440, 65535
    %v2442 = vshra.s32 %v2440, 16
    %v2443 = vcvt.s32.f32 %v2441
    %v2444 = vcvt.s32.f32 %v2442
    %2445 = vmin.xlane.f32.xlu0 %v2444
    %v2446 = vpop.xlane.xlu0 %2445
    %vm2447 = vcmp.eq.f32.partialorder %v2444, %v2446
    %v2448 = vsel %vm2447, %v2443, inf
    %2449 = vmin.xlane.f32.xlu0 %v2448
    %v2450 = vpop.xlane.xlu0 %2449
    %v2451 = vcvt.f32.s32 %v2450
    %v2452 = vcvt.f32.s32 %v2446
    %v2453 = vshll.u32 %v2452, 16
    %v2454 = vadd.s32 %v2453, %v2451
    %vm2455 = vcmp.eq.s32.totalorder %v43, %v2454
    %v2456 = vsel %vm2455, 1, 0
    %v2457 = vcvt.s32.f32 %v2456
    %v2459 = vsel %vm1067, %v2457, 0
    %2461 = vmatprep.subr.mxu0 0.0
    %2462 = vmatpush1.msra.mxu0 0.0
    %2463 = vmatprep.subr.mxu0 0.0
    %2464 = vmatpush1.msra.mxu0 0.0
    %2465 = vmatprep.subr.mxu0 0.0
    %2466 = vmatpush1.msra.mxu0 0.0
    %2467 = vmatprep.subr.mxu0 0.0
    %2468 = vmatpush1.msra.mxu0 0.0
    %2469 = vmatprep.subr.mxu0 0.0
    %2470 = vmatpush1.msra.mxu0 0.0
    %2471 = vmatprep.subr.mxu0 0.0
    %2472 = vmatpush1.msra.mxu0 0.0
    %2473 = vmatprep.subr.mxu0 0.0
    %2474 = vmatpush1.msra.mxu0 0.0
    %2475 = vmatprep.subr.mxu0 0.0
    %2476 = vmatpush1.msra.mxu0 0.0
    %2477 = vmatprep.subr.mxu0 0.0
    %2478 = vmatpush1.msra.mxu0 0.0
    %2479 = vmatprep.subr.mxu0 0.0
    %2480 = vmatpush1.msra.mxu0 0.0
    %2481 = vmatprep.subr.mxu0 0.0
    %2482 = vmatpush1.msra.mxu0 0.0
    %2483 = vmatprep.subr.mxu0 0.0
    %2484 = vmatpush1.msra.mxu0 0.0
    %2485 = vmatprep.subr.mxu0 0.0
    %2486 = vmatpush1.msra.mxu0 0.0
    %2487 = vmatprep.subr.mxu0 0.0
    %2488 = vmatpush1.msra.mxu0 0.0
    %2489 = vmatprep.subr.mxu0 0.0
    %2490 = vmatpush1.msra.mxu0 %v36
    %2491 = vmatprep.subr.mxu0 0.0
    %2492 = vmatpush1.msra.mxu0 %v35
    %2493 = vmatprep.subr.mxu0 0.0
    %2494 = vmatpush2.msra.mxu0 0.0
    %2495 = vmatprep.subr.mxu0 0.0
    %2496 = vmatpush2.msra.mxu0 0.0
    %2497 = vmatprep.subr.mxu0 0.0
    %2498 = vmatpush2.msra.mxu0 0.0
    %2499 = vmatprep.subr.mxu0 0.0
    %2500 = vmatpush2.msra.mxu0 0.0
    %2501 = vmatprep.subr.mxu0 0.0
    %2502 = vmatpush2.msra.mxu0 0.0
    %2503 = vmatprep.subr.mxu0 0.0
    %2504 = vmatpush2.msra.mxu0 0.0
    %2505 = vmatprep.subr.mxu0 0.0
    %2506 = vmatpush2.msra.mxu0 0.0
    %2507 = vmatprep.subr.mxu0 0.0
    %2508 = vmatpush2.msra.mxu0 0.0
    %2509 = vmatprep.subr.mxu0 0.0
    %2510 = vmatpush2.msra.mxu0 0.0
    %2511 = vmatprep.subr.mxu0 0.0
    %2512 = vmatpush2.msra.mxu0 0.0
    %2513 = vmatprep.subr.mxu0 0.0
    %2514 = vmatpush2.msra.mxu0 0.0
    %2515 = vmatprep.subr.mxu0 0.0
    %2516 = vmatpush2.msra.mxu0 0.0
    %2517 = vmatprep.subr.mxu0 0.0
    %2518 = vmatpush2.msra.mxu0 0.0
    %2519 = vmatprep.subr.mxu0 0.0
    %2520 = vmatpush2.msra.mxu0 0.0
    %2521 = vmatprep.subr.mxu0 0.0
    %2522 = vmatpush2.msra.mxu0 0.0
    %2523 = vmatprep.subr.mxu0 0.0
    %2524 = vmatpush2.msra.mxu0 0.0
    %2525 = vmatprep.mubr.f32.mxu0 0.0
    %2526 = vmatmul.mubr.f32.gmra.mxu0 %v2459
    %v2527 = vpop.f32.mrf.mxu0
    %v2528 = vadd.f32 0.0, %v2527
    %v2529 = vpop.f32.mrf.mxu0
    %2530 = vdwg.mxu0
    %s2531 = sld [smem:[#allocation2 + $0x6]]
    %p2532 = scmp.gt.s32.totalorder %s2531, 0
    %s2533 = scalar_lea.vmem %s1, 28
    %v2534 = vld [vmem:[%s2533] sm:$0x3]
    %s2535 = scalar_select %p2532, 1, 0
    %v2536 = vstv %s2535
    %vm2537 = vcmp.eq.s32.totalorder %v2536, 1
    %v2538 = vsel %vm2537, %v2534, %v2528
    %2539 = vmatprep.subr.mxu0 0.0
    %2540 = vmatpush1.msra.mxu0 0.0
    %2541 = vmatprep.subr.mxu0 0.0
    %2542 = vmatpush1.msra.mxu0 0.0
    %2543 = vmatprep.subr.mxu0 0.0
    %2544 = vmatpush1.msra.mxu0 0.0
    %2545 = vmatprep.subr.mxu0 0.0
    %2546 = vmatpush1.msra.mxu0 0.0
    %2547 = vmatprep.subr.mxu0 0.0
    %2548 = vmatpush1.msra.mxu0 0.0
    %2549 = vmatprep.subr.mxu0 0.0
    %2550 = vmatpush1.msra.mxu0 0.0
    %2551 = vmatprep.subr.mxu0 0.0
    %2552 = vmatpush1.msra.mxu0 0.0
    %2553 = vmatprep.subr.mxu0 0.0
    %2554 = vmatpush1.msra.mxu0 0.0
    %2555 = vmatprep.subr.mxu0 0.0
    %2556 = vmatpush1.msra.mxu0 0.0
    %2557 = vmatprep.subr.mxu0 0.0
    %2558 = vmatpush1.msra.mxu0 0.0
    %2559 = vmatprep.subr.mxu0 0.0
    %2560 = vmatpush1.msra.mxu0 0.0
    %2561 = vmatprep.subr.mxu0 0.0
    %2562 = vmatpush1.msra.mxu0 0.0
    %2563 = vmatprep.subr.mxu0 0.0
    %2564 = vmatpush1.msra.mxu0 %v34
    %2565 = vmatprep.subr.mxu0 0.0
    %2566 = vmatpush1.msra.mxu0 %v33
    %2567 = vmatprep.subr.mxu0 0.0
    %2568 = vmatpush1.msra.mxu0 %v32
    %2569 = vmatprep.subr.mxu0 0.0
    %2570 = vmatpush1.msra.mxu0 %v31
    %2571 = vmatprep.subr.mxu0 0.0
    %2572 = vmatpush2.msra.mxu0 0.0
    %2573 = vmatprep.subr.mxu0 0.0
    %2574 = vmatpush2.msra.mxu0 0.0
    %2575 = vmatprep.subr.mxu0 0.0
    %2576 = vmatpush2.msra.mxu0 0.0
    %2577 = vmatprep.subr.mxu0 0.0
    %2578 = vmatpush2.msra.mxu0 0.0
    %2579 = vmatprep.subr.mxu0 0.0
    %2580 = vmatpush2.msra.mxu0 0.0
    %2581 = vmatprep.subr.mxu0 0.0
    %2582 = vmatpush2.msra.mxu0 0.0
    %2583 = vmatprep.subr.mxu0 0.0
    %2584 = vmatpush2.msra.mxu0 0.0
    %2585 = vmatprep.subr.mxu0 0.0
    %2586 = vmatpush2.msra.mxu0 0.0
    %2587 = vmatprep.subr.mxu0 0.0
    %2588 = vmatpush2.msra.mxu0 0.0
    %2589 = vmatprep.subr.mxu0 0.0
    %2590 = vmatpush2.msra.mxu0 0.0
    %2591 = vmatprep.subr.mxu0 0.0
    %2592 = vmatpush2.msra.mxu0 0.0
    %2593 = vmatprep.subr.mxu0 0.0
    %2594 = vmatpush2.msra.mxu0 0.0
    %2595 = vmatprep.subr.mxu0 0.0
    %2596 = vmatpush2.msra.mxu0 0.0
    %2597 = vmatprep.subr.mxu0 0.0
    %2598 = vmatpush2.msra.mxu0 0.0
    %2599 = vmatprep.subr.mxu0 0.0
    %2600 = vmatpush2.msra.mxu0 0.0
    %2601 = vmatprep.subr.mxu0 0.0
    %2602 = vmatpush2.msra.mxu0 0.0
    %2603 = vmatprep.mubr.f32.mxu0 0.0
    %2604 = vmatmul.mubr.f32.gmra.mxu0 %v2359
    %v2605 = vpop.f32.mrf.mxu0
    %v2606 = vadd.f32 0.0, %v2605
    %v2607 = vpop.f32.mrf.mxu0
    %2608 = vdwg.mxu0
    %v2609 = vadd.f32 %v2538, %v2606
    %v2610 = vxor.u32 %v2609, 2147483648
    %v2611 = vmul.f32 %v2610, 1.442695
    %v2612 = vpow.pop %v2611
    %v2613 = vadd.f32 %v2612, 1.0
    %v2614 = vrcp.pop %v2613
    %v2615 = vmul.f32 1.0, %v2614
    %v2616 = vtanh.pop %v2609
    %v2617 = vmul.f32 %v2615, %v2349
    %2619 = vrot.lane.b32.xlu0 %v2616, 64
    %v2620 = vpop.permute.xlu0 %2619
    %v2622 = vmul.f32 %v2615, %v2620
    %2624 = vrot.lane.b32.xlu0 %v2622, 32
    %v2625 = vpop.permute.xlu0 %2624
    %v2627 = vadd.f32 %v2617, %v2625
    %v2628 = vtanh.pop %v2627
    %2630 = vrot.lane.b32.xlu0 %v2628, 64
    %v2631 = vpop.permute.xlu0 %2630
    %v2633 = vmul.f32 %v2615, %v2631
    %2635 = vrot.lane.b32.xlu0 %v2633, 32
    %v2636 = vpop.permute.xlu0 %2635
    %v2637 = vsel %vm45, %v2636, 0
    %2639 = vmatprep.subr.mxu0 0.0
    %2640 = vmatpush1.msra.mxu0 0.0
    %2641 = vmatprep.subr.mxu0 0.0
    %2642 = vmatpush1.msra.mxu0 0.0
    %2643 = vmatprep.subr.mxu0 0.0
    %2644 = vmatpush1.msra.mxu0 0.0
    %2645 = vmatprep.subr.mxu0 0.0
    %2646 = vmatpush1.msra.mxu0 0.0
    %2647 = vmatprep.subr.mxu0 0.0
    %2648 = vmatpush1.msra.mxu0 0.0
    %2649 = vmatprep.subr.mxu0 0.0
    %2650 = vmatpush1.msra.mxu0 0.0
    %2651 = vmatprep.subr.mxu0 0.0
    %2652 = vmatpush1.msra.mxu0 0.0
    %2653 = vmatprep.subr.mxu0 0.0
    %2654 = vmatpush1.msra.mxu0 0.0
    %2655 = vmatprep.subr.mxu0 0.0
    %2656 = vmatpush1.msra.mxu0 0.0
    %2657 = vmatprep.subr.mxu0 0.0
    %2658 = vmatpush1.msra.mxu0 0.0
    %2659 = vmatprep.subr.mxu0 0.0
    %2660 = vmatpush1.msra.mxu0 0.0
    %2661 = vmatprep.subr.mxu0 0.0
    %2662 = vmatpush1.msra.mxu0 0.0
    %2663 = vmatprep.subr.mxu0 0.0
    %2664 = vmatpush1.msra.mxu0 %v40
    %2665 = vmatprep.subr.mxu0 0.0
    %2666 = vmatpush1.msra.mxu0 %v39
    %2667 = vmatprep.subr.mxu0 0.0
    %2668 = vmatpush1.msra.mxu0 %v38
    %2669 = vmatprep.subr.mxu0 0.0
    %2670 = vmatpush1.msra.mxu0 %v37
    %2671 = vmatprep.subr.mxu0 0.0
    %2672 = vmatpush2.msra.mxu0 0.0
    %2673 = vmatprep.subr.mxu0 0.0
    %2674 = vmatpush2.msra.mxu0 0.0
    %2675 = vmatprep.subr.mxu0 0.0
    %2676 = vmatpush2.msra.mxu0 0.0
    %2677 = vmatprep.subr.mxu0 0.0
    %2678 = vmatpush2.msra.mxu0 0.0
    %2679 = vmatprep.subr.mxu0 0.0
    %2680 = vmatpush2.msra.mxu0 0.0
    %2681 = vmatprep.subr.mxu0 0.0
    %2682 = vmatpush2.msra.mxu0 0.0
    %2683 = vmatprep.subr.mxu0 0.0
    %2684 = vmatpush2.msra.mxu0 0.0
    %2685 = vmatprep.subr.mxu0 0.0
    %2686 = vmatpush2.msra.mxu0 0.0
    %2687 = vmatprep.subr.mxu0 0.0
    %2688 = vmatpush2.msra.mxu0 0.0
    %2689 = vmatprep.subr.mxu0 0.0
    %2690 = vmatpush2.msra.mxu0 0.0
    %2691 = vmatprep.subr.mxu0 0.0
    %2692 = vmatpush2.msra.mxu0 0.0
    %2693 = vmatprep.subr.mxu0 0.0
    %2694 = vmatpush2.msra.mxu0 0.0
    %2695 = vmatprep.subr.mxu0 0.0
    %2696 = vmatpush2.msra.mxu0 0.0
    %2697 = vmatprep.subr.mxu0 0.0
    %2698 = vmatpush2.msra.mxu0 0.0
    %2699 = vmatprep.subr.mxu0 0.0
    %2700 = vmatpush2.msra.mxu0 0.0
    %2701 = vmatprep.subr.mxu0 0.0
    %2702 = vmatpush2.msra.mxu0 0.0
    %2703 = vmatprep.mubr.f32.mxu0 0.0
    %2704 = vmatmul.mubr.f32.gmra.mxu0 %v2637
    %v2705 = vpop.f32.mrf.mxu0
    %v2706 = vadd.f32 %v963, %v2705
    %v2707 = vpop.f32.mrf.mxu0
    %2708 = vdwg.mxu0
    %vm2709 = vcmp.ge.s32.totalorder %v43, 112
    %vm2710 = vcmp.lt.s32.totalorder %v43, 128
    %vm2711 = vmand %vm2709, %vm2710
    %v2712 = vsel %vm2711, %v2706, %v2434
    %2713 = vst [vmem:[%s3] sm:$0x3] %v2712
    // Predicated region
    $region18: #{seq2seq_forward.1} parent=1 // pred_check
      _
    $region19: #{seq2seq_forward.1} parent=1 // pred_check_branch
      %2715 = sbr.rel (0) target = $region21
    $region20: #{seq2seq_forward.1} parent=1 // pred_region
      _
    $region21: #{seq2seq_forward.1} parent=1 // pred_fallthru
      _
    // Predicated region
    $region22: #{seq2seq_forward.1} parent=1 // pred_check
      _
    $region23: #{seq2seq_forward.1} parent=1 // pred_check_branch
      %2717 = sbr.rel (0) target = $region25
    $region24: #{seq2seq_forward.1} parent=1 // pred_region
      _
    $region25: #{seq2seq_forward.1} parent=1 // pred_fallthru
      _
    %2718 = vsyncpa [#allocation3], 1

</llo_original>
